<compile_context>
chip_gen: v5e
topology: v5e:2x2
jax: 0.10.0
libtpu: 0.0.40
codegen_flags: <defaults>
</compile_context>

<pallas_src>
import functools

import jax
import jax.numpy as jnp
from jax import lax
from jax.experimental import pallas as pl
from jax.experimental.pallas import tpu as pltpu

F32 = jnp.float32
NEG = -1e30


def _round8(x):
    return ((x + 7) // 8) * 8


# ----------------------------- parameter slab layout -----------------------

def _make_layout(fin, gh, nhid, nout, heads, np_, gp):
    """Static row offsets of every parameter block inside its packed slab."""
    hc = heads * gh

    def build(entries):
        off, r = {}, 0
        for name, rows in entries:
            off[name] = (r, rows)
            r += _round8(rows)
        return off, r

    w32 = build([("gcn_w1", fin), ("gcn_w2", gh), ("gcn_w3", gh), ("gcn_mh1", gh),
                 ("gat_hl1", hc), ("gat_hl2", hc), ("gat_hl3", hc), ("gat_mh1", gh),
                 ("v2_hl1", hc), ("v2_hl2", hc), ("v2_hl3", hc), ("v2_mh1", gh)])
    w128 = build([("gat_w1", fin), ("gat_w2", gh), ("gat_w3", gh),
                  ("v2_wl1", fin), ("v2_wr1", fin),
                  ("v2_wl2", gh), ("v2_wr2", gh),
                  ("v2_wl3", gh), ("v2_wr3", gh),
                  ("gcn_mh2", nhid), ("gat_mh2", nhid), ("v2_mh2", nhid)])
    b32 = build([("gcn_b1", np_), ("gcn_b2", np_), ("gcn_b3", np_), ("gcn_mb1", gp),
                 ("gat_hb1", np_), ("gat_hb2", np_), ("gat_hb3", np_), ("gat_mb1", gp),
                 ("v2_hb1", np_), ("v2_hb2", np_), ("v2_hb3", np_), ("v2_mb1", gp)])
    b128 = build([("gat_cb1", np_), ("gat_cb2", np_), ("gat_cb3", np_),
                  ("v2_bl1", np_), ("v2_br1", np_), ("v2_cb1", np_),
                  ("v2_bl2", np_), ("v2_br2", np_), ("v2_cb2", np_),
                  ("v2_bl3", np_), ("v2_br3", np_), ("v2_cb3", np_),
                  ("gcn_mb2", gp), ("gat_mb2", gp), ("v2_mb2", gp)])
    return dict(w32=w32, w128=w128, b32=b32, b128=b128)


# ----------------------------- fused graph kernel --------------------------

def _fused_graph_kernel(x_ref, a_ref, pool_ref, negt_ref, bd_ref, sel2_ref,
                        w32_ref, w128_ref, b32_ref, b128_ref,
                        asrc_ref, adstt_ref, attv2_ref,
                        o_ref, *, lay, np_, gp, heads, gh):
    hc = heads * gh
    hp8 = _round8(heads)
    lw32, lw128 = lay["w32"][0], lay["w128"][0]
    lb32, lb128 = lay["b32"][0], lay["b128"][0]

    def blk(ref, off, name):
        r0, rows = off[name]
        return ref[r0:r0 + rows, :]

    def mm(a, b):
        return jnp.dot(a, b, preferred_element_type=F32)

    def leaky(v):
        return jnp.where(v > 0, v, 0.2 * v)

    def row_flatten(v):
        # [R, W] -> [1, R*W] (row-major) via lane concat of row slices.
        return jnp.concatenate([v[j:j + 1, :] for j in range(v.shape[0])],
                               axis=1)

    def masked_softmax_src(e):
        # softmax over sources (axis 0), edges selected via additive -1e30.
        e = e + negt_ref[...]
        e = e - jnp.max(e, axis=0, keepdims=True)
        p = jnp.exp(e)
        denom = jnp.sum(p, axis=0, keepdims=True)
        return p * pl.reciprocal(denom, approx=True)

    def head_sum(pz):
        # [heads*np_, hc] -> [np_, hc]: sum per-head (aligned) row blocks.
        acc = pz[0:np_, :]
        for h in range(1, heads):
            acc = acc + pz[h * np_:(h + 1) * np_, :]
        return acc

    def attend(p, msgs, cbias):
        # out[d, h*gh+c] = sum_s p[s, h*np_+d] * msgs[s, h*gh+c]
        pz = lax.dot_general(p, msgs, (((0,), (0,)), ((), ())),
                             preferred_element_type=F32)       # [H*np_, hc]
        return head_sum(pz * bd_ref[...]) + cbias

    def head_linear(h_nodes, tag, idx, relu):
        y = (mm(h_nodes, blk(w32_ref, lw32, f"{tag}_hl{idx}"))
             + blk(b32_ref, lb32, f"{tag}_hb{idx}"))
        return jnp.maximum(y, 0.0) if relu else y

    def mol_head(h_nodes, tag):
        pooled = mm(pool_ref[...], h_nodes)                                  # [gp, gh]
        t = jnp.maximum(mm(pooled, blk(w32_ref, lw32, tag + "_mh1"))
                        + blk(b32_ref, lb32, tag + "_mb1"), 0.0)
        return (mm(t, blk(w128_ref, lw128, tag + "_mh2"))
                + blk(b128_ref, lb128, tag + "_mb2"))                        # [gp, hc]

    i = pl.program_id(0)

    # --- encoder 0: GCN -----------------------------------------------------
    @pl.when(i == 0)
    def _():
        A = a_ref[...]

        def gcn(h, wn, bn, relu):
            y = mm(A, mm(h, blk(w32_ref, lw32, wn))) + blk(b32_ref, lb32, bn)
            return jnp.maximum(y, 0.0) if relu else y

        h = gcn(x_ref[...], "gcn_w1", "gcn_b1", True)
        h = gcn(h, "gcn_w2", "gcn_b2", True)
        h = gcn(h, "gcn_w3", "gcn_b3", False)
        o_ref[...] = mol_head(h, "gcn")

    # --- encoder 1: GAT -----------------------------------------------------
    @pl.when(i == 1)
    def _():
        def gat_conv(h_in, l):
            z = mm(h_in, blk(w128_ref, lw128, f"gat_w{l}"))                  # [np_, hc]
            e = mm(z, asrc_ref[(l - 1) * hc:l * hc, :])                      # [np_, H*np_]
            adt = adstt_ref[(l - 1) * hp8:(l - 1) * hp8 + heads, :]          # [H, hc]
            ad = lax.dot_general(adt, z, (((1,), (1,)), ((), ())),
                                 preferred_element_type=F32)                 # [H, np_]
            e = leaky(e + row_flatten(ad))
            p = masked_softmax_src(e)
            return attend(p, z, blk(b128_ref, lb128, f"gat_cb{l}"))

        h = head_linear(gat_conv(x_ref[...], 1), "gat", 1, True)
        h = head_linear(gat_conv(h, 2), "gat", 2, True)
        h = head_linear(gat_conv(h, 3), "gat", 3, False)
        o_ref[...] = mol_head(h, "gat")

    # --- encoder 2: GATv2 ---------------------------------------------------
    @pl.when(i == 2)
    def _():
        def gatv2_conv(h_in, l):
            xl = (mm(h_in, blk(w128_ref, lw128, f"v2_wl{l}"))
                  + blk(b128_ref, lb128, f"v2_bl{l}"))                       # [np_, hc]
            xr = (mm(h_in, blk(w128_ref, lw128, f"v2_wr{l}"))
                  + blk(b128_ref, lb128, f"v2_br{l}"))                       # [np_, hc]
            # pair[s, d*hc + h*gh + c] = xl[s, h*gh+c] + xr[d, h*gh+c]
            pair = leaky(jnp.concatenate([xl] * np_, axis=1)
                         + row_flatten(xr))                                  # [np_, np_*hc]
            att = attv2_ref[(l - 1) * 8:(l - 1) * 8 + 1, :]                  # [1, hc]
            pair = pair * jnp.concatenate([att] * np_, axis=1)
            e = lax.dot_general(pair, sel2_ref[...],
                                (((1,), (1,)), ((), ())),
                                preferred_element_type=F32)                  # [np_, H*np_]
            p = masked_softmax_src(e)
            return attend(p, xl, blk(b128_ref, lb128, f"v2_cb{l}"))

        h = head_linear(gatv2_conv(x_ref[...], 1), "v2", 1, True)
        h = head_linear(gatv2_conv(h, 2), "v2", 2, True)
        h = head_linear(gatv2_conv(h, 3), "v2", 3, False)
        o_ref[...] = mol_head(h, "v2")


def fused_graph_encoders(x_p, a_norm, pool, negt, packed, *, lay, np_, gp,
                         heads, gh):
    hc = heads * gh
    inputs = (x_p, a_norm, pool, negt, packed["bd"], packed["sel2"],
              packed["w32"], packed["w128"], packed["b32"], packed["b128"],
              packed["asrc"], packed["adstt"], packed["attv2"])
    kernel = functools.partial(_fused_graph_kernel, lay=lay, np_=np_, gp=gp,
                               heads=heads, gh=gh)
    return pl.pallas_call(
        kernel,
        grid=(3,),
        in_specs=[pl.BlockSpec(a.shape, lambda i: (0, 0)) for a in inputs],
        out_specs=pl.BlockSpec((gp, hc), lambda i: (i, 0)),
        out_shape=jax.ShapeDtypeStruct((3 * gp, hc), F32),
        compiler_params=pltpu.CompilerParams(
            dimension_semantics=("parallel",)),
    )(*inputs)


# ----------------------------- parameter packing ---------------------------

def pack_graph_params(params, *, fin, gh, nhid, nout, heads, np_, gp):
    assert nhid == gh, "packing assumes nhid == graph_hidden_channels"
    hc = heads * gh
    assert nout <= hc
    hp8 = _round8(heads)
    lay = _make_layout(fin, gh, nhid, nout, heads, np_, gp)
    g, a, v = params["gcn"], params["gat"], params["gatv2"]

    def fill(key, width, entries):
        off, total = lay[key]
        buf = jnp.zeros((total, width), F32)
        for name, arr in entries:
            r0, rows = off[name]
            w = jnp.asarray(arr, F32)
            if w.ndim == 1:
                w = w[None, :]
            if w.shape[1] < width:
                w = jnp.pad(w, ((0, 0), (0, width - w.shape[1])))
            if w.shape[0] < rows:      # pre-broadcast biases
                w = jnp.broadcast_to(w, (rows, width))
            buf = buf.at[r0:r0 + rows, :].set(w)
        return buf

    w32 = fill("w32", gh, [
        ("gcn_w1", g["w1"]), ("gcn_w2", g["w2"]), ("gcn_w3", g["w3"]),
        ("gcn_mh1", g["mh1_w"]),
        ("gat_hl1", a["hl1_w"]), ("gat_hl2", a["hl2_w"]), ("gat_hl3", a["hl3_w"]),
        ("gat_mh1", a["mh1_w"]),
        ("v2_hl1", v["hl1_w"]), ("v2_hl2", v["hl2_w"]), ("v2_hl3", v["hl3_w"]),
        ("v2_mh1", v["mh1_w"])])
    w128 = fill("w128", hc, [
        ("gat_w1", a["conv1"]["w"]), ("gat_w2", a["conv2"]["w"]),
        ("gat_w3", a["conv3"]["w"]),
        ("v2_wl1", v["conv1"]["wl"]), ("v2_wr1", v["conv1"]["wr"]),
        ("v2_wl2", v["conv2"]["wl"]), ("v2_wr2", v["conv2"]["wr"]),
        ("v2_wl3", v["conv3"]["wl"]), ("v2_wr3", v["conv3"]["wr"]),
        ("gcn_mh2", g["mh2_w"]), ("gat_mh2", a["mh2_w"]), ("v2_mh2", v["mh2_w"])])
    b32 = fill("b32", gh, [
        ("gcn_b1", g["b1"]), ("gcn_b2", g["b2"]), ("gcn_b3", g["b3"]),
        ("gcn_mb1", g["mh1_b"]),
        ("gat_hb1", a["hl1_b"]), ("gat_hb2", a["hl2_b"]), ("gat_hb3", a["hl3_b"]),
        ("gat_mb1", a["mh1_b"]),
        ("v2_hb1", v["hl1_b"]), ("v2_hb2", v["hl2_b"]), ("v2_hb3", v["hl3_b"]),
        ("v2_mb1", v["mh1_b"])])
    b128 = fill("b128", hc, [
        ("gat_cb1", a["conv1"]["bias"]), ("gat_cb2", a["conv2"]["bias"]),
        ("gat_cb3", a["conv3"]["bias"]),
        ("v2_bl1", v["conv1"]["bl"]), ("v2_br1", v["conv1"]["br"]),
        ("v2_cb1", v["conv1"]["bias"]),
        ("v2_bl2", v["conv2"]["bl"]), ("v2_br2", v["conv2"]["br"]),
        ("v2_cb2", v["conv2"]["bias"]),
        ("v2_bl3", v["conv3"]["bl"]), ("v2_br3", v["conv3"]["br"]),
        ("v2_cb3", v["conv3"]["bias"]),
        ("gcn_mb2", g["mh2_b"]), ("gat_mb2", a["mh2_b"]), ("v2_mb2", v["mh2_b"])])

    eye_h = jnp.eye(heads, dtype=F32)

    def asrc_big(att_src):   # [hc, heads*np_], columns repeated per destination
        m = (att_src[:, :, None] * eye_h[:, None, :]).reshape(hc, heads)
        return jnp.repeat(m, np_, axis=1)

    def adst_t(att_dst):     # block-diagonal att_dst^T, padded to hp8 rows
        m = (eye_h[:, :, None] * att_dst[None, :, :]).reshape(heads, hc)
        return jnp.pad(m, ((0, hp8 - heads), (0, 0)))

    asrc = jnp.concatenate([asrc_big(a[c]["att_src"])
                            for c in ("conv1", "conv2", "conv3")], axis=0)
    adstt = jnp.concatenate([adst_t(a[c]["att_dst"])
                             for c in ("conv1", "conv2", "conv3")], axis=0)

    attv2 = jnp.zeros((3 * 8, hc), F32)
    for idx, c in enumerate(("conv1", "conv2", "conv3")):
        attv2 = attv2.at[idx * 8, :].set(v[c]["att"].reshape(hc))

    # head block-diagonal mask and GATv2 score selector (shared constants)
    k = jnp.arange(heads * np_)
    kh, kd = k // np_, k % np_
    mcol = jnp.arange(hc) // gh
    bd = (kh[:, None] == mcol[None, :]).astype(F32)                # [H*np_, hc]
    j = jnp.arange(np_ * hc)
    jd, jh = j // hc, (j % hc) // gh
    sel2 = ((kh[:, None] == jh[None, :])
            & (kd[:, None] == jd[None, :])).astype(F32)            # [H*np_, np_*hc]

    packed = dict(w32=w32, w128=w128, b32=b32, b128=b128,
                  asrc=asrc, adstt=adstt, attv2=attv2, bd=bd, sel2=sel2)
    return packed, lay


# ----------------------------- forward pass --------------------------------

def model_forward(text_params, packed, x, edge_index, batch, input_ids,
                  attention_mask, *, num_graphs, heads, gh, nout, np_, gp, lay):
    n = x.shape[0]

    # dense padded graph structure (plain JAX preprocessing; scatter ops)
    src, dst = edge_index[0], edge_index[1]
    adj = jnp.zeros((np_, np_), F32).at[dst, src].set(1.0)       # adj[target, source]
    adj = jnp.maximum(adj, jnp.eye(np_, dtype=F32))              # self loops
    deg = jnp.sum(adj, axis=1, keepdims=True)
    dinv = jnp.where(deg > 0, lax.rsqrt(deg), 0.0)
    a_norm = adj * dinv * dinv.T                                 # GCN sym-norm
    adj_t = adj.T                                                # [source, target]
    negt = jnp.tile(jnp.where(adj_t > 0, 0.0, NEG), (1, heads))  # [np_, H*np_]

    pad_batch = jnp.full((np_ - n,), num_graphs, jnp.int32)
    batch_p = jnp.concatenate([batch.astype(jnp.int32), pad_batch])
    onehot = (jnp.arange(gp)[:, None] == batch_p[None, :]).astype(F32)
    pool = onehot / jnp.maximum(jnp.sum(onehot, axis=1, keepdims=True), 1.0)

    x_p = jnp.pad(x.astype(F32), ((0, np_ - n), (0, 0)))

    enc = fused_graph_encoders(x_p, a_norm, pool, negt, packed,
                               lay=lay, np_=np_, gp=gp, heads=heads, gh=gh)
    ens = (enc[0:gp] + enc[gp:2 * gp] + enc[2 * gp:3 * gp]) * (1.0 / 3.0)
    graph_encoded = ens[:num_graphs, :nout]

    # TODO(synk): pretrained BERT backbone (AutoModel) has no Pallas
    # equivalent; a deterministic [CLS]-token embedding lookup stands in for
    # last_hidden_state[:, 0, :], so attention_mask is unused.  The tiny
    # 768x1024 projection is left to XLA (a standalone kernel would be pure
    # launch overhead).
    del attention_mask
    cls_hidden = text_params["emb"][input_ids[:, 0]]             # [B, 768]
    text_encoded = cls_hidden @ text_params["lin_w"] + text_params["lin_b"][None, :]
    return graph_encoded, text_encoded


# ----------------------------- deterministic init --------------------------

def glorot(key, shape):
    fi, fo = shape
    lim = (6.0 / (fi + fo)) ** 0.5
    return jax.random.uniform(key, shape, F32, -lim, lim)


def init_params(key, num_feat, nout, nhid, gh, heads, vocab):
    keys = iter(jax.random.split(key, 64))
    nk = lambda: next(keys)
    hc = heads * gh

    gcn = dict(
        w1=glorot(nk(), (num_feat, gh)), b1=jnp.zeros((gh,), F32),
        w2=glorot(nk(), (gh, gh)), b2=jnp.zeros((gh,), F32),
        w3=glorot(nk(), (gh, gh)), b3=jnp.zeros((gh,), F32),
        mh1_w=glorot(nk(), (gh, nhid)), mh1_b=jnp.zeros((nhid,), F32),
        mh2_w=glorot(nk(), (nhid, nout)), mh2_b=jnp.zeros((nout,), F32))

    def gat_conv(fin):
        return dict(w=glorot(nk(), (fin, hc)),
                    att_src=glorot(nk(), (heads, gh)),
                    att_dst=glorot(nk(), (heads, gh)),
                    bias=jnp.zeros((hc,), F32))

    def head_mlp():
        return dict(
            hl1_w=glorot(nk(), (hc, gh)), hl1_b=jnp.zeros((gh,), F32),
            hl2_w=glorot(nk(), (hc, gh)), hl2_b=jnp.zeros((gh,), F32),
            hl3_w=glorot(nk(), (hc, gh)), hl3_b=jnp.zeros((gh,), F32),
            mh1_w=glorot(nk(), (gh, nhid)), mh1_b=jnp.zeros((nhid,), F32),
            mh2_w=glorot(nk(), (nhid, nout)), mh2_b=jnp.zeros((nout,), F32))

    gat = dict(conv1=gat_conv(num_feat), conv2=gat_conv(gh), conv3=gat_conv(gh),
               **head_mlp())

    def gatv2_conv(fin):
        return dict(wl=glorot(nk(), (fin, hc)), bl=jnp.zeros((hc,), F32),
                    wr=glorot(nk(), (fin, hc)), br=jnp.zeros((hc,), F32),
                    att=glorot(nk(), (heads, gh)),
                    bias=jnp.zeros((hc,), F32))

    gatv2 = dict(conv1=gatv2_conv(num_feat), conv2=gatv2_conv(gh),
                 conv3=gatv2_conv(gh), **head_mlp())

    text = dict(emb=0.02 * jax.random.normal(nk(), (vocab, 768), F32),
                lin_w=glorot(nk(), (768, 1024)),
                lin_b=jnp.zeros((1024,), F32))

    return dict(gcn=gcn, gat=gat, gatv2=gatv2, text=text)


# ----------------------------- demo ----------------------------------------

if __name__ == "__main__":
    num_node_features, nout, nhid, gh, heads = 16, 32, 32, 32, 4
    num_nodes, num_graphs, vocab, seq_len, text_bs = 12, 2, 100, 8, 2
    np_, gp = _round8(num_nodes), max(_round8(num_graphs), 8)

    key = jax.random.PRNGKey(0)
    k_p, k_x, k_ids = jax.random.split(key, 3)
    params = init_params(k_p, num_node_features, nout, nhid, gh, heads, vocab)
    packed, lay = pack_graph_params(params, fin=num_node_features, gh=gh,
                                    nhid=nhid, nout=nout, heads=heads,
                                    np_=np_, gp=gp)

    # graph batch: two 6-node ring graphs (both edge directions)
    x = jax.random.normal(k_x, (num_nodes, num_node_features), F32)
    edges = []
    for base in (0, 6):
        for k in range(6):
            a_n, b_n = base + k, base + (k + 1) % 6
            edges.append((a_n, b_n))
            edges.append((b_n, a_n))
    edge_index = jnp.array(edges, dtype=jnp.int32).T       # [2, 24]
    batch = jnp.array([0] * 6 + [1] * 6, dtype=jnp.int32)  # [12]

    input_ids = jax.random.randint(k_ids, (text_bs, seq_len), 0, vocab,
                                   dtype=jnp.int32)
    attention_mask = jnp.ones((text_bs, seq_len), dtype=jnp.int32)

    fwd = jax.jit(functools.partial(model_forward, num_graphs=num_graphs,
                                    heads=heads, gh=gh, nout=nout,
                                    np_=np_, gp=gp, lay=lay))
    graph_encoded, text_encoded = fwd(params["text"], packed, x, edge_index,
                                      batch, input_ids, attention_mask)

    jax.block_until_ready((graph_encoded, text_encoded))
    assert graph_encoded.shape == (num_graphs, nout)
    assert text_encoded.shape == (text_bs, 1024)
    print("KERNEL_OK")
</pallas_src>

<mosaic_0001>
module attributes {stable_mosaic.version = 11 : i64} {
  func.func @_fused_graph_kernel(%arg0: i32, %arg1: memref<16x16xf32, #tpu.memory_space<vmem>>, %arg2: memref<16x16xf32, #tpu.memory_space<vmem>>, %arg3: memref<8x16xf32, #tpu.memory_space<vmem>>, %arg4: memref<16x64xf32, #tpu.memory_space<vmem>>, %arg5: memref<64x128xf32, #tpu.memory_space<vmem>>, %arg6: memref<64x2048xf32, #tpu.memory_space<vmem>>, %arg7: memref<944x32xf32, #tpu.memory_space<vmem>>, %arg8: memref<336x128xf32, #tpu.memory_space<vmem>>, %arg9: memref<168x32xf32, #tpu.memory_space<vmem>>, %arg10: memref<216x128xf32, #tpu.memory_space<vmem>>, %arg11: memref<384x64xf32, #tpu.memory_space<vmem>>, %arg12: memref<24x128xf32, #tpu.memory_space<vmem>>, %arg13: memref<24x128xf32, #tpu.memory_space<vmem>>, %arg14: memref<8x128xf32, #tpu.memory_space<vmem>>) attributes {dimension_semantics = [#tpu.dimension_semantics<parallel>], iteration_bounds = array<i64: 3>, scalar_prefetch = 0 : i64, scratch_operands = 0 : i64, tpu.core_type = #tpu.core_type<tc>, window_params = [{pipeline_mode = #tpu.pipeline_mode<synchronous>, transform_indices = @transform_0, window_bounds = array<i64: 16, 16>}, {pipeline_mode = #tpu.pipeline_mode<synchronous>, transform_indices = @transform_1, window_bounds = array<i64: 16, 16>}, {pipeline_mode = #tpu.pipeline_mode<synchronous>, transform_indices = @transform_2, window_bounds = array<i64: 8, 16>}, {pipeline_mode = #tpu.pipeline_mode<synchronous>, transform_indices = @transform_3, window_bounds = array<i64: 16, 64>}, {pipeline_mode = #tpu.pipeline_mode<synchronous>, transform_indices = @transform_4, window_bounds = array<i64: 64, 128>}, {pipeline_mode = #tpu.pipeline_mode<synchronous>, transform_indices = @transform_5, window_bounds = array<i64: 64, 2048>}, {pipeline_mode = #tpu.pipeline_mode<synchronous>, transform_indices = @transform_6, window_bounds = array<i64: 944, 32>}, {pipeline_mode = #tpu.pipeline_mode<synchronous>, transform_indices = @transform_7, window_bounds = array<i64: 336, 128>}, {pipeline_mode = #tpu.pipeline_mode<synchronous>, transform_indices = @transform_8, window_bounds = array<i64: 168, 32>}, {pipeline_mode = #tpu.pipeline_mode<synchronous>, transform_indices = @transform_9, window_bounds = array<i64: 216, 128>}, {pipeline_mode = #tpu.pipeline_mode<synchronous>, transform_indices = @transform_10, window_bounds = array<i64: 384, 64>}, {pipeline_mode = #tpu.pipeline_mode<synchronous>, transform_indices = @transform_11, window_bounds = array<i64: 24, 128>}, {pipeline_mode = #tpu.pipeline_mode<synchronous>, transform_indices = @transform_12, window_bounds = array<i64: 24, 128>}, {transform_indices = @transform_13, window_bounds = array<i64: 8, 128>}]} {
    %c0_i32 = arith.constant 0 : i32
    %0 = arith.cmpi eq, %arg0, %c0_i32 : i32
    %1 = arith.extui %0 : i1 to i32
    %c0_i32_0 = arith.constant 0 : i32
    %2 = arith.cmpi ne, %1, %c0_i32_0 : i32
    scf.if %2 {
      %c0 = arith.constant 0 : index
      %c0_3 = arith.constant 0 : index
      %9 = vector.load %arg2[%c0, %c0_3] : memref<16x16xf32, #tpu.memory_space<vmem>>, vector<16x16xf32>
      %c0_4 = arith.constant 0 : index
      %c0_5 = arith.constant 0 : index
      %10 = vector.load %arg1[%c0_4, %c0_5] : memref<16x16xf32, #tpu.memory_space<vmem>>, vector<16x16xf32>
      %c0_6 = arith.constant 0 : index
      %c0_7 = arith.constant 0 : index
      %11 = vector.load %arg7[%c0_6, %c0_7] : memref<944x32xf32, #tpu.memory_space<vmem>>, vector<16x32xf32>
      %cst = arith.constant dense<0.000000e+00> : vector<16x32xf32>
      %12 = tpu.matmul %10, %11, %cst {dimension_numbers = #tpu.dot_dimension_numbers<[1], [0], [0], [1], [0, 0, 1, 1], [], []>} : vector<16x16xf32>, vector<16x32xf32>, vector<16x32xf32> -> vector<16x32xf32>
      %cst_8 = arith.constant dense<0.000000e+00> : vector<16x32xf32>
      %13 = tpu.matmul %9, %12, %cst_8 {dimension_numbers = #tpu.dot_dimension_numbers<[1], [0], [0], [1], [0, 0, 1, 1], [], []>} : vector<16x16xf32>, vector<16x32xf32>, vector<16x32xf32> -> vector<16x32xf32>
      %c0_9 = arith.constant 0 : index
      %c0_10 = arith.constant 0 : index
      %14 = vector.load %arg9[%c0_9, %c0_10] : memref<168x32xf32, #tpu.memory_space<vmem>>, vector<16x32xf32>
      %15 = arith.addf %13, %14 : vector<16x32xf32>
      %cst_11 = arith.constant 0.000000e+00 : f32
      %16 = vector.broadcast %cst_11 : f32 to vector<16x32xf32>
      %17 = arith.maximumf %15, %16 : vector<16x32xf32>
      %c16 = arith.constant 16 : index
      %c0_12 = arith.constant 0 : index
      %18 = vector.load %arg7[%c16, %c0_12] : memref<944x32xf32, #tpu.memory_space<vmem>>, vector<32x32xf32>
      %cst_13 = arith.constant dense<0.000000e+00> : vector<16x32xf32>
      %19 = tpu.matmul %17, %18, %cst_13 {dimension_numbers = #tpu.dot_dimension_numbers<[1], [0], [0], [1], [0, 0, 1, 1], [], []>} : vector<16x32xf32>, vector<32x32xf32>, vector<16x32xf32> -> vector<16x32xf32>
      %cst_14 = arith.constant dense<0.000000e+00> : vector<16x32xf32>
      %20 = tpu.matmul %9, %19, %cst_14 {dimension_numbers = #tpu.dot_dimension_numbers<[1], [0], [0], [1], [0, 0, 1, 1], [], []>} : vector<16x16xf32>, vector<16x32xf32>, vector<16x32xf32> -> vector<16x32xf32>
      %c16_15 = arith.constant 16 : index
      %c0_16 = arith.constant 0 : index
      %21 = vector.load %arg9[%c16_15, %c0_16] : memref<168x32xf32, #tpu.memory_space<vmem>>, vector<16x32xf32>
      %22 = arith.addf %20, %21 : vector<16x32xf32>
      %cst_17 = arith.constant 0.000000e+00 : f32
      %23 = vector.broadcast %cst_17 : f32 to vector<16x32xf32>
      %24 = arith.maximumf %22, %23 : vector<16x32xf32>
      %c48 = arith.constant 48 : index
      %c0_18 = arith.constant 0 : index
      %25 = vector.load %arg7[%c48, %c0_18] : memref<944x32xf32, #tpu.memory_space<vmem>>, vector<32x32xf32>
      %cst_19 = arith.constant dense<0.000000e+00> : vector<16x32xf32>
      %26 = tpu.matmul %24, %25, %cst_19 {dimension_numbers = #tpu.dot_dimension_numbers<[1], [0], [0], [1], [0, 0, 1, 1], [], []>} : vector<16x32xf32>, vector<32x32xf32>, vector<16x32xf32> -> vector<16x32xf32>
      %cst_20 = arith.constant dense<0.000000e+00> : vector<16x32xf32>
      %27 = tpu.matmul %9, %26, %cst_20 {dimension_numbers = #tpu.dot_dimension_numbers<[1], [0], [0], [1], [0, 0, 1, 1], [], []>} : vector<16x16xf32>, vector<16x32xf32>, vector<16x32xf32> -> vector<16x32xf32>
      %c32 = arith.constant 32 : index
      %c0_21 = arith.constant 0 : index
      %28 = vector.load %arg9[%c32, %c0_21] : memref<168x32xf32, #tpu.memory_space<vmem>>, vector<16x32xf32>
      %29 = arith.addf %27, %28 : vector<16x32xf32>
      %c0_22 = arith.constant 0 : index
      %c0_23 = arith.constant 0 : index
      %30 = vector.load %arg3[%c0_22, %c0_23] : memref<8x16xf32, #tpu.memory_space<vmem>>, vector<8x16xf32>
      %cst_24 = arith.constant dense<0.000000e+00> : vector<8x32xf32>
      %31 = tpu.matmul %30, %29, %cst_24 {dimension_numbers = #tpu.dot_dimension_numbers<[1], [0], [0], [1], [0, 0, 1, 1], [], []>} : vector<8x16xf32>, vector<16x32xf32>, vector<8x32xf32> -> vector<8x32xf32>
      %c80 = arith.constant 80 : index
      %c0_25 = arith.constant 0 : index
      %32 = vector.load %arg7[%c80, %c0_25] : memref<944x32xf32, #tpu.memory_space<vmem>>, vector<32x32xf32>
      %cst_26 = arith.constant dense<0.000000e+00> : vector<8x32xf32>
      %33 = tpu.matmul %31, %32, %cst_26 {dimension_numbers = #tpu.dot_dimension_numbers<[1], [0], [0], [1], [0, 0, 1, 1], [], []>} : vector<8x32xf32>, vector<32x32xf32>, vector<8x32xf32> -> vector<8x32xf32>
      %c48_27 = arith.constant 48 : index
      %c0_28 = arith.constant 0 : index
      %34 = vector.load %arg9[%c48_27, %c0_28] : memref<168x32xf32, #tpu.memory_space<vmem>>, vector<8x32xf32>
      %35 = arith.addf %33, %34 : vector<8x32xf32>
      %cst_29 = arith.constant 0.000000e+00 : f32
      %36 = vector.broadcast %cst_29 : f32 to vector<8x32xf32>
      %37 = arith.maximumf %35, %36 : vector<8x32xf32>
      %c240 = arith.constant 240 : index
      %c0_30 = arith.constant 0 : index
      %38 = vector.load %arg8[%c240, %c0_30] : memref<336x128xf32, #tpu.memory_space<vmem>>, vector<32x128xf32>
      %cst_31 = arith.constant dense<0.000000e+00> : vector<8x128xf32>
      %39 = tpu.matmul %37, %38, %cst_31 {dimension_numbers = #tpu.dot_dimension_numbers<[1], [0], [0], [1], [0, 0, 1, 1], [], []>} : vector<8x32xf32>, vector<32x128xf32>, vector<8x128xf32> -> vector<8x128xf32>
      %c192 = arith.constant 192 : index
      %c0_32 = arith.constant 0 : index
      %40 = vector.load %arg10[%c192, %c0_32] : memref<216x128xf32, #tpu.memory_space<vmem>>, vector<8x128xf32>
      %41 = arith.addf %39, %40 : vector<8x128xf32>
      %c0_33 = arith.constant 0 : index
      %c0_34 = arith.constant 0 : index
      %42 = vector.load %arg14[%c0_33, %c0_34] : memref<8x128xf32, #tpu.memory_space<vmem>>, vector<8x128xf32>
      tpu.vector_store %arg14[%c0_33, %c0_34], %41 {strides = array<i32>} : memref<8x128xf32, #tpu.memory_space<vmem>>, vector<8x128xf32>,
    } else {
    }
    %c1_i32 = arith.constant 1 : i32
    %3 = arith.cmpi eq, %arg0, %c1_i32 : i32
    %4 = arith.extui %3 : i1 to i32
    %c0_i32_1 = arith.constant 0 : i32
    %5 = arith.cmpi ne, %4, %c0_i32_1 : i32
    scf.if %5 {
      %c0 = arith.constant 0 : index
      %c0_3 = arith.constant 0 : index
      %9 = vector.load %arg1[%c0, %c0_3] : memref<16x16xf32, #tpu.memory_space<vmem>>, vector<16x16xf32>
      %c0_4 = arith.constant 0 : index
      %c0_5 = arith.constant 0 : index
      %10 = vector.load %arg8[%c0_4, %c0_5] : memref<336x128xf32, #tpu.memory_space<vmem>>, vector<16x128xf32>
      %cst = arith.constant dense<0.000000e+00> : vector<16x128xf32>
      %11 = tpu.matmul %9, %10, %cst {dimension_numbers = #tpu.dot_dimension_numbers<[1], [0], [0], [1], [0, 0, 1, 1], [], []>} : vector<16x16xf32>, vector<16x128xf32>, vector<16x128xf32> -> vector<16x128xf32>
      %c0_6 = arith.constant 0 : index
      %c0_7 = arith.constant 0 : index
      %12 = vector.load %arg11[%c0_6, %c0_7] : memref<384x64xf32, #tpu.memory_space<vmem>>, vector<128x64xf32>
      %cst_8 = arith.constant dense<0.000000e+00> : vector<16x64xf32>
      %13 = tpu.matmul %11, %12, %cst_8 {dimension_numbers = #tpu.dot_dimension_numbers<[1], [0], [0], [1], [0, 0, 1, 1], [], []>} : vector<16x128xf32>, vector<128x64xf32>, vector<16x64xf32> -> vector<16x64xf32>
      %c0_9 = arith.constant 0 : index
      %c0_10 = arith.constant 0 : index
      %14 = vector.load %arg12[%c0_9, %c0_10] : memref<24x128xf32, #tpu.memory_space<vmem>>, vector<4x128xf32>
      %cst_11 = arith.constant dense<0.000000e+00> : vector<4x16xf32>
      %15 = tpu.matmul %14, %11, %cst_11 {dimension_numbers = #tpu.dot_dimension_numbers<[1], [1], [0], [0], [0, 0, 1, 0], [], []>} : vector<4x128xf32>, vector<16x128xf32>, vector<4x16xf32> -> vector<4x16xf32>
      %16 = vector.extract_strided_slice %15 {offsets = [0, 0], sizes = [1, 16], strides = [1, 1]} : vector<4x16xf32> to vector<1x16xf32>
      %17 = vector.extract_strided_slice %15 {offsets = [1, 0], sizes = [1, 16], strides = [1, 1]} : vector<4x16xf32> to vector<1x16xf32>
      %18 = vector.extract_strided_slice %15 {offsets = [2, 0], sizes = [1, 16], strides = [1, 1]} : vector<4x16xf32> to vector<1x16xf32>
      %19 = vector.extract_strided_slice %15 {offsets = [3, 0], sizes = [1, 16], strides = [1, 1]} : vector<4x16xf32> to vector<1x16xf32>
      %20 = tpu.concatenate %16, %17, %18, %19 in 1 : vector<1x16xf32>, vector<1x16xf32>, vector<1x16xf32>, vector<1x16xf32> -> vector<1x64xf32>
      %21 = vector.broadcast %20 : vector<1x64xf32> to vector<16x64xf32>
      %22 = arith.addf %13, %21 : vector<16x64xf32>
      %cst_12 = arith.constant 0.000000e+00 : f32
      %23 = vector.broadcast %cst_12 : f32 to vector<16x64xf32>
      %24 = arith.cmpf ogt, %22, %23 : vector<16x64xf32>
      %cst_13 = arith.constant 2.000000e-01 : f32
      %25 = vector.broadcast %cst_13 : f32 to vector<16x64xf32>
      %26 = arith.mulf %25, %22 : vector<16x64xf32>
      %27 = arith.select %24, %22, %26 : vector<16x64xi1>, vector<16x64xf32>
      %c0_14 = arith.constant 0 : index
      %c0_15 = arith.constant 0 : index
      %28 = vector.load %arg4[%c0_14, %c0_15] : memref<16x64xf32, #tpu.memory_space<vmem>>, vector<16x64xf32>
      %29 = vector.shape_cast %28 : vector<16x64xf32> to vector<16x64xf32>
      %30 = arith.addf %27, %29 : vector<16x64xf32>
      %cst_16 = arith.constant dense<0xFF800000> : vector<64xf32>
      %31 = vector.multi_reduction <maximumf>, %30, %cst_16 [0] : vector<16x64xf32> to vector<64xf32>
      %32 = vector.shape_cast %31 : vector<64xf32> to vector<1x64xf32>
      %33 = vector.broadcast %32 : vector<1x64xf32> to vector<16x64xf32>
      %34 = arith.subf %30, %33 : vector<16x64xf32>
      %35 = math.exp %34 : vector<16x64xf32>
      %cst_17 = arith.constant dense<0.000000e+00> : vector<64xf32>
      %36 = vector.multi_reduction <add>, %35, %cst_17 [0] : vector<16x64xf32> to vector<64xf32>
      %37 = vector.shape_cast %36 : vector<64xf32> to vector<1x64xf32>
      %38 = tpu.reciprocal %37 {approx = true} : vector<1x64xf32> -> vector<1x64xf32>
      %39 = vector.broadcast %38 : vector<1x64xf32> to vector<16x64xf32>
      %40 = arith.mulf %35, %39 : vector<16x64xf32>
      %c0_18 = arith.constant 0 : index
      %c0_19 = arith.constant 0 : index
      %41 = vector.load %arg10[%c0_18, %c0_19] : memref<216x128xf32, #tpu.memory_space<vmem>>, vector<16x128xf32>
      %cst_20 = arith.constant dense<0.000000e+00> : vector<64x128xf32>
      %42 = tpu.matmul %40, %11, %cst_20 {dimension_numbers = #tpu.dot_dimension_numbers<[0], [0], [1], [1], [0, 1, 1, 1], [], []>} : vector<16x64xf32>, vector<16x128xf32>, vector<64x128xf32> -> vector<64x128xf32>
      %c0_21 = arith.constant 0 : index
      %c0_22 = arith.constant 0 : index
      %43 = vector.load %arg5[%c0_21, %c0_22] : memref<64x128xf32, #tpu.memory_space<vmem>>, vector<64x128xf32>
      %44 = arith.mulf %42, %43 : vector<64x128xf32>
      %45 = vector.extract_strided_slice %44 {offsets = [0, 0], sizes = [16, 128], strides = [1, 1]} : vector<64x128xf32> to vector<16x128xf32>
      %46 = vector.extract_strided_slice %44 {offsets = [16, 0], sizes = [16, 128], strides = [1, 1]} : vector<64x128xf32> to vector<16x128xf32>
      %47 = arith.addf %45, %46 : vector<16x128xf32>
      %48 = vector.extract_strided_slice %44 {offsets = [32, 0], sizes = [16, 128], strides = [1, 1]} : vector<64x128xf32> to vector<16x128xf32>
      %49 = arith.addf %47, %48 : vector<16x128xf32>
      %50 = vector.extract_strided_slice %44 {offsets = [48, 0], sizes = [16, 128], strides = [1, 1]} : vector<64x128xf32> to vector<16x128xf32>
      %51 = arith.addf %49, %50 : vector<16x128xf32>
      %52 = arith.addf %51, %41 : vector<16x128xf32>
      %c112 = arith.constant 112 : index
      %c0_23 = arith.constant 0 : index
      %53 = vector.load %arg7[%c112, %c0_23] : memref<944x32xf32, #tpu.memory_space<vmem>>, vector<128x32xf32>
      %cst_24 = arith.constant dense<0.000000e+00> : vector<16x32xf32>
      %54 = tpu.matmul %52, %53, %cst_24 {dimension_numbers = #tpu.dot_dimension_numbers<[1], [0], [0], [1], [0, 0, 1, 1], [], []>} : vector<16x128xf32>, vector<128x32xf32>, vector<16x32xf32> -> vector<16x32xf32>
      %c56 = arith.constant 56 : index
      %c0_25 = arith.constant 0 : index
      %55 = vector.load %arg9[%c56, %c0_25] : memref<168x32xf32, #tpu.memory_space<vmem>>, vector<16x32xf32>
      %56 = arith.addf %54, %55 : vector<16x32xf32>
      %cst_26 = arith.constant 0.000000e+00 : f32
      %57 = vector.broadcast %cst_26 : f32 to vector<16x32xf32>
      %58 = arith.maximumf %56, %57 : vector<16x32xf32>
      %c16 = arith.constant 16 : index
      %c0_27 = arith.constant 0 : index
      %59 = vector.load %arg8[%c16, %c0_27] : memref<336x128xf32, #tpu.memory_space<vmem>>, vector<32x128xf32>
      %cst_28 = arith.constant dense<0.000000e+00> : vector<16x128xf32>
      %60 = tpu.matmul %58, %59, %cst_28 {dimension_numbers = #tpu.dot_dimension_numbers<[1], [0], [0], [1], [0, 0, 1, 1], [], []>} : vector<16x32xf32>, vector<32x128xf32>, vector<16x128xf32> -> vector<16x128xf32>
      %c128 = arith.constant 128 : index
      %c0_29 = arith.constant 0 : index
      %61 = vector.load %arg11[%c128, %c0_29] : memref<384x64xf32, #tpu.memory_space<vmem>>, vector<128x64xf32>
      %cst_30 = arith.constant dense<0.000000e+00> : vector<16x64xf32>
      %62 = tpu.matmul %60, %61, %cst_30 {dimension_numbers = #tpu.dot_dimension_numbers<[1], [0], [0], [1], [0, 0, 1, 1], [], []>} : vector<16x128xf32>, vector<128x64xf32>, vector<16x64xf32> -> vector<16x64xf32>
      %c8 = arith.constant 8 : index
      %c0_31 = arith.constant 0 : index
      %63 = vector.load %arg12[%c8, %c0_31] : memref<24x128xf32, #tpu.memory_space<vmem>>, vector<4x128xf32>
      %cst_32 = arith.constant dense<0.000000e+00> : vector<4x16xf32>
      %64 = tpu.matmul %63, %60, %cst_32 {dimension_numbers = #tpu.dot_dimension_numbers<[1], [1], [0], [0], [0, 0, 1, 0], [], []>} : vector<4x128xf32>, vector<16x128xf32>, vector<4x16xf32> -> vector<4x16xf32>
      %65 = vector.extract_strided_slice %64 {offsets = [0, 0], sizes = [1, 16], strides = [1, 1]} : vector<4x16xf32> to vector<1x16xf32>
      %66 = vector.extract_strided_slice %64 {offsets = [1, 0], sizes = [1, 16], strides = [1, 1]} : vector<4x16xf32> to vector<1x16xf32>
      %67 = vector.extract_strided_slice %64 {offsets = [2, 0], sizes = [1, 16], strides = [1, 1]} : vector<4x16xf32> to vector<1x16xf32>
      %68 = vector.extract_strided_slice %64 {offsets = [3, 0], sizes = [1, 16], strides = [1, 1]} : vector<4x16xf32> to vector<1x16xf32>
      %69 = tpu.concatenate %65, %66, %67, %68 in 1 : vector<1x16xf32>, vector<1x16xf32>, vector<1x16xf32>, vector<1x16xf32> -> vector<1x64xf32>
      %70 = vector.broadcast %69 : vector<1x64xf32> to vector<16x64xf32>
      %71 = arith.addf %62, %70 : vector<16x64xf32>
      %cst_33 = arith.constant 0.000000e+00 : f32
      %72 = vector.broadcast %cst_33 : f32 to vector<16x64xf32>
      %73 = arith.cmpf ogt, %71, %72 : vector<16x64xf32>
      %cst_34 = arith.constant 2.000000e-01 : f32
      %74 = vector.broadcast %cst_34 : f32 to vector<16x64xf32>
      %75 = arith.mulf %74, %71 : vector<16x64xf32>
      %76 = arith.select %73, %71, %75 : vector<16x64xi1>, vector<16x64xf32>
      %c0_35 = arith.constant 0 : index
      %c0_36 = arith.constant 0 : index
      %77 = vector.load %arg4[%c0_35, %c0_36] : memref<16x64xf32, #tpu.memory_space<vmem>>, vector<16x64xf32>
      %78 = vector.shape_cast %77 : vector<16x64xf32> to vector<16x64xf32>
      %79 = arith.addf %76, %78 : vector<16x64xf32>
      %cst_37 = arith.constant dense<0xFF800000> : vector<64xf32>
      %80 = vector.multi_reduction <maximumf>, %79, %cst_37 [0] : vector<16x64xf32> to vector<64xf32>
      %81 = vector.shape_cast %80 : vector<64xf32> to vector<1x64xf32>
      %82 = vector.broadcast %81 : vector<1x64xf32> to vector<16x64xf32>
      %83 = arith.subf %79, %82 : vector<16x64xf32>
      %84 = math.exp %83 : vector<16x64xf32>
      %cst_38 = arith.constant dense<0.000000e+00> : vector<64xf32>
      %85 = vector.multi_reduction <add>, %84, %cst_38 [0] : vector<16x64xf32> to vector<64xf32>
      %86 = vector.shape_cast %85 : vector<64xf32> to vector<1x64xf32>
      %87 = tpu.reciprocal %86 {approx = true} : vector<1x64xf32> -> vector<1x64xf32>
      %88 = vector.broadcast %87 : vector<1x64xf32> to vector<16x64xf32>
      %89 = arith.mulf %84, %88 : vector<16x64xf32>
      %c16_39 = arith.constant 16 : index
      %c0_40 = arith.constant 0 : index
      %90 = vector.load %arg10[%c16_39, %c0_40] : memref<216x128xf32, #tpu.memory_space<vmem>>, vector<16x128xf32>
      %cst_41 = arith.constant dense<0.000000e+00> : vector<64x128xf32>
      %91 = tpu.matmul %89, %60, %cst_41 {dimension_numbers = #tpu.dot_dimension_numbers<[0], [0], [1], [1], [0, 1, 1, 1], [], []>} : vector<16x64xf32>, vector<16x128xf32>, vector<64x128xf32> -> vector<64x128xf32>
      %c0_42 = arith.constant 0 : index
      %c0_43 = arith.constant 0 : index
      %92 = vector.load %arg5[%c0_42, %c0_43] : memref<64x128xf32, #tpu.memory_space<vmem>>, vector<64x128xf32>
      %93 = arith.mulf %91, %92 : vector<64x128xf32>
      %94 = vector.extract_strided_slice %93 {offsets = [0, 0], sizes = [16, 128], strides = [1, 1]} : vector<64x128xf32> to vector<16x128xf32>
      %95 = vector.extract_strided_slice %93 {offsets = [16, 0], sizes = [16, 128], strides = [1, 1]} : vector<64x128xf32> to vector<16x128xf32>
      %96 = arith.addf %94, %95 : vector<16x128xf32>
      %97 = vector.extract_strided_slice %93 {offsets = [32, 0], sizes = [16, 128], strides = [1, 1]} : vector<64x128xf32> to vector<16x128xf32>
      %98 = arith.addf %96, %97 : vector<16x128xf32>
      %99 = vector.extract_strided_slice %93 {offsets = [48, 0], sizes = [16, 128], strides = [1, 1]} : vector<64x128xf32> to vector<16x128xf32>
      %100 = arith.addf %98, %99 : vector<16x128xf32>
      %101 = arith.addf %100, %90 : vector<16x128xf32>
      %c240 = arith.constant 240 : index
      %c0_44 = arith.constant 0 : index
      %102 = vector.load %arg7[%c240, %c0_44] : memref<944x32xf32, #tpu.memory_space<vmem>>, vector<128x32xf32>
      %cst_45 = arith.constant dense<0.000000e+00> : vector<16x32xf32>
      %103 = tpu.matmul %101, %102, %cst_45 {dimension_numbers = #tpu.dot_dimension_numbers<[1], [0], [0], [1], [0, 0, 1, 1], [], []>} : vector<16x128xf32>, vector<128x32xf32>, vector<16x32xf32> -> vector<16x32xf32>
      %c72 = arith.constant 72 : index
      %c0_46 = arith.constant 0 : index
      %104 = vector.load %arg9[%c72, %c0_46] : memref<168x32xf32, #tpu.memory_space<vmem>>, vector<16x32xf32>
      %105 = arith.addf %103, %104 : vector<16x32xf32>
      %cst_47 = arith.constant 0.000000e+00 : f32
      %106 = vector.broadcast %cst_47 : f32 to vector<16x32xf32>
      %107 = arith.maximumf %105, %106 : vector<16x32xf32>
      %c48 = arith.constant 48 : index
      %c0_48 = arith.constant 0 : index
      %108 = vector.load %arg8[%c48, %c0_48] : memref<336x128xf32, #tpu.memory_space<vmem>>, vector<32x128xf32>
      %cst_49 = arith.constant dense<0.000000e+00> : vector<16x128xf32>
      %109 = tpu.matmul %107, %108, %cst_49 {dimension_numbers = #tpu.dot_dimension_numbers<[1], [0], [0], [1], [0, 0, 1, 1], [], []>} : vector<16x32xf32>, vector<32x128xf32>, vector<16x128xf32> -> vector<16x128xf32>
      %c256 = arith.constant 256 : index
      %c0_50 = arith.constant 0 : index
      %110 = vector.load %arg11[%c256, %c0_50] : memref<384x64xf32, #tpu.memory_space<vmem>>, vector<128x64xf32>
      %cst_51 = arith.constant dense<0.000000e+00> : vector<16x64xf32>
      %111 = tpu.matmul %109, %110, %cst_51 {dimension_numbers = #tpu.dot_dimension_numbers<[1], [0], [0], [1], [0, 0, 1, 1], [], []>} : vector<16x128xf32>, vector<128x64xf32>, vector<16x64xf32> -> vector<16x64xf32>
      %c16_52 = arith.constant 16 : index
      %c0_53 = arith.constant 0 : index
      %112 = vector.load %arg12[%c16_52, %c0_53] : memref<24x128xf32, #tpu.memory_space<vmem>>, vector<4x128xf32>
      %cst_54 = arith.constant dense<0.000000e+00> : vector<4x16xf32>
      %113 = tpu.matmul %112, %109, %cst_54 {dimension_numbers = #tpu.dot_dimension_numbers<[1], [1], [0], [0], [0, 0, 1, 0], [], []>} : vector<4x128xf32>, vector<16x128xf32>, vector<4x16xf32> -> vector<4x16xf32>
      %114 = vector.extract_strided_slice %113 {offsets = [0, 0], sizes = [1, 16], strides = [1, 1]} : vector<4x16xf32> to vector<1x16xf32>
      %115 = vector.extract_strided_slice %113 {offsets = [1, 0], sizes = [1, 16], strides = [1, 1]} : vector<4x16xf32> to vector<1x16xf32>
      %116 = vector.extract_strided_slice %113 {offsets = [2, 0], sizes = [1, 16], strides = [1, 1]} : vector<4x16xf32> to vector<1x16xf32>
      %117 = vector.extract_strided_slice %113 {offsets = [3, 0], sizes = [1, 16], strides = [1, 1]} : vector<4x16xf32> to vector<1x16xf32>
      %118 = tpu.concatenate %114, %115, %116, %117 in 1 : vector<1x16xf32>, vector<1x16xf32>, vector<1x16xf32>, vector<1x16xf32> -> vector<1x64xf32>
      %119 = vector.broadcast %118 : vector<1x64xf32> to vector<16x64xf32>
      %120 = arith.addf %111, %119 : vector<16x64xf32>
      %cst_55 = arith.constant 0.000000e+00 : f32
      %121 = vector.broadcast %cst_55 : f32 to vector<16x64xf32>
      %122 = arith.cmpf ogt, %120, %121 : vector<16x64xf32>
      %cst_56 = arith.constant 2.000000e-01 : f32
      %123 = vector.broadcast %cst_56 : f32 to vector<16x64xf32>
      %124 = arith.mulf %123, %120 : vector<16x64xf32>
      %125 = arith.select %122, %120, %124 : vector<16x64xi1>, vector<16x64xf32>
      %c0_57 = arith.constant 0 : index
      %c0_58 = arith.constant 0 : index
      %126 = vector.load %arg4[%c0_57, %c0_58] : memref<16x64xf32, #tpu.memory_space<vmem>>, vector<16x64xf32>
      %127 = vector.shape_cast %126 : vector<16x64xf32> to vector<16x64xf32>
      %128 = arith.addf %125, %127 : vector<16x64xf32>
      %cst_59 = arith.constant dense<0xFF800000> : vector<64xf32>
      %129 = vector.multi_reduction <maximumf>, %128, %cst_59 [0] : vector<16x64xf32> to vector<64xf32>
      %130 = vector.shape_cast %129 : vector<64xf32> to vector<1x64xf32>
      %131 = vector.broadcast %130 : vector<1x64xf32> to vector<16x64xf32>
      %132 = arith.subf %128, %131 : vector<16x64xf32>
      %133 = math.exp %132 : vector<16x64xf32>
      %cst_60 = arith.constant dense<0.000000e+00> : vector<64xf32>
      %134 = vector.multi_reduction <add>, %133, %cst_60 [0] : vector<16x64xf32> to vector<64xf32>
      %135 = vector.shape_cast %134 : vector<64xf32> to vector<1x64xf32>
      %136 = tpu.reciprocal %135 {approx = true} : vector<1x64xf32> -> vector<1x64xf32>
      %137 = vector.broadcast %136 : vector<1x64xf32> to vector<16x64xf32>
      %138 = arith.mulf %133, %137 : vector<16x64xf32>
      %c32 = arith.constant 32 : index
      %c0_61 = arith.constant 0 : index
      %139 = vector.load %arg10[%c32, %c0_61] : memref<216x128xf32, #tpu.memory_space<vmem>>, vector<16x128xf32>
      %cst_62 = arith.constant dense<0.000000e+00> : vector<64x128xf32>
      %140 = tpu.matmul %138, %109, %cst_62 {dimension_numbers = #tpu.dot_dimension_numbers<[0], [0], [1], [1], [0, 1, 1, 1], [], []>} : vector<16x64xf32>, vector<16x128xf32>, vector<64x128xf32> -> vector<64x128xf32>
      %c0_63 = arith.constant 0 : index
      %c0_64 = arith.constant 0 : index
      %141 = vector.load %arg5[%c0_63, %c0_64] : memref<64x128xf32, #tpu.memory_space<vmem>>, vector<64x128xf32>
      %142 = arith.mulf %140, %141 : vector<64x128xf32>
      %143 = vector.extract_strided_slice %142 {offsets = [0, 0], sizes = [16, 128], strides = [1, 1]} : vector<64x128xf32> to vector<16x128xf32>
      %144 = vector.extract_strided_slice %142 {offsets = [16, 0], sizes = [16, 128], strides = [1, 1]} : vector<64x128xf32> to vector<16x128xf32>
      %145 = arith.addf %143, %144 : vector<16x128xf32>
      %146 = vector.extract_strided_slice %142 {offsets = [32, 0], sizes = [16, 128], strides = [1, 1]} : vector<64x128xf32> to vector<16x128xf32>
      %147 = arith.addf %145, %146 : vector<16x128xf32>
      %148 = vector.extract_strided_slice %142 {offsets = [48, 0], sizes = [16, 128], strides = [1, 1]} : vector<64x128xf32> to vector<16x128xf32>
      %149 = arith.addf %147, %148 : vector<16x128xf32>
      %150 = arith.addf %149, %139 : vector<16x128xf32>
      %c368 = arith.constant 368 : index
      %c0_65 = arith.constant 0 : index
      %151 = vector.load %arg7[%c368, %c0_65] : memref<944x32xf32, #tpu.memory_space<vmem>>, vector<128x32xf32>
      %cst_66 = arith.constant dense<0.000000e+00> : vector<16x32xf32>
      %152 = tpu.matmul %150, %151, %cst_66 {dimension_numbers = #tpu.dot_dimension_numbers<[1], [0], [0], [1], [0, 0, 1, 1], [], []>} : vector<16x128xf32>, vector<128x32xf32>, vector<16x32xf32> -> vector<16x32xf32>
      %c88 = arith.constant 88 : index
      %c0_67 = arith.constant 0 : index
      %153 = vector.load %arg9[%c88, %c0_67] : memref<168x32xf32, #tpu.memory_space<vmem>>, vector<16x32xf32>
      %154 = arith.addf %152, %153 : vector<16x32xf32>
      %c0_68 = arith.constant 0 : index
      %c0_69 = arith.constant 0 : index
      %155 = vector.load %arg3[%c0_68, %c0_69] : memref<8x16xf32, #tpu.memory_space<vmem>>, vector<8x16xf32>
      %cst_70 = arith.constant dense<0.000000e+00> : vector<8x32xf32>
      %156 = tpu.matmul %155, %154, %cst_70 {dimension_numbers = #tpu.dot_dimension_numbers<[1], [0], [0], [1], [0, 0, 1, 1], [], []>} : vector<8x16xf32>, vector<16x32xf32>, vector<8x32xf32> -> vector<8x32xf32>
      %c496 = arith.constant 496 : index
      %c0_71 = arith.constant 0 : index
      %157 = vector.load %arg7[%c496, %c0_71] : memref<944x32xf32, #tpu.memory_space<vmem>>, vector<32x32xf32>
      %cst_72 = arith.constant dense<0.000000e+00> : vector<8x32xf32>
      %158 = tpu.matmul %156, %157, %cst_72 {dimension_numbers = #tpu.dot_dimension_numbers<[1], [0], [0], [1], [0, 0, 1, 1], [], []>} : vector<8x32xf32>, vector<32x32xf32>, vector<8x32xf32> -> vector<8x32xf32>
      %c104 = arith.constant 104 : index
      %c0_73 = arith.constant 0 : index
      %159 = vector.load %arg9[%c104, %c0_73] : memref<168x32xf32, #tpu.memory_space<vmem>>, vector<8x32xf32>
      %160 = arith.addf %158, %159 : vector<8x32xf32>
      %cst_74 = arith.constant 0.000000e+00 : f32
      %161 = vector.broadcast %cst_74 : f32 to vector<8x32xf32>
      %162 = arith.maximumf %160, %161 : vector<8x32xf32>
      %c272 = arith.constant 272 : index
      %c0_75 = arith.constant 0 : index
      %163 = vector.load %arg8[%c272, %c0_75] : memref<336x128xf32, #tpu.memory_space<vmem>>, vector<32x128xf32>
      %cst_76 = arith.constant dense<0.000000e+00> : vector<8x128xf32>
      %164 = tpu.matmul %162, %163, %cst_76 {dimension_numbers = #tpu.dot_dimension_numbers<[1], [0], [0], [1], [0, 0, 1, 1], [], []>} : vector<8x32xf32>, vector<32x128xf32>, vector<8x128xf32> -> vector<8x128xf32>
      %c200 = arith.constant 200 : index
      %c0_77 = arith.constant 0 : index
      %165 = vector.load %arg10[%c200, %c0_77] : memref<216x128xf32, #tpu.memory_space<vmem>>, vector<8x128xf32>
      %166 = arith.addf %164, %165 : vector<8x128xf32>
      %c0_78 = arith.constant 0 : index
      %c0_79 = arith.constant 0 : index
      %167 = vector.load %arg14[%c0_78, %c0_79] : memref<8x128xf32, #tpu.memory_space<vmem>>, vector<8x128xf32>
      tpu.vector_store %arg14[%c0_78, %c0_79], %166 {strides = array<i32>} : memref<8x128xf32, #tpu.memory_space<vmem>>, vector<8x128xf32>,
    } else {
    }
    %c2_i32 = arith.constant 2 : i32
    %6 = arith.cmpi eq, %arg0, %c2_i32 : i32
    %7 = arith.extui %6 : i1 to i32
    %c0_i32_2 = arith.constant 0 : i32
    %8 = arith.cmpi ne, %7, %c0_i32_2 : i32
    scf.if %8 {
      %c0 = arith.constant 0 : index
      %c0_3 = arith.constant 0 : index
      %9 = vector.load %arg1[%c0, %c0_3] : memref<16x16xf32, #tpu.memory_space<vmem>>, vector<16x16xf32>
      %c80 = arith.constant 80 : index
      %c0_4 = arith.constant 0 : index
      %10 = vector.load %arg8[%c80, %c0_4] : memref<336x128xf32, #tpu.memory_space<vmem>>, vector<16x128xf32>
      %cst = arith.constant dense<0.000000e+00> : vector<16x128xf32>
      %11 = tpu.matmul %9, %10, %cst {dimension_numbers = #tpu.dot_dimension_numbers<[1], [0], [0], [1], [0, 0, 1, 1], [], []>} : vector<16x16xf32>, vector<16x128xf32>, vector<16x128xf32> -> vector<16x128xf32>
      %c48 = arith.constant 48 : index
      %c0_5 = arith.constant 0 : index
      %12 = vector.load %arg10[%c48, %c0_5] : memref<216x128xf32, #tpu.memory_space<vmem>>, vector<16x128xf32>
      %13 = arith.addf %11, %12 : vector<16x128xf32>
      %c96 = arith.constant 96 : index
      %c0_6 = arith.constant 0 : index
      %14 = vector.load %arg8[%c96, %c0_6] : memref<336x128xf32, #tpu.memory_space<vmem>>, vector<16x128xf32>
      %cst_7 = arith.constant dense<0.000000e+00> : vector<16x128xf32>
      %15 = tpu.matmul %9, %14, %cst_7 {dimension_numbers = #tpu.dot_dimension_numbers<[1], [0], [0], [1], [0, 0, 1, 1], [], []>} : vector<16x16xf32>, vector<16x128xf32>, vector<16x128xf32> -> vector<16x128xf32>
      %c64 = arith.constant 64 : index
      %c0_8 = arith.constant 0 : index
      %16 = vector.load %arg10[%c64, %c0_8] : memref<216x128xf32, #tpu.memory_space<vmem>>, vector<16x128xf32>
      %17 = arith.addf %15, %16 : vector<16x128xf32>
      %18 = tpu.concatenate %13, %13, %13, %13, %13, %13, %13, %13, %13, %13, %13, %13, %13, %13, %13, %13 in 1 : vector<16x128xf32>, vector<16x128xf32>, vector<16x128xf32>, vector<16x128xf32>, vector<16x128xf32>, vector<16x128xf32>, vector<16x128xf32>, vector<16x128xf32>, vector<16x128xf32>, vector<16x128xf32>, vector<16x128xf32>, vector<16x128xf32>, vector<16x128xf32>, vector<16x128xf32>, vector<16x128xf32>, vector<16x128xf32> -> vector<16x2048xf32>
      %19 = vector.extract_strided_slice %17 {offsets = [0, 0], sizes = [1, 128], strides = [1, 1]} : vector<16x128xf32> to vector<1x128xf32>
      %20 = vector.extract_strided_slice %17 {offsets = [1, 0], sizes = [1, 128], strides = [1, 1]} : vector<16x128xf32> to vector<1x128xf32>
      %21 = vector.extract_strided_slice %17 {offsets = [2, 0], sizes = [1, 128], strides = [1, 1]} : vector<16x128xf32> to vector<1x128xf32>
      %22 = vector.extract_strided_slice %17 {offsets = [3, 0], sizes = [1, 128], strides = [1, 1]} : vector<16x128xf32> to vector<1x128xf32>
      %23 = vector.extract_strided_slice %17 {offsets = [4, 0], sizes = [1, 128], strides = [1, 1]} : vector<16x128xf32> to vector<1x128xf32>
      %24 = vector.extract_strided_slice %17 {offsets = [5, 0], sizes = [1, 128], strides = [1, 1]} : vector<16x128xf32> to vector<1x128xf32>
      %25 = vector.extract_strided_slice %17 {offsets = [6, 0], sizes = [1, 128], strides = [1, 1]} : vector<16x128xf32> to vector<1x128xf32>
      %26 = vector.extract_strided_slice %17 {offsets = [7, 0], sizes = [1, 128], strides = [1, 1]} : vector<16x128xf32> to vector<1x128xf32>
      %27 = vector.extract_strided_slice %17 {offsets = [8, 0], sizes = [1, 128], strides = [1, 1]} : vector<16x128xf32> to vector<1x128xf32>
      %28 = vector.extract_strided_slice %17 {offsets = [9, 0], sizes = [1, 128], strides = [1, 1]} : vector<16x128xf32> to vector<1x128xf32>
      %29 = vector.extract_strided_slice %17 {offsets = [10, 0], sizes = [1, 128], strides = [1, 1]} : vector<16x128xf32> to vector<1x128xf32>
      %30 = vector.extract_strided_slice %17 {offsets = [11, 0], sizes = [1, 128], strides = [1, 1]} : vector<16x128xf32> to vector<1x128xf32>
      %31 = vector.extract_strided_slice %17 {offsets = [12, 0], sizes = [1, 128], strides = [1, 1]} : vector<16x128xf32> to vector<1x128xf32>
      %32 = vector.extract_strided_slice %17 {offsets = [13, 0], sizes = [1, 128], strides = [1, 1]} : vector<16x128xf32> to vector<1x128xf32>
      %33 = vector.extract_strided_slice %17 {offsets = [14, 0], sizes = [1, 128], strides = [1, 1]} : vector<16x128xf32> to vector<1x128xf32>
      %34 = vector.extract_strided_slice %17 {offsets = [15, 0], sizes = [1, 128], strides = [1, 1]} : vector<16x128xf32> to vector<1x128xf32>
      %35 = tpu.concatenate %19, %20, %21, %22, %23, %24, %25, %26, %27, %28, %29, %30, %31, %32, %33, %34 in 1 : vector<1x128xf32>, vector<1x128xf32>, vector<1x128xf32>, vector<1x128xf32>, vector<1x128xf32>, vector<1x128xf32>, vector<1x128xf32>, vector<1x128xf32>, vector<1x128xf32>, vector<1x128xf32>, vector<1x128xf32>, vector<1x128xf32>, vector<1x128xf32>, vector<1x128xf32>, vector<1x128xf32>, vector<1x128xf32> -> vector<1x2048xf32>
      %36 = vector.broadcast %35 : vector<1x2048xf32> to vector<16x2048xf32>
      %37 = arith.addf %18, %36 : vector<16x2048xf32>
      %cst_9 = arith.constant 0.000000e+00 : f32
      %38 = vector.broadcast %cst_9 : f32 to vector<16x2048xf32>
      %39 = arith.cmpf ogt, %37, %38 : vector<16x2048xf32>
      %cst_10 = arith.constant 2.000000e-01 : f32
      %40 = vector.broadcast %cst_10 : f32 to vector<16x2048xf32>
      %41 = arith.mulf %40, %37 : vector<16x2048xf32>
      %42 = arith.select %39, %37, %41 : vector<16x2048xi1>, vector<16x2048xf32>
      %c0_11 = arith.constant 0 : index
      %c0_12 = arith.constant 0 : index
      %43 = vector.load %arg13[%c0_11, %c0_12] : memref<24x128xf32, #tpu.memory_space<vmem>>, vector<1x128xf32>
      %44 = tpu.concatenate %43, %43, %43, %43, %43, %43, %43, %43, %43, %43, %43, %43, %43, %43, %43, %43 in 1 : vector<1x128xf32>, vector<1x128xf32>, vector<1x128xf32>, vector<1x128xf32>, vector<1x128xf32>, vector<1x128xf32>, vector<1x128xf32>, vector<1x128xf32>, vector<1x128xf32>, vector<1x128xf32>, vector<1x128xf32>, vector<1x128xf32>, vector<1x128xf32>, vector<1x128xf32>, vector<1x128xf32>, vector<1x128xf32> -> vector<1x2048xf32>
      %45 = vector.broadcast %44 : vector<1x2048xf32> to vector<16x2048xf32>
      %46 = arith.mulf %42, %45 : vector<16x2048xf32>
      %c0_13 = arith.constant 0 : index
      %c0_14 = arith.constant 0 : index
      %47 = vector.load %arg6[%c0_13, %c0_14] : memref<64x2048xf32, #tpu.memory_space<vmem>>, vector<64x2048xf32>
      %cst_15 = arith.constant dense<0.000000e+00> : vector<16x64xf32>
      %48 = tpu.matmul %46, %47, %cst_15 {dimension_numbers = #tpu.dot_dimension_numbers<[1], [1], [0], [0], [0, 0, 1, 0], [], []>} : vector<16x2048xf32>, vector<64x2048xf32>, vector<16x64xf32> -> vector<16x64xf32>
      %c0_16 = arith.constant 0 : index
      %c0_17 = arith.constant 0 : index
      %49 = vector.load %arg4[%c0_16, %c0_17] : memref<16x64xf32, #tpu.memory_space<vmem>>, vector<16x64xf32>
      %50 = vector.shape_cast %49 : vector<16x64xf32> to vector<16x64xf32>
      %51 = arith.addf %48, %50 : vector<16x64xf32>
      %cst_18 = arith.constant dense<0xFF800000> : vector<64xf32>
      %52 = vector.multi_reduction <maximumf>, %51, %cst_18 [0] : vector<16x64xf32> to vector<64xf32>
      %53 = vector.shape_cast %52 : vector<64xf32> to vector<1x64xf32>
      %54 = vector.broadcast %53 : vector<1x64xf32> to vector<16x64xf32>
      %55 = arith.subf %51, %54 : vector<16x64xf32>
      %56 = math.exp %55 : vector<16x64xf32>
      %cst_19 = arith.constant dense<0.000000e+00> : vector<64xf32>
      %57 = vector.multi_reduction <add>, %56, %cst_19 [0] : vector<16x64xf32> to vector<64xf32>
      %58 = vector.shape_cast %57 : vector<64xf32> to vector<1x64xf32>
      %59 = tpu.reciprocal %58 {approx = true} : vector<1x64xf32> -> vector<1x64xf32>
      %60 = vector.broadcast %59 : vector<1x64xf32> to vector<16x64xf32>
      %61 = arith.mulf %56, %60 : vector<16x64xf32>
      %c80_20 = arith.constant 80 : index
      %c0_21 = arith.constant 0 : index
      %62 = vector.load %arg10[%c80_20, %c0_21] : memref<216x128xf32, #tpu.memory_space<vmem>>, vector<16x128xf32>
      %cst_22 = arith.constant dense<0.000000e+00> : vector<64x128xf32>
      %63 = tpu.matmul %61, %13, %cst_22 {dimension_numbers = #tpu.dot_dimension_numbers<[0], [0], [1], [1], [0, 1, 1, 1], [], []>} : vector<16x64xf32>, vector<16x128xf32>, vector<64x128xf32> -> vector<64x128xf32>
      %c0_23 = arith.constant 0 : index
      %c0_24 = arith.constant 0 : index
      %64 = vector.load %arg5[%c0_23, %c0_24] : memref<64x128xf32, #tpu.memory_space<vmem>>, vector<64x128xf32>
      %65 = arith.mulf %63, %64 : vector<64x128xf32>
      %66 = vector.extract_strided_slice %65 {offsets = [0, 0], sizes = [16, 128], strides = [1, 1]} : vector<64x128xf32> to vector<16x128xf32>
      %67 = vector.extract_strided_slice %65 {offsets = [16, 0], sizes = [16, 128], strides = [1, 1]} : vector<64x128xf32> to vector<16x128xf32>
      %68 = arith.addf %66, %67 : vector<16x128xf32>
      %69 = vector.extract_strided_slice %65 {offsets = [32, 0], sizes = [16, 128], strides = [1, 1]} : vector<64x128xf32> to vector<16x128xf32>
      %70 = arith.addf %68, %69 : vector<16x128xf32>
      %71 = vector.extract_strided_slice %65 {offsets = [48, 0], sizes = [16, 128], strides = [1, 1]} : vector<64x128xf32> to vector<16x128xf32>
      %72 = arith.addf %70, %71 : vector<16x128xf32>
      %73 = arith.addf %72, %62 : vector<16x128xf32>
      %c528 = arith.constant 528 : index
      %c0_25 = arith.constant 0 : index
      %74 = vector.load %arg7[%c528, %c0_25] : memref<944x32xf32, #tpu.memory_space<vmem>>, vector<128x32xf32>
      %cst_26 = arith.constant dense<0.000000e+00> : vector<16x32xf32>
      %75 = tpu.matmul %73, %74, %cst_26 {dimension_numbers = #tpu.dot_dimension_numbers<[1], [0], [0], [1], [0, 0, 1, 1], [], []>} : vector<16x128xf32>, vector<128x32xf32>, vector<16x32xf32> -> vector<16x32xf32>
      %c112 = arith.constant 112 : index
      %c0_27 = arith.constant 0 : index
      %76 = vector.load %arg9[%c112, %c0_27] : memref<168x32xf32, #tpu.memory_space<vmem>>, vector<16x32xf32>
      %77 = arith.addf %75, %76 : vector<16x32xf32>
      %cst_28 = arith.constant 0.000000e+00 : f32
      %78 = vector.broadcast %cst_28 : f32 to vector<16x32xf32>
      %79 = arith.maximumf %77, %78 : vector<16x32xf32>
      %c112_29 = arith.constant 112 : index
      %c0_30 = arith.constant 0 : index
      %80 = vector.load %arg8[%c112_29, %c0_30] : memref<336x128xf32, #tpu.memory_space<vmem>>, vector<32x128xf32>
      %cst_31 = arith.constant dense<0.000000e+00> : vector<16x128xf32>
      %81 = tpu.matmul %79, %80, %cst_31 {dimension_numbers = #tpu.dot_dimension_numbers<[1], [0], [0], [1], [0, 0, 1, 1], [], []>} : vector<16x32xf32>, vector<32x128xf32>, vector<16x128xf32> -> vector<16x128xf32>
      %c96_32 = arith.constant 96 : index
      %c0_33 = arith.constant 0 : index
      %82 = vector.load %arg10[%c96_32, %c0_33] : memref<216x128xf32, #tpu.memory_space<vmem>>, vector<16x128xf32>
      %83 = arith.addf %81, %82 : vector<16x128xf32>
      %c144 = arith.constant 144 : index
      %c0_34 = arith.constant 0 : index
      %84 = vector.load %arg8[%c144, %c0_34] : memref<336x128xf32, #tpu.memory_space<vmem>>, vector<32x128xf32>
      %cst_35 = arith.constant dense<0.000000e+00> : vector<16x128xf32>
      %85 = tpu.matmul %79, %84, %cst_35 {dimension_numbers = #tpu.dot_dimension_numbers<[1], [0], [0], [1], [0, 0, 1, 1], [], []>} : vector<16x32xf32>, vector<32x128xf32>, vector<16x128xf32> -> vector<16x128xf32>
      %c112_36 = arith.constant 112 : index
      %c0_37 = arith.constant 0 : index
      %86 = vector.load %arg10[%c112_36, %c0_37] : memref<216x128xf32, #tpu.memory_space<vmem>>, vector<16x128xf32>
      %87 = arith.addf %85, %86 : vector<16x128xf32>
      %88 = tpu.concatenate %83, %83, %83, %83, %83, %83, %83, %83, %83, %83, %83, %83, %83, %83, %83, %83 in 1 : vector<16x128xf32>, vector<16x128xf32>, vector<16x128xf32>, vector<16x128xf32>, vector<16x128xf32>, vector<16x128xf32>, vector<16x128xf32>, vector<16x128xf32>, vector<16x128xf32>, vector<16x128xf32>, vector<16x128xf32>, vector<16x128xf32>, vector<16x128xf32>, vector<16x128xf32>, vector<16x128xf32>, vector<16x128xf32> -> vector<16x2048xf32>
      %89 = vector.extract_strided_slice %87 {offsets = [0, 0], sizes = [1, 128], strides = [1, 1]} : vector<16x128xf32> to vector<1x128xf32>
      %90 = vector.extract_strided_slice %87 {offsets = [1, 0], sizes = [1, 128], strides = [1, 1]} : vector<16x128xf32> to vector<1x128xf32>
      %91 = vector.extract_strided_slice %87 {offsets = [2, 0], sizes = [1, 128], strides = [1, 1]} : vector<16x128xf32> to vector<1x128xf32>
      %92 = vector.extract_strided_slice %87 {offsets = [3, 0], sizes = [1, 128], strides = [1, 1]} : vector<16x128xf32> to vector<1x128xf32>
      %93 = vector.extract_strided_slice %87 {offsets = [4, 0], sizes = [1, 128], strides = [1, 1]} : vector<16x128xf32> to vector<1x128xf32>
      %94 = vector.extract_strided_slice %87 {offsets = [5, 0], sizes = [1, 128], strides = [1, 1]} : vector<16x128xf32> to vector<1x128xf32>
      %95 = vector.extract_strided_slice %87 {offsets = [6, 0], sizes = [1, 128], strides = [1, 1]} : vector<16x128xf32> to vector<1x128xf32>
      %96 = vector.extract_strided_slice %87 {offsets = [7, 0], sizes = [1, 128], strides = [1, 1]} : vector<16x128xf32> to vector<1x128xf32>
      %97 = vector.extract_strided_slice %87 {offsets = [8, 0], sizes = [1, 128], strides = [1, 1]} : vector<16x128xf32> to vector<1x128xf32>
      %98 = vector.extract_strided_slice %87 {offsets = [9, 0], sizes = [1, 128], strides = [1, 1]} : vector<16x128xf32> to vector<1x128xf32>
      %99 = vector.extract_strided_slice %87 {offsets = [10, 0], sizes = [1, 128], strides = [1, 1]} : vector<16x128xf32> to vector<1x128xf32>
      %100 = vector.extract_strided_slice %87 {offsets = [11, 0], sizes = [1, 128], strides = [1, 1]} : vector<16x128xf32> to vector<1x128xf32>
      %101 = vector.extract_strided_slice %87 {offsets = [12, 0], sizes = [1, 128], strides = [1, 1]} : vector<16x128xf32> to vector<1x128xf32>
      %102 = vector.extract_strided_slice %87 {offsets = [13, 0], sizes = [1, 128], strides = [1, 1]} : vector<16x128xf32> to vector<1x128xf32>
      %103 = vector.extract_strided_slice %87 {offsets = [14, 0], sizes = [1, 128], strides = [1, 1]} : vector<16x128xf32> to vector<1x128xf32>
      %104 = vector.extract_strided_slice %87 {offsets = [15, 0], sizes = [1, 128], strides = [1, 1]} : vector<16x128xf32> to vector<1x128xf32>
      %105 = tpu.concatenate %89, %90, %91, %92, %93, %94, %95, %96, %97, %98, %99, %100, %101, %102, %103, %104 in 1 : vector<1x128xf32>, vector<1x128xf32>, vector<1x128xf32>, vector<1x128xf32>, vector<1x128xf32>, vector<1x128xf32>, vector<1x128xf32>, vector<1x128xf32>, vector<1x128xf32>, vector<1x128xf32>, vector<1x128xf32>, vector<1x128xf32>, vector<1x128xf32>, vector<1x128xf32>, vector<1x128xf32>, vector<1x128xf32> -> vector<1x2048xf32>
      %106 = vector.broadcast %105 : vector<1x2048xf32> to vector<16x2048xf32>
      %107 = arith.addf %88, %106 : vector<16x2048xf32>
      %cst_38 = arith.constant 0.000000e+00 : f32
      %108 = vector.broadcast %cst_38 : f32 to vector<16x2048xf32>
      %109 = arith.cmpf ogt, %107, %108 : vector<16x2048xf32>
      %cst_39 = arith.constant 2.000000e-01 : f32
      %110 = vector.broadcast %cst_39 : f32 to vector<16x2048xf32>
      %111 = arith.mulf %110, %107 : vector<16x2048xf32>
      %112 = arith.select %109, %107, %111 : vector<16x2048xi1>, vector<16x2048xf32>
      %c8 = arith.constant 8 : index
      %c0_40 = arith.constant 0 : index
      %113 = vector.load %arg13[%c8, %c0_40] : memref<24x128xf32, #tpu.memory_space<vmem>>, vector<1x128xf32>
      %114 = tpu.concatenate %113, %113, %113, %113, %113, %113, %113, %113, %113, %113, %113, %113, %113, %113, %113, %113 in 1 : vector<1x128xf32>, vector<1x128xf32>, vector<1x128xf32>, vector<1x128xf32>, vector<1x128xf32>, vector<1x128xf32>, vector<1x128xf32>, vector<1x128xf32>, vector<1x128xf32>, vector<1x128xf32>, vector<1x128xf32>, vector<1x128xf32>, vector<1x128xf32>, vector<1x128xf32>, vector<1x128xf32>, vector<1x128xf32> -> vector<1x2048xf32>
      %115 = vector.broadcast %114 : vector<1x2048xf32> to vector<16x2048xf32>
      %116 = arith.mulf %112, %115 : vector<16x2048xf32>
      %c0_41 = arith.constant 0 : index
      %c0_42 = arith.constant 0 : index
      %117 = vector.load %arg6[%c0_41, %c0_42] : memref<64x2048xf32, #tpu.memory_space<vmem>>, vector<64x2048xf32>
      %cst_43 = arith.constant dense<0.000000e+00> : vector<16x64xf32>
      %118 = tpu.matmul %116, %117, %cst_43 {dimension_numbers = #tpu.dot_dimension_numbers<[1], [1], [0], [0], [0, 0, 1, 0], [], []>} : vector<16x2048xf32>, vector<64x2048xf32>, vector<16x64xf32> -> vector<16x64xf32>
      %c0_44 = arith.constant 0 : index
      %c0_45 = arith.constant 0 : index
      %119 = vector.load %arg4[%c0_44, %c0_45] : memref<16x64xf32, #tpu.memory_space<vmem>>, vector<16x64xf32>
      %120 = vector.shape_cast %119 : vector<16x64xf32> to vector<16x64xf32>
      %121 = arith.addf %118, %120 : vector<16x64xf32>
      %cst_46 = arith.constant dense<0xFF800000> : vector<64xf32>
      %122 = vector.multi_reduction <maximumf>, %121, %cst_46 [0] : vector<16x64xf32> to vector<64xf32>
      %123 = vector.shape_cast %122 : vector<64xf32> to vector<1x64xf32>
      %124 = vector.broadcast %123 : vector<1x64xf32> to vector<16x64xf32>
      %125 = arith.subf %121, %124 : vector<16x64xf32>
      %126 = math.exp %125 : vector<16x64xf32>
      %cst_47 = arith.constant dense<0.000000e+00> : vector<64xf32>
      %127 = vector.multi_reduction <add>, %126, %cst_47 [0] : vector<16x64xf32> to vector<64xf32>
      %128 = vector.shape_cast %127 : vector<64xf32> to vector<1x64xf32>
      %129 = tpu.reciprocal %128 {approx = true} : vector<1x64xf32> -> vector<1x64xf32>
      %130 = vector.broadcast %129 : vector<1x64xf32> to vector<16x64xf32>
      %131 = arith.mulf %126, %130 : vector<16x64xf32>
      %c128 = arith.constant 128 : index
      %c0_48 = arith.constant 0 : index
      %132 = vector.load %arg10[%c128, %c0_48] : memref<216x128xf32, #tpu.memory_space<vmem>>, vector<16x128xf32>
      %cst_49 = arith.constant dense<0.000000e+00> : vector<64x128xf32>
      %133 = tpu.matmul %131, %83, %cst_49 {dimension_numbers = #tpu.dot_dimension_numbers<[0], [0], [1], [1], [0, 1, 1, 1], [], []>} : vector<16x64xf32>, vector<16x128xf32>, vector<64x128xf32> -> vector<64x128xf32>
      %c0_50 = arith.constant 0 : index
      %c0_51 = arith.constant 0 : index
      %134 = vector.load %arg5[%c0_50, %c0_51] : memref<64x128xf32, #tpu.memory_space<vmem>>, vector<64x128xf32>
      %135 = arith.mulf %133, %134 : vector<64x128xf32>
      %136 = vector.extract_strided_slice %135 {offsets = [0, 0], sizes = [16, 128], strides = [1, 1]} : vector<64x128xf32> to vector<16x128xf32>
      %137 = vector.extract_strided_slice %135 {offsets = [16, 0], sizes = [16, 128], strides = [1, 1]} : vector<64x128xf32> to vector<16x128xf32>
      %138 = arith.addf %136, %137 : vector<16x128xf32>
      %139 = vector.extract_strided_slice %135 {offsets = [32, 0], sizes = [16, 128], strides = [1, 1]} : vector<64x128xf32> to vector<16x128xf32>
      %140 = arith.addf %138, %139 : vector<16x128xf32>
      %141 = vector.extract_strided_slice %135 {offsets = [48, 0], sizes = [16, 128], strides = [1, 1]} : vector<64x128xf32> to vector<16x128xf32>
      %142 = arith.addf %140, %141 : vector<16x128xf32>
      %143 = arith.addf %142, %132 : vector<16x128xf32>
      %c656 = arith.constant 656 : index
      %c0_52 = arith.constant 0 : index
      %144 = vector.load %arg7[%c656, %c0_52] : memref<944x32xf32, #tpu.memory_space<vmem>>, vector<128x32xf32>
      %cst_53 = arith.constant dense<0.000000e+00> : vector<16x32xf32>
      %145 = tpu.matmul %143, %144, %cst_53 {dimension_numbers = #tpu.dot_dimension_numbers<[1], [0], [0], [1], [0, 0, 1, 1], [], []>} : vector<16x128xf32>, vector<128x32xf32>, vector<16x32xf32> -> vector<16x32xf32>
      %c128_54 = arith.constant 128 : index
      %c0_55 = arith.constant 0 : index
      %146 = vector.load %arg9[%c128_54, %c0_55] : memref<168x32xf32, #tpu.memory_space<vmem>>, vector<16x32xf32>
      %147 = arith.addf %145, %146 : vector<16x32xf32>
      %cst_56 = arith.constant 0.000000e+00 : f32
      %148 = vector.broadcast %cst_56 : f32 to vector<16x32xf32>
      %149 = arith.maximumf %147, %148 : vector<16x32xf32>
      %c176 = arith.constant 176 : index
      %c0_57 = arith.constant 0 : index
      %150 = vector.load %arg8[%c176, %c0_57] : memref<336x128xf32, #tpu.memory_space<vmem>>, vector<32x128xf32>
      %cst_58 = arith.constant dense<0.000000e+00> : vector<16x128xf32>
      %151 = tpu.matmul %149, %150, %cst_58 {dimension_numbers = #tpu.dot_dimension_numbers<[1], [0], [0], [1], [0, 0, 1, 1], [], []>} : vector<16x32xf32>, vector<32x128xf32>, vector<16x128xf32> -> vector<16x128xf32>
      %c144_59 = arith.constant 144 : index
      %c0_60 = arith.constant 0 : index
      %152 = vector.load %arg10[%c144_59, %c0_60] : memref<216x128xf32, #tpu.memory_space<vmem>>, vector<16x128xf32>
      %153 = arith.addf %151, %152 : vector<16x128xf32>
      %c208 = arith.constant 208 : index
      %c0_61 = arith.constant 0 : index
      %154 = vector.load %arg8[%c208, %c0_61] : memref<336x128xf32, #tpu.memory_space<vmem>>, vector<32x128xf32>
      %cst_62 = arith.constant dense<0.000000e+00> : vector<16x128xf32>
      %155 = tpu.matmul %149, %154, %cst_62 {dimension_numbers = #tpu.dot_dimension_numbers<[1], [0], [0], [1], [0, 0, 1, 1], [], []>} : vector<16x32xf32>, vector<32x128xf32>, vector<16x128xf32> -> vector<16x128xf32>
      %c160 = arith.constant 160 : index
      %c0_63 = arith.constant 0 : index
      %156 = vector.load %arg10[%c160, %c0_63] : memref<216x128xf32, #tpu.memory_space<vmem>>, vector<16x128xf32>
      %157 = arith.addf %155, %156 : vector<16x128xf32>
      %158 = tpu.concatenate %153, %153, %153, %153, %153, %153, %153, %153, %153, %153, %153, %153, %153, %153, %153, %153 in 1 : vector<16x128xf32>, vector<16x128xf32>, vector<16x128xf32>, vector<16x128xf32>, vector<16x128xf32>, vector<16x128xf32>, vector<16x128xf32>, vector<16x128xf32>, vector<16x128xf32>, vector<16x128xf32>, vector<16x128xf32>, vector<16x128xf32>, vector<16x128xf32>, vector<16x128xf32>, vector<16x128xf32>, vector<16x128xf32> -> vector<16x2048xf32>
      %159 = vector.extract_strided_slice %157 {offsets = [0, 0], sizes = [1, 128], strides = [1, 1]} : vector<16x128xf32> to vector<1x128xf32>
      %160 = vector.extract_strided_slice %157 {offsets = [1, 0], sizes = [1, 128], strides = [1, 1]} : vector<16x128xf32> to vector<1x128xf32>
      %161 = vector.extract_strided_slice %157 {offsets = [2, 0], sizes = [1, 128], strides = [1, 1]} : vector<16x128xf32> to vector<1x128xf32>
      %162 = vector.extract_strided_slice %157 {offsets = [3, 0], sizes = [1, 128], strides = [1, 1]} : vector<16x128xf32> to vector<1x128xf32>
      %163 = vector.extract_strided_slice %157 {offsets = [4, 0], sizes = [1, 128], strides = [1, 1]} : vector<16x128xf32> to vector<1x128xf32>
      %164 = vector.extract_strided_slice %157 {offsets = [5, 0], sizes = [1, 128], strides = [1, 1]} : vector<16x128xf32> to vector<1x128xf32>
      %165 = vector.extract_strided_slice %157 {offsets = [6, 0], sizes = [1, 128], strides = [1, 1]} : vector<16x128xf32> to vector<1x128xf32>
      %166 = vector.extract_strided_slice %157 {offsets = [7, 0], sizes = [1, 128], strides = [1, 1]} : vector<16x128xf32> to vector<1x128xf32>
      %167 = vector.extract_strided_slice %157 {offsets = [8, 0], sizes = [1, 128], strides = [1, 1]} : vector<16x128xf32> to vector<1x128xf32>
      %168 = vector.extract_strided_slice %157 {offsets = [9, 0], sizes = [1, 128], strides = [1, 1]} : vector<16x128xf32> to vector<1x128xf32>
      %169 = vector.extract_strided_slice %157 {offsets = [10, 0], sizes = [1, 128], strides = [1, 1]} : vector<16x128xf32> to vector<1x128xf32>
      %170 = vector.extract_strided_slice %157 {offsets = [11, 0], sizes = [1, 128], strides = [1, 1]} : vector<16x128xf32> to vector<1x128xf32>
      %171 = vector.extract_strided_slice %157 {offsets = [12, 0], sizes = [1, 128], strides = [1, 1]} : vector<16x128xf32> to vector<1x128xf32>
      %172 = vector.extract_strided_slice %157 {offsets = [13, 0], sizes = [1, 128], strides = [1, 1]} : vector<16x128xf32> to vector<1x128xf32>
      %173 = vector.extract_strided_slice %157 {offsets = [14, 0], sizes = [1, 128], strides = [1, 1]} : vector<16x128xf32> to vector<1x128xf32>
      %174 = vector.extract_strided_slice %157 {offsets = [15, 0], sizes = [1, 128], strides = [1, 1]} : vector<16x128xf32> to vector<1x128xf32>
      %175 = tpu.concatenate %159, %160, %161, %162, %163, %164, %165, %166, %167, %168, %169, %170, %171, %172, %173, %174 in 1 : vector<1x128xf32>, vector<1x128xf32>, vector<1x128xf32>, vector<1x128xf32>, vector<1x128xf32>, vector<1x128xf32>, vector<1x128xf32>, vector<1x128xf32>, vector<1x128xf32>, vector<1x128xf32>, vector<1x128xf32>, vector<1x128xf32>, vector<1x128xf32>, vector<1x128xf32>, vector<1x128xf32>, vector<1x128xf32> -> vector<1x2048xf32>
      %176 = vector.broadcast %175 : vector<1x2048xf32> to vector<16x2048xf32>
      %177 = arith.addf %158, %176 : vector<16x2048xf32>
      %cst_64 = arith.constant 0.000000e+00 : f32
      %178 = vector.broadcast %cst_64 : f32 to vector<16x2048xf32>
      %179 = arith.cmpf ogt, %177, %178 : vector<16x2048xf32>
      %cst_65 = arith.constant 2.000000e-01 : f32
      %180 = vector.broadcast %cst_65 : f32 to vector<16x2048xf32>
      %181 = arith.mulf %180, %177 : vector<16x2048xf32>
      %182 = arith.select %179, %177, %181 : vector<16x2048xi1>, vector<16x2048xf32>
      %c16 = arith.constant 16 : index
      %c0_66 = arith.constant 0 : index
      %183 = vector.load %arg13[%c16, %c0_66] : memref<24x128xf32, #tpu.memory_space<vmem>>, vector<1x128xf32>
      %184 = tpu.concatenate %183, %183, %183, %183, %183, %183, %183, %183, %183, %183, %183, %183, %183, %183, %183, %183 in 1 : vector<1x128xf32>, vector<1x128xf32>, vector<1x128xf32>, vector<1x128xf32>, vector<1x128xf32>, vector<1x128xf32>, vector<1x128xf32>, vector<1x128xf32>, vector<1x128xf32>, vector<1x128xf32>, vector<1x128xf32>, vector<1x128xf32>, vector<1x128xf32>, vector<1x128xf32>, vector<1x128xf32>, vector<1x128xf32> -> vector<1x2048xf32>
      %185 = vector.broadcast %184 : vector<1x2048xf32> to vector<16x2048xf32>
      %186 = arith.mulf %182, %185 : vector<16x2048xf32>
      %c0_67 = arith.constant 0 : index
      %c0_68 = arith.constant 0 : index
      %187 = vector.load %arg6[%c0_67, %c0_68] : memref<64x2048xf32, #tpu.memory_space<vmem>>, vector<64x2048xf32>
      %cst_69 = arith.constant dense<0.000000e+00> : vector<16x64xf32>
      %188 = tpu.matmul %186, %187, %cst_69 {dimension_numbers = #tpu.dot_dimension_numbers<[1], [1], [0], [0], [0, 0, 1, 0], [], []>} : vector<16x2048xf32>, vector<64x2048xf32>, vector<16x64xf32> -> vector<16x64xf32>
      %c0_70 = arith.constant 0 : index
      %c0_71 = arith.constant 0 : index
      %189 = vector.load %arg4[%c0_70, %c0_71] : memref<16x64xf32, #tpu.memory_space<vmem>>, vector<16x64xf32>
      %190 = vector.shape_cast %189 : vector<16x64xf32> to vector<16x64xf32>
      %191 = arith.addf %188, %190 : vector<16x64xf32>
      %cst_72 = arith.constant dense<0xFF800000> : vector<64xf32>
      %192 = vector.multi_reduction <maximumf>, %191, %cst_72 [0] : vector<16x64xf32> to vector<64xf32>
      %193 = vector.shape_cast %192 : vector<64xf32> to vector<1x64xf32>
      %194 = vector.broadcast %193 : vector<1x64xf32> to vector<16x64xf32>
      %195 = arith.subf %191, %194 : vector<16x64xf32>
      %196 = math.exp %195 : vector<16x64xf32>
      %cst_73 = arith.constant dense<0.000000e+00> : vector<64xf32>
      %197 = vector.multi_reduction <add>, %196, %cst_73 [0] : vector<16x64xf32> to vector<64xf32>
      %198 = vector.shape_cast %197 : vector<64xf32> to vector<1x64xf32>
      %199 = tpu.reciprocal %198 {approx = true} : vector<1x64xf32> -> vector<1x64xf32>
      %200 = vector.broadcast %199 : vector<1x64xf32> to vector<16x64xf32>
      %201 = arith.mulf %196, %200 : vector<16x64xf32>
      %c176_74 = arith.constant 176 : index
      %c0_75 = arith.constant 0 : index
      %202 = vector.load %arg10[%c176_74, %c0_75] : memref<216x128xf32, #tpu.memory_space<vmem>>, vector<16x128xf32>
      %cst_76 = arith.constant dense<0.000000e+00> : vector<64x128xf32>
      %203 = tpu.matmul %201, %153, %cst_76 {dimension_numbers = #tpu.dot_dimension_numbers<[0], [0], [1], [1], [0, 1, 1, 1], [], []>} : vector<16x64xf32>, vector<16x128xf32>, vector<64x128xf32> -> vector<64x128xf32>
      %c0_77 = arith.constant 0 : index
      %c0_78 = arith.constant 0 : index
      %204 = vector.load %arg5[%c0_77, %c0_78] : memref<64x128xf32, #tpu.memory_space<vmem>>, vector<64x128xf32>
      %205 = arith.mulf %203, %204 : vector<64x128xf32>
      %206 = vector.extract_strided_slice %205 {offsets = [0, 0], sizes = [16, 128], strides = [1, 1]} : vector<64x128xf32> to vector<16x128xf32>
      %207 = vector.extract_strided_slice %205 {offsets = [16, 0], sizes = [16, 128], strides = [1, 1]} : vector<64x128xf32> to vector<16x128xf32>
      %208 = arith.addf %206, %207 : vector<16x128xf32>
      %209 = vector.extract_strided_slice %205 {offsets = [32, 0], sizes = [16, 128], strides = [1, 1]} : vector<64x128xf32> to vector<16x128xf32>
      %210 = arith.addf %208, %209 : vector<16x128xf32>
      %211 = vector.extract_strided_slice %205 {offsets = [48, 0], sizes = [16, 128], strides = [1, 1]} : vector<64x128xf32> to vector<16x128xf32>
      %212 = arith.addf %210, %211 : vector<16x128xf32>
      %213 = arith.addf %212, %202 : vector<16x128xf32>
      %c784 = arith.constant 784 : index
      %c0_79 = arith.constant 0 : index
      %214 = vector.load %arg7[%c784, %c0_79] : memref<944x32xf32, #tpu.memory_space<vmem>>, vector<128x32xf32>
      %cst_80 = arith.constant dense<0.000000e+00> : vector<16x32xf32>
      %215 = tpu.matmul %213, %214, %cst_80 {dimension_numbers = #tpu.dot_dimension_numbers<[1], [0], [0], [1], [0, 0, 1, 1], [], []>} : vector<16x128xf32>, vector<128x32xf32>, vector<16x32xf32> -> vector<16x32xf32>
      %c144_81 = arith.constant 144 : index
      %c0_82 = arith.constant 0 : index
      %216 = vector.load %arg9[%c144_81, %c0_82] : memref<168x32xf32, #tpu.memory_space<vmem>>, vector<16x32xf32>
      %217 = arith.addf %215, %216 : vector<16x32xf32>
      %c0_83 = arith.constant 0 : index
      %c0_84 = arith.constant 0 : index
      %218 = vector.load %arg3[%c0_83, %c0_84] : memref<8x16xf32, #tpu.memory_space<vmem>>, vector<8x16xf32>
      %cst_85 = arith.constant dense<0.000000e+00> : vector<8x32xf32>
      %219 = tpu.matmul %218, %217, %cst_85 {dimension_numbers = #tpu.dot_dimension_numbers<[1], [0], [0], [1], [0, 0, 1, 1], [], []>} : vector<8x16xf32>, vector<16x32xf32>, vector<8x32xf32> -> vector<8x32xf32>
      %c912 = arith.constant 912 : index
      %c0_86 = arith.constant 0 : index
      %220 = vector.load %arg7[%c912, %c0_86] : memref<944x32xf32, #tpu.memory_space<vmem>>, vector<32x32xf32>
      %cst_87 = arith.constant dense<0.000000e+00> : vector<8x32xf32>
      %221 = tpu.matmul %219, %220, %cst_87 {dimension_numbers = #tpu.dot_dimension_numbers<[1], [0], [0], [1], [0, 0, 1, 1], [], []>} : vector<8x32xf32>, vector<32x32xf32>, vector<8x32xf32> -> vector<8x32xf32>
      %c160_88 = arith.constant 160 : index
      %c0_89 = arith.constant 0 : index
      %222 = vector.load %arg9[%c160_88, %c0_89] : memref<168x32xf32, #tpu.memory_space<vmem>>, vector<8x32xf32>
      %223 = arith.addf %221, %222 : vector<8x32xf32>
      %cst_90 = arith.constant 0.000000e+00 : f32
      %224 = vector.broadcast %cst_90 : f32 to vector<8x32xf32>
      %225 = arith.maximumf %223, %224 : vector<8x32xf32>
      %c304 = arith.constant 304 : index
      %c0_91 = arith.constant 0 : index
      %226 = vector.load %arg8[%c304, %c0_91] : memref<336x128xf32, #tpu.memory_space<vmem>>, vector<32x128xf32>
      %cst_92 = arith.constant dense<0.000000e+00> : vector<8x128xf32>
      %227 = tpu.matmul %225, %226, %cst_92 {dimension_numbers = #tpu.dot_dimension_numbers<[1], [0], [0], [1], [0, 0, 1, 1], [], []>} : vector<8x32xf32>, vector<32x128xf32>, vector<8x128xf32> -> vector<8x128xf32>
      %c208_93 = arith.constant 208 : index
      %c0_94 = arith.constant 0 : index
      %228 = vector.load %arg10[%c208_93, %c0_94] : memref<216x128xf32, #tpu.memory_space<vmem>>, vector<8x128xf32>
      %229 = arith.addf %227, %228 : vector<8x128xf32>
      %c0_95 = arith.constant 0 : index
      %c0_96 = arith.constant 0 : index
      %230 = vector.load %arg14[%c0_95, %c0_96] : memref<8x128xf32, #tpu.memory_space<vmem>>, vector<8x128xf32>
      tpu.vector_store %arg14[%c0_95, %c0_96], %229 {strides = array<i32>} : memref<8x128xf32, #tpu.memory_space<vmem>>, vector<8x128xf32>,
    } else {
    }
    return
  }
  func.func @transform_0(%arg0: i32) -> (i32, i32) {
    %c0_i32 = arith.constant 0 : i32
    %c0_i32_0 = arith.constant 0 : i32
    %c0_i32_1 = arith.constant 0 : i32
    return %c0_i32, %c0_i32_0 : i32, i32
  }
  func.func @transform_1(%arg0: i32) -> (i32, i32) {
    %c0_i32 = arith.constant 0 : i32
    %c0_i32_0 = arith.constant 0 : i32
    %c0_i32_1 = arith.constant 0 : i32
    return %c0_i32, %c0_i32_0 : i32, i32
  }
  func.func @transform_2(%arg0: i32) -> (i32, i32) {
    %c0_i32 = arith.constant 0 : i32
    %c0_i32_0 = arith.constant 0 : i32
    %c0_i32_1 = arith.constant 0 : i32
    return %c0_i32, %c0_i32_0 : i32, i32
  }
  func.func @transform_3(%arg0: i32) -> (i32, i32) {
    %c0_i32 = arith.constant 0 : i32
    %c0_i32_0 = arith.constant 0 : i32
    %c0_i32_1 = arith.constant 0 : i32
    return %c0_i32, %c0_i32_0 : i32, i32
  }
  func.func @transform_4(%arg0: i32) -> (i32, i32) {
    %c0_i32 = arith.constant 0 : i32
    %c0_i32_0 = arith.constant 0 : i32
    %c0_i32_1 = arith.constant 0 : i32
    return %c0_i32, %c0_i32_0 : i32, i32
  }
  func.func @transform_5(%arg0: i32) -> (i32, i32) {
    %c0_i32 = arith.constant 0 : i32
    %c0_i32_0 = arith.constant 0 : i32
    %c0_i32_1 = arith.constant 0 : i32
    return %c0_i32, %c0_i32_0 : i32, i32
  }
  func.func @transform_6(%arg0: i32) -> (i32, i32) {
    %c0_i32 = arith.constant 0 : i32
    %c0_i32_0 = arith.constant 0 : i32
    %c0_i32_1 = arith.constant 0 : i32
    return %c0_i32, %c0_i32_0 : i32, i32
  }
  func.func @transform_7(%arg0: i32) -> (i32, i32) {
    %c0_i32 = arith.constant 0 : i32
    %c0_i32_0 = arith.constant 0 : i32
    %c0_i32_1 = arith.constant 0 : i32
    return %c0_i32, %c0_i32_0 : i32, i32
  }
  func.func @transform_8(%arg0: i32) -> (i32, i32) {
    %c0_i32 = arith.constant 0 : i32
    %c0_i32_0 = arith.constant 0 : i32
    %c0_i32_1 = arith.constant 0 : i32
    return %c0_i32, %c0_i32_0 : i32, i32
  }
  func.func @transform_9(%arg0: i32) -> (i32, i32) {
    %c0_i32 = arith.constant 0 : i32
    %c0_i32_0 = arith.constant 0 : i32
    %c0_i32_1 = arith.constant 0 : i32
    return %c0_i32, %c0_i32_0 : i32, i32
  }
  func.func @transform_10(%arg0: i32) -> (i32, i32) {
    %c0_i32 = arith.constant 0 : i32
    %c0_i32_0 = arith.constant 0 : i32
    %c0_i32_1 = arith.constant 0 : i32
    return %c0_i32, %c0_i32_0 : i32, i32
  }
  func.func @transform_11(%arg0: i32) -> (i32, i32) {
    %c0_i32 = arith.constant 0 : i32
    %c0_i32_0 = arith.constant 0 : i32
    %c0_i32_1 = arith.constant 0 : i32
    return %c0_i32, %c0_i32_0 : i32, i32
  }
  func.func @transform_12(%arg0: i32) -> (i32, i32) {
    %c0_i32 = arith.constant 0 : i32
    %c0_i32_0 = arith.constant 0 : i32
    %c0_i32_1 = arith.constant 0 : i32
    return %c0_i32, %c0_i32_0 : i32, i32
  }
  func.func @transform_13(%arg0: i32) -> (i32, i32) {
    %c0_i32 = arith.constant 0 : i32
    %c0_i32_0 = arith.constant 0 : i32
    return %arg0, %c0_i32 : i32, i32
  }
}

</mosaic_0001>

<llo_original>
// kernel: tile.9
$region0: #{tile.9}
  %s0 = inlined_call_operand.vmem [shape: f32[16,4,16], index: 0, kind: input, shape index: {}]
  %s1 = inlined_call_operand.vmem [shape: f32[16,64], index: 1, kind: output, shape index: {}]
  $region1: #{tile.9} parent=0
    #allocation0 [shape = 'u8[65536]{0}', space=vmem, size = 0x10000, scoped, tag = 'scoped mem for input reshape']
    %s3 = ssub.s32 16, 1
    %s4 = scalar_lea.vmem %s0, 60
    %v5 = vld [vmem:[%s4] sm:%s3]
    %s6 = scalar_lea.vmem [#allocation0], 120
    %7 = vst [vmem:[%s6] sm:%s3] %v5
    %s8 = scalar_lea.vmem %s0, 56
    %v9 = vld [vmem:[%s8] sm:%s3]
    %s10 = scalar_lea.vmem [#allocation0], 112
    %11 = vst [vmem:[%s10] sm:%s3] %v9
    %s12 = scalar_lea.vmem %s0, 52
    %v13 = vld [vmem:[%s12] sm:%s3]
    %s14 = scalar_lea.vmem [#allocation0], 104
    %15 = vst [vmem:[%s14] sm:%s3] %v13
    %s16 = scalar_lea.vmem %s0, 48
    %v17 = vld [vmem:[%s16] sm:%s3]
    %s18 = scalar_lea.vmem [#allocation0], 96
    %19 = vst [vmem:[%s18] sm:%s3] %v17
    %s20 = scalar_lea.vmem %s0, 44
    %v21 = vld [vmem:[%s20] sm:%s3]
    %s22 = scalar_lea.vmem [#allocation0], 88
    %23 = vst [vmem:[%s22] sm:%s3] %v21
    %s24 = scalar_lea.vmem %s0, 40
    %v25 = vld [vmem:[%s24] sm:%s3]
    %s26 = scalar_lea.vmem [#allocation0], 80
    %27 = vst [vmem:[%s26] sm:%s3] %v25
    %s28 = scalar_lea.vmem %s0, 36
    %v29 = vld [vmem:[%s28] sm:%s3]
    %s30 = scalar_lea.vmem [#allocation0], 72
    %31 = vst [vmem:[%s30] sm:%s3] %v29
    %s32 = scalar_lea.vmem %s0, 32
    %v33 = vld [vmem:[%s32] sm:%s3]
    %s34 = scalar_lea.vmem [#allocation0], 64
    %35 = vst [vmem:[%s34] sm:%s3] %v33
    %s36 = scalar_lea.vmem %s0, 28
    %v37 = vld [vmem:[%s36] sm:%s3]
    %s38 = scalar_lea.vmem [#allocation0], 56
    %39 = vst [vmem:[%s38] sm:%s3] %v37
    %s40 = scalar_lea.vmem %s0, 24
    %v41 = vld [vmem:[%s40] sm:%s3]
    %s42 = scalar_lea.vmem [#allocation0], 48
    %43 = vst [vmem:[%s42] sm:%s3] %v41
    %s44 = scalar_lea.vmem %s0, 20
    %v45 = vld [vmem:[%s44] sm:%s3]
    %s46 = scalar_lea.vmem [#allocation0], 40
    %47 = vst [vmem:[%s46] sm:%s3] %v45
    %s48 = scalar_lea.vmem %s0, 16
    %v49 = vld [vmem:[%s48] sm:%s3]
    %s50 = scalar_lea.vmem [#allocation0], 32
    %51 = vst [vmem:[%s50] sm:%s3] %v49
    %s52 = scalar_lea.vmem %s0, 12
    %v53 = vld [vmem:[%s52] sm:%s3]
    %s54 = scalar_lea.vmem [#allocation0], 24
    %55 = vst [vmem:[%s54] sm:%s3] %v53
    %s56 = scalar_lea.vmem %s0, 8
    %v57 = vld [vmem:[%s56] sm:%s3]
    %s58 = scalar_lea.vmem [#allocation0], 16
    %59 = vst [vmem:[%s58] sm:%s3] %v57
    %s60 = scalar_lea.vmem %s0, 4
    %v61 = vld [vmem:[%s60] sm:%s3]
    %s62 = scalar_lea.vmem [#allocation0], 8
    %63 = vst [vmem:[%s62] sm:%s3] %v61
    %v64 = vld [vmem:[%s0] sm:%s3]
    %65 = vst [vmem:[#allocation0] sm:%s3] %v64
    %v66 = vld [vmem:[#allocation0] ss:$8 sm:$0xf]
    %v67 = vld [vmem:[#allocation0] ss:$8 sm:$0xf0]
    %vm68 = vcmask 1047556
    %v69 = vsel %vm68, %v67, %v66
    %vm70 = vcmask 130048
    %71 = vst.msk [vmem:[%s1] sm:$0xff] %vm70, %v69
    %s72 = scalar_lea.vmem [#allocation0], 64
    %v73 = vld [vmem:[%s72] ss:$8 sm:$0xf]
    %s74 = scalar_lea.vmem [#allocation0], 64
    %v75 = vld [vmem:[%s74] ss:$8 sm:$0xf0]
    %vm76 = vcmask 1047556
    %v77 = vsel %vm76, %v75, %v73
    %vm78 = vcmask 130048
    %s79 = scalar_lea.vmem %s1, 8
    %80 = vst.msk [vmem:[%s79] sm:$0xff] %vm78, %v77
    %s81 = scalar_lea.vmem [#allocation0], 3
    %v82 = vld [vmem:[%s81] ss:$8 sm:$0xf]
    %s83 = scalar_lea.vmem [#allocation0], 3
    %v84 = vld [vmem:[%s83] ss:$8 sm:$0xf0]
    %vm85 = vcmask 1047556
    %v86 = vsel %vm85, %v84, %v82
    %87 = vrot.lane.b32.xlu0 %v86, 48
    %v88 = vpop.permute.xlu0 %87
    %vm89 = vcmask 523648
    %90 = vst.msk [vmem:[%s1] sm:$0xff] %vm89, %v88
    %s91 = scalar_lea.vmem [#allocation0], 67
    %v92 = vld [vmem:[%s91] ss:$8 sm:$0xf]
    %s93 = scalar_lea.vmem [#allocation0], 67
    %v94 = vld [vmem:[%s93] ss:$8 sm:$0xf0]
    %vm95 = vcmask 1047556
    %v96 = vsel %vm95, %v94, %v92
    %97 = vrot.lane.b32.xlu0 %v96, 48
    %v98 = vpop.permute.xlu0 %97
    %vm99 = vcmask 523648
    %s100 = scalar_lea.vmem %s1, 8
    %101 = vst.msk [vmem:[%s100] sm:$0xff] %vm99, %v98
    %s102 = scalar_lea.vmem [#allocation0], 2
    %v103 = vld [vmem:[%s102] ss:$8 sm:$0xf]
    %s104 = scalar_lea.vmem [#allocation0], 2
    %v105 = vld [vmem:[%s104] ss:$8 sm:$0xf0]
    %vm106 = vcmask 1047556
    %v107 = vsel %vm106, %v105, %v103
    %108 = vrot.lane.b32.xlu0 %v107, 32
    %v109 = vpop.permute.xlu0 %108
    %vm110 = vcmask 392448
    %111 = vst.msk [vmem:[%s1] sm:$0xff] %vm110, %v109
    %s112 = scalar_lea.vmem [#allocation0], 66
    %v113 = vld [vmem:[%s112] ss:$8 sm:$0xf]
    %s114 = scalar_lea.vmem [#allocation0], 66
    %v115 = vld [vmem:[%s114] ss:$8 sm:$0xf0]
    %vm116 = vcmask 1047556
    %v117 = vsel %vm116, %v115, %v113
    %118 = vrot.lane.b32.xlu0 %v117, 32
    %v119 = vpop.permute.xlu0 %118
    %vm120 = vcmask 392448
    %s121 = scalar_lea.vmem %s1, 8
    %122 = vst.msk [vmem:[%s121] sm:$0xff] %vm120, %v119
    %s123 = scalar_lea.vmem [#allocation0], 1
    %v124 = vld [vmem:[%s123] ss:$8 sm:$0xf]
    %s125 = scalar_lea.vmem [#allocation0], 1
    %v126 = vld [vmem:[%s125] ss:$8 sm:$0xf0]
    %vm127 = vcmask 1047556
    %v128 = vsel %vm127, %v126, %v124
    %129 = vrot.lane.b32.xlu0 %v128, 16
    %v130 = vpop.permute.xlu0 %129
    %vm131 = vcmask 261248
    %132 = vst.msk [vmem:[%s1] sm:$0xff] %vm131, %v130
    %s133 = scalar_lea.vmem [#allocation0], 65
    %v134 = vld [vmem:[%s133] ss:$8 sm:$0xf]
    %s135 = scalar_lea.vmem [#allocation0], 65
    %v136 = vld [vmem:[%s135] ss:$8 sm:$0xf0]
    %vm137 = vcmask 1047556
    %v138 = vsel %vm137, %v136, %v134
    %139 = vrot.lane.b32.xlu0 %v138, 16
    %v140 = vpop.permute.xlu0 %139
    %vm141 = vcmask 261248
    %s142 = scalar_lea.vmem %s1, 8
    %143 = vst.msk [vmem:[%s142] sm:$0xff] %vm141, %v140

// kernel: model_forward.1
$region0: #{model_forward.1}
  #allocation0 [shape = 'u32[]', space=smem, size = 0x4, offset = 0x4, fixed_abs, tag = 'smem constant byte address 0x4 - core index']
  #allocation1 [shape = 'u32[72,128]{1,0:T(1,128)}', space=vmem, size = 0x9000, scoped, tag = 'internal scratch']
  %s0 = inlined_call_operand.vmem [shape: f32[16,16], index: 0, kind: input, shape index: {}]
  %s1 = inlined_call_operand.vmem [shape: f32[16,16], index: 1, kind: input, shape index: {}]
  %s2 = inlined_call_operand.vmem [shape: f32[8,16], index: 2, kind: input, shape index: {}]
  %s3 = inlined_call_operand.vmem [shape: f32[16,64], index: 3, kind: input, shape index: {}]
  %s4 = inlined_call_operand.hbm [shape: f32[64,128], index: 4, kind: input, shape index: {}]
  %s5 = inlined_call_operand.hbm [shape: f32[64,2048], index: 5, kind: input, shape index: {}]
  %s6 = inlined_call_operand.vmem [shape: f32[944,32], index: 6, kind: input, shape index: {}]
  %s7 = inlined_call_operand.hbm [shape: f32[336,128], index: 7, kind: input, shape index: {}]
  %s8 = inlined_call_operand.vmem [shape: f32[168,32], index: 8, kind: input, shape index: {}]
  %s9 = inlined_call_operand.hbm [shape: f32[216,128], index: 9, kind: input, shape index: {}]
  %s10 = inlined_call_operand.vmem [shape: f32[384,64], index: 10, kind: input, shape index: {}]
  %s11 = inlined_call_operand.hbm [shape: f32[24,128], index: 11, kind: input, shape index: {}]
  %s12 = inlined_call_operand.hbm [shape: f32[24,128], index: 12, kind: input, shape index: {}]
  %s13 = inlined_call_operand.vmem [shape: f32[24,128], index: 13, kind: output, shape index: {}]
  %s14 = sld [smem:[#allocation0]]
  $region121: #{model_forward.1} parent=0
    _
  %s16 = ssub.s32 1, %s14
  %s17 = scalar_select 0, %s16, %s14
  $region1: #{model_forward.1} parent=0
    #allocation2 [shape = 'u8[32768]{0}', space=vmem, size = 0x8000, scoped, tag = 'input window, operand 4, single buffered']
    #allocation3 [shape = 's32[2]{0}', space=sflag, size = 0x8, scoped, tag = 'scoped memory for model_forward.1']
    #allocation4 [shape = 'u8[524288]{0}', space=vmem, size = 0x80000, scoped, tag = 'input window, operand 5, single buffered']
    #allocation5 [shape = 's32[1]{0}', space=sflag, size = 0x4, scoped, tag = 'scoped memory for model_forward.1']
    #allocation6 [shape = 'u8[172032]{0}', space=vmem, size = 0x2a000, scoped, tag = 'input window, operand 7, single buffered']
    #allocation7 [shape = 'u8[110592]{0}', space=vmem, size = 0x1b000, scoped, tag = 'input window, operand 9, single buffered']
    #allocation8 [shape = 's32[1]{0}', space=sflag, size = 0x4, scoped, tag = 'scoped memory for model_forward.1']
    #allocation9 [shape = 'u8[12288]{0}', space=vmem, size = 0x3000, scoped, tag = 'input window, operand 11, single buffered']
    #allocation10 [shape = 'u8[12288]{0}', space=vmem, size = 0x3000, scoped, tag = 'input window, operand 12, single buffered']
    #allocation11 [shape = 's32[1]{0}', space=sflag, size = 0x4, scoped, tag = 'scoped memory for model_forward.1']
    %18 = vsyncpa [#allocation3], 0
    %19 = vsyncpa [#allocation5], 0
    %20 = vsyncpa [#allocation8], 0
    %21 = vsyncpa [#allocation11], 0
    loop: start=0, step=1, limit=5
    $region2: #{model_forward.1} parent=1 // loop_pre_header
      _
    $region3: #{model_forward.1} parent=1 // loop_header
      %s23 = sphi 0, %s27
      %p24 = scmp.ge.s32.totalorder %s23, 5
      %s31 = sphi 0, %s31
      %s33 = sphi 0, %s31
      %s34 = sphi 0, %s33
      %s48 = sphi 0, %s34
      %s52 = sphi 0, %s52
      %s54 = sphi 0, %s52
      %s55 = sphi 0, %s54
      %s69 = sphi 0, %s55
      %s73 = sphi 0, %s73
      %s75 = sphi 0, %s73
      %s76 = sphi 0, %s75
      %s90 = sphi 0, %s76
      %s94 = sphi 0, %s94
      %s96 = sphi 0, %s94
      %s97 = sphi 0, %s96
      %s111 = sphi 0, %s97
      %s115 = sphi 0, %s115
      %s117 = sphi 0, %s115
      %s118 = sphi 0, %s117
      %s132 = sphi 0, %s118
      %s136 = sphi 0, %s136
      %s138 = sphi 0, %s136
      %s139 = sphi 0, %s138
      %s153 = sphi 0, %s139
      %s157 = sphi 0, %s157
      %s159 = sphi 0, %s157
      %s160 = sphi 0, %s159
      %s174 = sphi 0, %s160
      %s178 = sphi 0, %s178
      %s180 = sphi 0, %s178
      %s181 = sphi 0, %s180
      %s195 = sphi 0, %s181
      %s199 = sphi 0, %s199
      %s201 = sphi 0, %s199
      %s202 = sphi 0, %s201
      %s216 = sphi 0, %s202
      %s220 = sphi 0, %s220
      %s222 = sphi 0, %s220
      %s223 = sphi 0, %s222
      %s237 = sphi 0, %s223
      %s241 = sphi 0, %s241
      %s243 = sphi 0, %s241
      %s244 = sphi 0, %s243
      %s258 = sphi 0, %s244
      %s262 = sphi 0, %s262
      %s264 = sphi 0, %s262
      %s265 = sphi 0, %s264
      %s279 = sphi 0, %s265
      %s283 = sphi 0, %s283
      %s285 = sphi 0, %s283
      %s286 = sphi 0, %s285
      %s300 = sphi 0, %s286
      %s306 = sphi 0, %s308
      %s309 = sphi 0, %s306
      %s310 = sphi 0, %s309
      %s326 = sphi 0, %s310
    $region4: #{model_forward.1} parent=1 // loop_header_branch
      %26 = sbr.rel (%p24) target = $region8
    $region5: #{model_forward.1} parent=1 // loop_body
      %s28 = ssub.s32 %s23, 1
      %s29 = ssub.s32 %s23, 2
      %s30 = sadd.s32 %s23, 1
      %s32 = sadd.s32 %s31, 1
      %p35 = scmp.eq.s32.totalorder %s23, 2
      %p36 = scmp.ne.s32.totalorder %s31, %s33
      %p37 = scmp.eq.s32.totalorder %s23, 0
      %p38 = por %p36, %p37
      %p39 = scmp.ne.s32.totalorder %s31, %s33
      %p40 = scmp.eq.s32.totalorder %s28, 2
      %p41 = por %p39, %p40
      %p42 = scmp.ne.s32.totalorder %s33, %s34
      %p43 = scmp.eq.s32.totalorder %s28, 0
      %p44 = por %p42, %p43
      %p45 = scmp.ne.s32.totalorder %s33, %s34
      %p46 = scmp.eq.s32.totalorder %s29, 2
      %p47 = por %p45, %p46
      %p49 = scmp.ne.s32.totalorder %s34, %s48
      %p50 = scmp.eq.s32.totalorder %s29, 0
      %p51 = por %p49, %p50
      %s53 = sadd.s32 %s52, 1
      %p56 = scmp.eq.s32.totalorder %s23, 2
      %p57 = scmp.ne.s32.totalorder %s52, %s54
      %p58 = scmp.eq.s32.totalorder %s23, 0
      %p59 = por %p57, %p58
      %p60 = scmp.ne.s32.totalorder %s52, %s54
      %p61 = scmp.eq.s32.totalorder %s28, 2
      %p62 = por %p60, %p61
      %p63 = scmp.ne.s32.totalorder %s54, %s55
      %p64 = scmp.eq.s32.totalorder %s28, 0
      %p65 = por %p63, %p64
      %p66 = scmp.ne.s32.totalorder %s54, %s55
      %p67 = scmp.eq.s32.totalorder %s29, 2
      %p68 = por %p66, %p67
      %p70 = scmp.ne.s32.totalorder %s55, %s69
      %p71 = scmp.eq.s32.totalorder %s29, 0
      %p72 = por %p70, %p71
      %s74 = sadd.s32 %s73, 1
      %p77 = scmp.eq.s32.totalorder %s23, 2
      %p78 = scmp.ne.s32.totalorder %s73, %s75
      %p79 = scmp.eq.s32.totalorder %s23, 0
      %p80 = por %p78, %p79
      %p81 = scmp.ne.s32.totalorder %s73, %s75
      %p82 = scmp.eq.s32.totalorder %s28, 2
      %p83 = por %p81, %p82
      %p84 = scmp.ne.s32.totalorder %s75, %s76
      %p85 = scmp.eq.s32.totalorder %s28, 0
      %p86 = por %p84, %p85
      %p87 = scmp.ne.s32.totalorder %s75, %s76
      %p88 = scmp.eq.s32.totalorder %s29, 2
      %p89 = por %p87, %p88
      %p91 = scmp.ne.s32.totalorder %s76, %s90
      %p92 = scmp.eq.s32.totalorder %s29, 0
      %p93 = por %p91, %p92
      %s95 = sadd.s32 %s94, 1
      %p98 = scmp.eq.s32.totalorder %s23, 2
      %p99 = scmp.ne.s32.totalorder %s94, %s96
      %p100 = scmp.eq.s32.totalorder %s23, 0
      %p101 = por %p99, %p100
      %p102 = scmp.ne.s32.totalorder %s94, %s96
      %p103 = scmp.eq.s32.totalorder %s28, 2
      %p104 = por %p102, %p103
      %p105 = scmp.ne.s32.totalorder %s96, %s97
      %p106 = scmp.eq.s32.totalorder %s28, 0
      %p107 = por %p105, %p106
      %p108 = scmp.ne.s32.totalorder %s96, %s97
      %p109 = scmp.eq.s32.totalorder %s29, 2
      %p110 = por %p108, %p109
      %p112 = scmp.ne.s32.totalorder %s97, %s111
      %p113 = scmp.eq.s32.totalorder %s29, 0
      %p114 = por %p112, %p113
      %s116 = sadd.s32 %s115, 1
      %p119 = scmp.eq.s32.totalorder %s23, 2
      %p120 = scmp.ne.s32.totalorder %s115, %s117
      %p121 = scmp.eq.s32.totalorder %s23, 0
      %p122 = por %p120, %p121
      %p123 = scmp.ne.s32.totalorder %s115, %s117
      %p124 = scmp.eq.s32.totalorder %s28, 2
      %p125 = por %p123, %p124
      %p126 = scmp.ne.s32.totalorder %s117, %s118
      %p127 = scmp.eq.s32.totalorder %s28, 0
      %p128 = por %p126, %p127
      %p129 = scmp.ne.s32.totalorder %s117, %s118
      %p130 = scmp.eq.s32.totalorder %s29, 2
      %p131 = por %p129, %p130
      %p133 = scmp.ne.s32.totalorder %s118, %s132
      %p134 = scmp.eq.s32.totalorder %s29, 0
      %p135 = por %p133, %p134
      %s137 = sadd.s32 %s136, 1
      %p140 = scmp.eq.s32.totalorder %s23, 2
      %p141 = scmp.ne.s32.totalorder %s136, %s138
      %p142 = scmp.eq.s32.totalorder %s23, 0
      %p143 = por %p141, %p142
      %p144 = scmp.ne.s32.totalorder %s136, %s138
      %p145 = scmp.eq.s32.totalorder %s28, 2
      %p146 = por %p144, %p145
      %p147 = scmp.ne.s32.totalorder %s138, %s139
      %p148 = scmp.eq.s32.totalorder %s28, 0
      %p149 = por %p147, %p148
      %p150 = scmp.ne.s32.totalorder %s138, %s139
      %p151 = scmp.eq.s32.totalorder %s29, 2
      %p152 = por %p150, %p151
      %p154 = scmp.ne.s32.totalorder %s139, %s153
      %p155 = scmp.eq.s32.totalorder %s29, 0
      %p156 = por %p154, %p155
      %s158 = sadd.s32 %s157, 1
      %p161 = scmp.eq.s32.totalorder %s23, 2
      %p162 = scmp.ne.s32.totalorder %s157, %s159
      %p163 = scmp.eq.s32.totalorder %s23, 0
      %p164 = por %p162, %p163
      %p165 = scmp.ne.s32.totalorder %s157, %s159
      %p166 = scmp.eq.s32.totalorder %s28, 2
      %p167 = por %p165, %p166
      %p168 = scmp.ne.s32.totalorder %s159, %s160
      %p169 = scmp.eq.s32.totalorder %s28, 0
      %p170 = por %p168, %p169
      %p171 = scmp.ne.s32.totalorder %s159, %s160
      %p172 = scmp.eq.s32.totalorder %s29, 2
      %p173 = por %p171, %p172
      %p175 = scmp.ne.s32.totalorder %s160, %s174
      %p176 = scmp.eq.s32.totalorder %s29, 0
      %p177 = por %p175, %p176
      %s179 = sadd.s32 %s178, 1
      %p182 = scmp.eq.s32.totalorder %s23, 2
      %p183 = scmp.ne.s32.totalorder %s178, %s180
      %p184 = scmp.eq.s32.totalorder %s23, 0
      %p185 = por %p183, %p184
      %p186 = scmp.ne.s32.totalorder %s178, %s180
      %p187 = scmp.eq.s32.totalorder %s28, 2
      %p188 = por %p186, %p187
      %p189 = scmp.ne.s32.totalorder %s180, %s181
      %p190 = scmp.eq.s32.totalorder %s28, 0
      %p191 = por %p189, %p190
      %p192 = scmp.ne.s32.totalorder %s180, %s181
      %p193 = scmp.eq.s32.totalorder %s29, 2
      %p194 = por %p192, %p193
      %p196 = scmp.ne.s32.totalorder %s181, %s195
      %p197 = scmp.eq.s32.totalorder %s29, 0
      %p198 = por %p196, %p197
      %s200 = sadd.s32 %s199, 1
      %p203 = scmp.eq.s32.totalorder %s23, 2
      %p204 = scmp.ne.s32.totalorder %s199, %s201
      %p205 = scmp.eq.s32.totalorder %s23, 0
      %p206 = por %p204, %p205
      %p207 = scmp.ne.s32.totalorder %s199, %s201
      %p208 = scmp.eq.s32.totalorder %s28, 2
      %p209 = por %p207, %p208
      %p210 = scmp.ne.s32.totalorder %s201, %s202
      %p211 = scmp.eq.s32.totalorder %s28, 0
      %p212 = por %p210, %p211
      %p213 = scmp.ne.s32.totalorder %s201, %s202
      %p214 = scmp.eq.s32.totalorder %s29, 2
      %p215 = por %p213, %p214
      %p217 = scmp.ne.s32.totalorder %s202, %s216
      %p218 = scmp.eq.s32.totalorder %s29, 0
      %p219 = por %p217, %p218
      %s221 = sadd.s32 %s220, 1
      %p224 = scmp.eq.s32.totalorder %s23, 2
      %p225 = scmp.ne.s32.totalorder %s220, %s222
      %p226 = scmp.eq.s32.totalorder %s23, 0
      %p227 = por %p225, %p226
      %p228 = scmp.ne.s32.totalorder %s220, %s222
      %p229 = scmp.eq.s32.totalorder %s28, 2
      %p230 = por %p228, %p229
      %p231 = scmp.ne.s32.totalorder %s222, %s223
      %p232 = scmp.eq.s32.totalorder %s28, 0
      %p233 = por %p231, %p232
      %p234 = scmp.ne.s32.totalorder %s222, %s223
      %p235 = scmp.eq.s32.totalorder %s29, 2
      %p236 = por %p234, %p235
      %p238 = scmp.ne.s32.totalorder %s223, %s237
      %p239 = scmp.eq.s32.totalorder %s29, 0
      %p240 = por %p238, %p239
      %s242 = sadd.s32 %s241, 1
      %p245 = scmp.eq.s32.totalorder %s23, 2
      %p246 = scmp.ne.s32.totalorder %s241, %s243
      %p247 = scmp.eq.s32.totalorder %s23, 0
      %p248 = por %p246, %p247
      %p249 = scmp.ne.s32.totalorder %s241, %s243
      %p250 = scmp.eq.s32.totalorder %s28, 2
      %p251 = por %p249, %p250
      %p252 = scmp.ne.s32.totalorder %s243, %s244
      %p253 = scmp.eq.s32.totalorder %s28, 0
      %p254 = por %p252, %p253
      %p255 = scmp.ne.s32.totalorder %s243, %s244
      %p256 = scmp.eq.s32.totalorder %s29, 2
      %p257 = por %p255, %p256
      %p259 = scmp.ne.s32.totalorder %s244, %s258
      %p260 = scmp.eq.s32.totalorder %s29, 0
      %p261 = por %p259, %p260
      %s263 = sadd.s32 %s262, 1
      %p266 = scmp.eq.s32.totalorder %s23, 2
      %p267 = scmp.ne.s32.totalorder %s262, %s264
      %p268 = scmp.eq.s32.totalorder %s23, 0
      %p269 = por %p267, %p268
      %p270 = scmp.ne.s32.totalorder %s262, %s264
      %p271 = scmp.eq.s32.totalorder %s28, 2
      %p272 = por %p270, %p271
      %p273 = scmp.ne.s32.totalorder %s264, %s265
      %p274 = scmp.eq.s32.totalorder %s28, 0
      %p275 = por %p273, %p274
      %p276 = scmp.ne.s32.totalorder %s264, %s265
      %p277 = scmp.eq.s32.totalorder %s29, 2
      %p278 = por %p276, %p277
      %p280 = scmp.ne.s32.totalorder %s265, %s279
      %p281 = scmp.eq.s32.totalorder %s29, 0
      %p282 = por %p280, %p281
      %s284 = sadd.s32 %s283, 1
      %p287 = scmp.eq.s32.totalorder %s23, 2
      %p288 = scmp.ne.s32.totalorder %s283, %s285
      %p289 = scmp.eq.s32.totalorder %s23, 0
      %p290 = por %p288, %p289
      %p291 = scmp.ne.s32.totalorder %s283, %s285
      %p292 = scmp.eq.s32.totalorder %s28, 2
      %p293 = por %p291, %p292
      %p294 = scmp.ne.s32.totalorder %s285, %s286
      %p295 = scmp.eq.s32.totalorder %s28, 0
      %p296 = por %p294, %p295
      %p297 = scmp.ne.s32.totalorder %s285, %s286
      %p298 = scmp.eq.s32.totalorder %s29, 2
      %p299 = por %p297, %p298
      %p301 = scmp.ne.s32.totalorder %s286, %s300
      %p302 = scmp.eq.s32.totalorder %s29, 0
      %p303 = por %p301, %p302
      %s304 = ssub.s32 %s23, %s30
      %p305 = scmp.eq.s32.totalorder %s304, 0
      %s307 = sadd.s32 %s306, 1
      %s308 = scalar_select %p305, %s306, %s307
      %p311 = pneg %p305
      %p312 = scmp.eq.s32.totalorder %s23, 2
      %p313 = por %p311, %p312
      %p314 = scmp.ne.s32.totalorder %s306, %s309
      %p315 = scmp.eq.s32.totalorder %s23, 0
      %p316 = por %p314, %p315
      %p317 = scmp.ne.s32.totalorder %s306, %s309
      %p318 = scmp.eq.s32.totalorder %s28, 2
      %p319 = por %p317, %p318
      %p320 = scmp.ne.s32.totalorder %s309, %s310
      %p321 = scmp.eq.s32.totalorder %s28, 0
      %p322 = por %p320, %p321
      %p323 = scmp.ne.s32.totalorder %s309, %s310
      %p324 = scmp.eq.s32.totalorder %s29, 2
      %p325 = por %p323, %p324
      %p327 = scmp.ne.s32.totalorder %s310, %s326
      %p328 = scmp.eq.s32.totalorder %s29, 0
      %p329 = por %p327, %p328
      %p330 = scmp.le.s32.totalorder 1, %s23
      %p331 = scmp.lt.s32.totalorder %s23, 4
      %p332 = pnand %p330, %p331
      %p333 = pneg %p332
      // Predicated region
      $region9: #{model_forward.1} parent=5 // pred_check
        _
      $region10: #{model_forward.1} parent=5 // pred_check_branch
        %335 = sbr.rel (%p332) target = $region12
      $region11: #{model_forward.1} parent=5 // pred_region
        %s336 = ssub.s32 %s23, 1
        // Predicated region
        $region13: #{model_forward.1} parent=11 // pred_check
          %p337 = pneg %p44
        $region14: #{model_forward.1} parent=11 // pred_check_branch
          %339 = sbr.rel (%p337) target = $region16
        $region15: #{model_forward.1} parent=11 // pred_region
          _
        $region16: #{model_forward.1} parent=11 // pred_fallthru
          _
        // Predicated region
        $region17: #{model_forward.1} parent=11 // pred_check
          %p340 = pneg %p65
        $region18: #{model_forward.1} parent=11 // pred_check_branch
          %342 = sbr.rel (%p340) target = $region20
        $region19: #{model_forward.1} parent=11 // pred_region
          _
        $region20: #{model_forward.1} parent=11 // pred_fallthru
          _
        // Predicated region
        $region21: #{model_forward.1} parent=11 // pred_check
          %p343 = pneg %p86
        $region22: #{model_forward.1} parent=11 // pred_check_branch
          %345 = sbr.rel (%p343) target = $region24
        $region23: #{model_forward.1} parent=11 // pred_region
          _
        $region24: #{model_forward.1} parent=11 // pred_fallthru
          _
        // Predicated region
        $region25: #{model_forward.1} parent=11 // pred_check
          %p346 = pneg %p107
        $region26: #{model_forward.1} parent=11 // pred_check_branch
          %348 = sbr.rel (%p346) target = $region28
        $region27: #{model_forward.1} parent=11 // pred_region
          _
        $region28: #{model_forward.1} parent=11 // pred_fallthru
          _
        // Predicated region
        $region29: #{model_forward.1} parent=11 // pred_check
          %p349 = pneg %p128
        $region30: #{model_forward.1} parent=11 // pred_check_branch
          %351 = sbr.rel (%p349) target = $region32
        $region31: #{model_forward.1} parent=11 // pred_region
          %353 = vsyncadd [#allocation3], 0
          %s354 = sshll.u32 %s4, 4
          %s355 = int_to_ptr.hbm [resolvable:$true] %s354
          %s356 = sshll.u32 [#allocation2], 4
          %s357 = int_to_ptr.vmem [resolvable:$true] %s356
          %362 = dma.hbm_to_vmem [thread:$0]  %s355, 1024, %s357, [#allocation3], 128, 128, 8
        $region32: #{model_forward.1} parent=11 // pred_fallthru
          _
        // Predicated region
        $region33: #{model_forward.1} parent=11 // pred_check
          %p363 = pneg %p149
        $region34: #{model_forward.1} parent=11 // pred_check_branch
          %365 = sbr.rel (%p363) target = $region36
        $region35: #{model_forward.1} parent=11 // pred_region
          %367 = vsyncadd [#allocation5], 0
          %s368 = sshll.u32 %s5, 4
          %s369 = int_to_ptr.hbm [resolvable:$true] %s368
          %s370 = sshll.u32 [#allocation4], 4
          %s371 = int_to_ptr.vmem [resolvable:$true] %s370
          %376 = dma.hbm_to_vmem [thread:$0]  %s369, 16384, %s371, [#allocation5], 2048, 2048, 128
        $region36: #{model_forward.1} parent=11 // pred_fallthru
          _
        // Predicated region
        $region37: #{model_forward.1} parent=11 // pred_check
          %p377 = pneg %p170
        $region38: #{model_forward.1} parent=11 // pred_check_branch
          %379 = sbr.rel (%p377) target = $region40
        $region39: #{model_forward.1} parent=11 // pred_region
          _
        $region40: #{model_forward.1} parent=11 // pred_fallthru
          _
        // Predicated region
        $region41: #{model_forward.1} parent=11 // pred_check
          %p380 = pneg %p191
        $region42: #{model_forward.1} parent=11 // pred_check_branch
          %382 = sbr.rel (%p380) target = $region44
        $region43: #{model_forward.1} parent=11 // pred_region
          %384 = vsyncadd [#allocation5], 0
          %s385 = sshll.u32 %s7, 4
          %s386 = int_to_ptr.hbm [resolvable:$true] %s385
          %s387 = sshll.u32 [#allocation6], 4
          %s388 = int_to_ptr.vmem [resolvable:$true] %s387
          %393 = dma.hbm_to_vmem [thread:$0]  %s386, 5376, %s388, [#allocation5], 128, 128, 8
        $region44: #{model_forward.1} parent=11 // pred_fallthru
          _
        // Predicated region
        $region45: #{model_forward.1} parent=11 // pred_check
          %p394 = pneg %p212
        $region46: #{model_forward.1} parent=11 // pred_check_branch
          %396 = sbr.rel (%p394) target = $region48
        $region47: #{model_forward.1} parent=11 // pred_region
          _
        $region48: #{model_forward.1} parent=11 // pred_fallthru
          _
        // Predicated region
        $region49: #{model_forward.1} parent=11 // pred_check
          %p397 = pneg %p233
        $region50: #{model_forward.1} parent=11 // pred_check_branch
          %399 = sbr.rel (%p397) target = $region52
        $region51: #{model_forward.1} parent=11 // pred_region
          %401 = vsyncadd [#allocation8], 0
          %s402 = sshll.u32 %s9, 4
          %s403 = int_to_ptr.hbm [resolvable:$true] %s402
          %s404 = sshll.u32 [#allocation7], 4
          %s405 = int_to_ptr.vmem [resolvable:$true] %s404
          %410 = dma.hbm_to_vmem [thread:$0]  %s403, 3456, %s405, [#allocation8], 128, 128, 8
        $region52: #{model_forward.1} parent=11 // pred_fallthru
          _
        // Predicated region
        $region53: #{model_forward.1} parent=11 // pred_check
          %p411 = pneg %p254
        $region54: #{model_forward.1} parent=11 // pred_check_branch
          %413 = sbr.rel (%p411) target = $region56
        $region55: #{model_forward.1} parent=11 // pred_region
          _
        $region56: #{model_forward.1} parent=11 // pred_fallthru
          _
        // Predicated region
        $region57: #{model_forward.1} parent=11 // pred_check
          %p414 = pneg %p275
        $region58: #{model_forward.1} parent=11 // pred_check_branch
          %416 = sbr.rel (%p414) target = $region60
        $region59: #{model_forward.1} parent=11 // pred_region
          %418 = vsyncadd [#allocation8], 0
          %s419 = sshll.u32 %s11, 4
          %s420 = int_to_ptr.hbm [resolvable:$true] %s419
          %s421 = sshll.u32 [#allocation9], 4
          %s422 = int_to_ptr.vmem [resolvable:$true] %s421
          %427 = dma.hbm_to_vmem [thread:$0]  %s420, 384, %s422, [#allocation8], 128, 128, 8
        $region60: #{model_forward.1} parent=11 // pred_fallthru
          _
        // Predicated region
        $region61: #{model_forward.1} parent=11 // pred_check
          %p428 = pneg %p296
        $region62: #{model_forward.1} parent=11 // pred_check_branch
          %430 = sbr.rel (%p428) target = $region64
        $region63: #{model_forward.1} parent=11 // pred_region
          %432 = vsyncadd [#allocation11], 0
          %s433 = sshll.u32 %s12, 4
          %s434 = int_to_ptr.hbm [resolvable:$true] %s433
          %s435 = sshll.u32 [#allocation10], 4
          %s436 = int_to_ptr.vmem [resolvable:$true] %s435
          %441 = dma.hbm_to_vmem [thread:$0]  %s434, 384, %s436, [#allocation11], 128, 128, 8
        $region64: #{model_forward.1} parent=11 // pred_fallthru
          _
      $region12: #{model_forward.1} parent=5 // pred_fallthru
        _
      %p442 = scmp.lt.s32.totalorder %s23, 3
      // Predicated region
      $region65: #{model_forward.1} parent=5 // pred_check
        %p443 = pneg %p442
      $region66: #{model_forward.1} parent=5 // pred_check_branch
        %445 = sbr.rel (%p443) target = $region68
      $region67: #{model_forward.1} parent=5 // pred_region
        _
      $region68: #{model_forward.1} parent=5 // pred_fallthru
        _
      %p446 = scmp.le.s32.totalorder 1, %s23
      %p447 = scmp.lt.s32.totalorder %s23, 4
      %p448 = pnand %p446, %p447
      %p449 = pneg %p448
      // Predicated region
      $region69: #{model_forward.1} parent=5 // pred_check
        _
      $region70: #{model_forward.1} parent=5 // pred_check_branch
        %451 = sbr.rel (%p448) target = $region72
      $region71: #{model_forward.1} parent=5 // pred_region
        %s452 = ssub.s32 %s23, 1
        // Predicated region
        $region73: #{model_forward.1} parent=71 // pred_check
          %p453 = pneg %p128
        $region74: #{model_forward.1} parent=71 // pred_check_branch
          %455 = sbr.rel (%p453) target = $region76
        $region75: #{model_forward.1} parent=71 // pred_region
          %457 = dma.done [#allocation3], 1024
        $region76: #{model_forward.1} parent=71 // pred_fallthru
          _
        // Predicated region
        $region77: #{model_forward.1} parent=71 // pred_check
          %p458 = pneg %p149
        $region78: #{model_forward.1} parent=71 // pred_check_branch
          %460 = sbr.rel (%p458) target = $region80
        $region79: #{model_forward.1} parent=71 // pred_region
          %462 = dma.done [#allocation5], 16384
        $region80: #{model_forward.1} parent=71 // pred_fallthru
          _
        // Predicated region
        $region81: #{model_forward.1} parent=71 // pred_check
          %p463 = pneg %p191
        $region82: #{model_forward.1} parent=71 // pred_check_branch
          %465 = sbr.rel (%p463) target = $region84
        $region83: #{model_forward.1} parent=71 // pred_region
          %467 = dma.done [#allocation5], 5376
        $region84: #{model_forward.1} parent=71 // pred_fallthru
          _
        // Predicated region
        $region85: #{model_forward.1} parent=71 // pred_check
          %p468 = pneg %p233
        $region86: #{model_forward.1} parent=71 // pred_check_branch
          %470 = sbr.rel (%p468) target = $region88
        $region87: #{model_forward.1} parent=71 // pred_region
          %472 = dma.done [#allocation8], 3456
        $region88: #{model_forward.1} parent=71 // pred_fallthru
          _
        // Predicated region
        $region89: #{model_forward.1} parent=71 // pred_check
          %p473 = pneg %p275
        $region90: #{model_forward.1} parent=71 // pred_check_branch
          %475 = sbr.rel (%p473) target = $region92
        $region91: #{model_forward.1} parent=71 // pred_region
          %477 = dma.done [#allocation8], 384
        $region92: #{model_forward.1} parent=71 // pred_fallthru
          _
        // Predicated region
        $region93: #{model_forward.1} parent=71 // pred_check
          %p478 = pneg %p296
        $region94: #{model_forward.1} parent=71 // pred_check_branch
          %480 = sbr.rel (%p478) target = $region96
        $region95: #{model_forward.1} parent=71 // pred_region
          %482 = dma.done [#allocation11], 384
        $region96: #{model_forward.1} parent=71 // pred_fallthru
          _
        %p483 = pneg %p44
        %p484 = pneg %p41
        %p485 = pneg %p65
        %p486 = pneg %p62
        %p487 = pneg %p86
        %p488 = pneg %p83
        %p489 = pneg %p107
        %p490 = pneg %p104
        %p491 = pneg %p128
        %p492 = pneg %p125
        %p493 = pneg %p149
        %p494 = pneg %p146
        %p495 = pneg %p170
        %p496 = pneg %p167
        %p497 = pneg %p191
        %p498 = pneg %p188
        %p499 = pneg %p212
        %p500 = pneg %p209
        %p501 = pneg %p233
        %p502 = pneg %p230
        %p503 = pneg %p254
        %p504 = pneg %p251
        %p505 = pneg %p275
        %p506 = pneg %p272
        %p507 = pneg %p296
        %p508 = pneg %p293
        %p509 = pneg %p322
        %p510 = pneg %p319
        %p511 = scmp.lt.s32.totalorder %s28, 2
        %s512 = scalar_select %p511, %s28, 2
        %s513 = smul.addr %s512, 8
        %s514 = scalar_lea.vmem %s13, %s513
        %p515 = scmp.lt.s32.totalorder %s28, 2
        %s516 = scalar_select %p515, %s28, 2
        %s517 = smul.addr %s516, 8
        %s518 = scalar_lea.vmem %s13, %s517
        %p519 = scmp.eq.s32.totalorder %s28, 0
        // Predicated region
        $region97: #{model_forward.1} parent=71 // pred_check
          %p520 = pneg %p519
        $region98: #{model_forward.1} parent=71 // pred_check_branch
          %522 = sbr.rel (%p520) target = $region100
        $region99: #{model_forward.1} parent=71 // pred_region
          %v523 = vld [vmem:[%s1] sm:$0xff]
          %v524 = vld [vmem:[%s1 + $0x8] sm:$0xff]
          %v525 = vld [vmem:[%s0] sm:$0xff]
          %v526 = vld [vmem:[%s0 + $0x8] sm:$0xff]
          %v527 = vld [vmem:[%s6] sm:$0xff]
          %v528 = vld [vmem:[%s6 + $0x8] sm:$0xff]
          %vm529 = vcmask 130048
          %v531 = vsel %vm529, %v525, 0
          %v534 = vsel %vm529, %v526, 0
          %536 = vmatpush.msra.mxu0 0.0
          %537 = vmatpush.msra.mxu0 0.0
          %538 = vmatpush.msra.mxu0 0.0
          %539 = vmatpush.msra.mxu0 0.0
          %540 = vmatpush.msra.mxu0 0.0
          %541 = vmatpush.msra.mxu0 0.0
          %542 = vmatpush.msra.mxu0 0.0
          %543 = vmatpush.msra.mxu0 0.0
          %544 = vmatpush.msra.mxu0 0.0
          %545 = vmatpush.msra.mxu0 0.0
          %546 = vmatpush.msra.mxu0 0.0
          %547 = vmatpush.msra.mxu0 0.0
          %548 = vmatpush.msra.mxu0 0.0
          %549 = vmatpush.msra.mxu0 0.0
          %550 = vmatpush.msra.mxu0 %v528
          %551 = vmatpush.msra.mxu0 %v527
          %552 = vmatmul.f32.gmra.mxu0 %v531
          %v553 = vpop.f32.mrf.mxu0
          %v554 = vadd.f32 0.0, %v553
          %555 = vmatmul.f32.gmra.mxu0 %v534
          %v556 = vpop.f32.mrf.mxu0
          %v557 = vadd.f32 0.0, %v556
          %558 = vdwg.mxu0
          %v559 = vld [vmem:[%s8] sm:$0xff]
          %v560 = vld [vmem:[%s8 + $0x8] sm:$0xff]
          %v562 = vsel %vm529, %v523, 0
          %v565 = vsel %vm529, %v524, 0
          %567 = vmatpush.msra.mxu0 0.0
          %568 = vmatpush.msra.mxu0 0.0
          %569 = vmatpush.msra.mxu0 0.0
          %570 = vmatpush.msra.mxu0 0.0
          %571 = vmatpush.msra.mxu0 0.0
          %572 = vmatpush.msra.mxu0 0.0
          %573 = vmatpush.msra.mxu0 0.0
          %574 = vmatpush.msra.mxu0 0.0
          %575 = vmatpush.msra.mxu0 0.0
          %576 = vmatpush.msra.mxu0 0.0
          %577 = vmatpush.msra.mxu0 0.0
          %578 = vmatpush.msra.mxu0 0.0
          %579 = vmatpush.msra.mxu0 0.0
          %580 = vmatpush.msra.mxu0 0.0
          %581 = vmatpush.msra.mxu0 %v557
          %582 = vmatpush.msra.mxu0 %v554
          %583 = vmatmul.f32.gmra.mxu0 %v562
          %v584 = vpop.f32.mrf.mxu0
          %v585 = vadd.f32 %v559, %v584
          %586 = vmatmul.f32.gmra.mxu0 %v565
          %v587 = vpop.f32.mrf.mxu0
          %v588 = vadd.f32 %v560, %v587
          %589 = vdwg.mxu0
          %v590 = vmax.f32 %v585, 0.0
          %v591 = vmax.f32 %v588, 0.0
          %v592 = vld [vmem:[%s6 + $0x10] sm:$0xff]
          %v593 = vld [vmem:[%s6 + $0x18] sm:$0xff]
          %v594 = vld [vmem:[%s6 + $0x20] sm:$0xff]
          %v595 = vld [vmem:[%s6 + $0x28] sm:$0xff]
          %vm596 = vcmask 261120
          %v598 = vsel %vm596, %v590, 0
          %v601 = vsel %vm596, %v591, 0
          %603 = vmatpush.msra.mxu0 0.0
          %604 = vmatpush.msra.mxu0 0.0
          %605 = vmatpush.msra.mxu0 0.0
          %606 = vmatpush.msra.mxu0 0.0
          %607 = vmatpush.msra.mxu0 0.0
          %608 = vmatpush.msra.mxu0 0.0
          %609 = vmatpush.msra.mxu0 0.0
          %610 = vmatpush.msra.mxu0 0.0
          %611 = vmatpush.msra.mxu0 0.0
          %612 = vmatpush.msra.mxu0 0.0
          %613 = vmatpush.msra.mxu0 0.0
          %614 = vmatpush.msra.mxu0 0.0
          %615 = vmatpush.msra.mxu0 %v595
          %616 = vmatpush.msra.mxu0 %v594
          %617 = vmatpush.msra.mxu0 %v593
          %618 = vmatpush.msra.mxu0 %v592
          %619 = vmatmul.f32.gmra.mxu0 %v598
          %v620 = vpop.f32.mrf.mxu0
          %v621 = vadd.f32 0.0, %v620
          %622 = vmatmul.f32.gmra.mxu0 %v601
          %v623 = vpop.f32.mrf.mxu0
          %v624 = vadd.f32 0.0, %v623
          %625 = vdwg.mxu0
          %v626 = vld [vmem:[%s8 + $0x10] sm:$0xff]
          %v627 = vld [vmem:[%s8 + $0x18] sm:$0xff]
          %628 = vmatpush.msra.mxu0 0.0
          %629 = vmatpush.msra.mxu0 0.0
          %630 = vmatpush.msra.mxu0 0.0
          %631 = vmatpush.msra.mxu0 0.0
          %632 = vmatpush.msra.mxu0 0.0
          %633 = vmatpush.msra.mxu0 0.0
          %634 = vmatpush.msra.mxu0 0.0
          %635 = vmatpush.msra.mxu0 0.0
          %636 = vmatpush.msra.mxu0 0.0
          %637 = vmatpush.msra.mxu0 0.0
          %638 = vmatpush.msra.mxu0 0.0
          %639 = vmatpush.msra.mxu0 0.0
          %640 = vmatpush.msra.mxu0 0.0
          %641 = vmatpush.msra.mxu0 0.0
          %642 = vmatpush.msra.mxu0 %v624
          %643 = vmatpush.msra.mxu0 %v621
          %644 = vmatmul.f32.gmra.mxu0 %v562
          %v645 = vpop.f32.mrf.mxu0
          %v646 = vadd.f32 %v626, %v645
          %647 = vmatmul.f32.gmra.mxu0 %v565
          %v648 = vpop.f32.mrf.mxu0
          %v649 = vadd.f32 %v627, %v648
          %650 = vdwg.mxu0
          %v651 = vmax.f32 %v646, 0.0
          %v652 = vmax.f32 %v649, 0.0
          %v653 = vld [vmem:[%s6 + $0x30] sm:$0xff]
          %v654 = vld [vmem:[%s6 + $0x38] sm:$0xff]
          %v655 = vld [vmem:[%s6 + $0x40] sm:$0xff]
          %v656 = vld [vmem:[%s6 + $0x48] sm:$0xff]
          %v658 = vsel %vm596, %v651, 0
          %v661 = vsel %vm596, %v652, 0
          %663 = vmatpush.msra.mxu0 0.0
          %664 = vmatpush.msra.mxu0 0.0
          %665 = vmatpush.msra.mxu0 0.0
          %666 = vmatpush.msra.mxu0 0.0
          %667 = vmatpush.msra.mxu0 0.0
          %668 = vmatpush.msra.mxu0 0.0
          %669 = vmatpush.msra.mxu0 0.0
          %670 = vmatpush.msra.mxu0 0.0
          %671 = vmatpush.msra.mxu0 0.0
          %672 = vmatpush.msra.mxu0 0.0
          %673 = vmatpush.msra.mxu0 0.0
          %674 = vmatpush.msra.mxu0 0.0
          %675 = vmatpush.msra.mxu0 %v656
          %676 = vmatpush.msra.mxu0 %v655
          %677 = vmatpush.msra.mxu0 %v654
          %678 = vmatpush.msra.mxu0 %v653
          %679 = vmatmul.f32.gmra.mxu0 %v658
          %v680 = vpop.f32.mrf.mxu0
          %v681 = vadd.f32 0.0, %v680
          %682 = vmatmul.f32.gmra.mxu0 %v661
          %v683 = vpop.f32.mrf.mxu0
          %v684 = vadd.f32 0.0, %v683
          %685 = vdwg.mxu0
          %v686 = vld [vmem:[%s8 + $0x20] sm:$0xff]
          %v687 = vld [vmem:[%s8 + $0x28] sm:$0xff]
          %688 = vmatpush.msra.mxu0 0.0
          %689 = vmatpush.msra.mxu0 0.0
          %690 = vmatpush.msra.mxu0 0.0
          %691 = vmatpush.msra.mxu0 0.0
          %692 = vmatpush.msra.mxu0 0.0
          %693 = vmatpush.msra.mxu0 0.0
          %694 = vmatpush.msra.mxu0 0.0
          %695 = vmatpush.msra.mxu0 0.0
          %696 = vmatpush.msra.mxu0 0.0
          %697 = vmatpush.msra.mxu0 0.0
          %698 = vmatpush.msra.mxu0 0.0
          %699 = vmatpush.msra.mxu0 0.0
          %700 = vmatpush.msra.mxu0 0.0
          %701 = vmatpush.msra.mxu0 0.0
          %702 = vmatpush.msra.mxu0 %v684
          %703 = vmatpush.msra.mxu0 %v681
          %704 = vmatmul.f32.gmra.mxu0 %v562
          %v705 = vpop.f32.mrf.mxu0
          %v706 = vadd.f32 %v686, %v705
          %707 = vmatmul.f32.gmra.mxu0 %v565
          %v708 = vpop.f32.mrf.mxu0
          %v709 = vadd.f32 %v687, %v708
          %710 = vdwg.mxu0
          %v711 = vld [vmem:[%s2] sm:$0xff]
          %v713 = vsel %vm529, %v711, 0
          %715 = vmatpush.msra.mxu0 0.0
          %716 = vmatpush.msra.mxu0 0.0
          %717 = vmatpush.msra.mxu0 0.0
          %718 = vmatpush.msra.mxu0 0.0
          %719 = vmatpush.msra.mxu0 0.0
          %720 = vmatpush.msra.mxu0 0.0
          %721 = vmatpush.msra.mxu0 0.0
          %722 = vmatpush.msra.mxu0 0.0
          %723 = vmatpush.msra.mxu0 0.0
          %724 = vmatpush.msra.mxu0 0.0
          %725 = vmatpush.msra.mxu0 0.0
          %726 = vmatpush.msra.mxu0 0.0
          %727 = vmatpush.msra.mxu0 0.0
          %728 = vmatpush.msra.mxu0 0.0
          %729 = vmatpush.msra.mxu0 %v709
          %730 = vmatpush.msra.mxu0 %v706
          %731 = vmatmul.f32.gmra.mxu0 %v713
          %v732 = vpop.f32.mrf.mxu0
          %v733 = vadd.f32 0.0, %v732
          %734 = vdwg.mxu0
          %v735 = vld [vmem:[%s6 + $0x50] sm:$0xff]
          %v736 = vld [vmem:[%s6 + $0x58] sm:$0xff]
          %v737 = vld [vmem:[%s6 + $0x60] sm:$0xff]
          %v738 = vld [vmem:[%s6 + $0x68] sm:$0xff]
          %v739 = vld [vmem:[%s8 + $0x30] sm:$0xff]
          %v741 = vsel %vm596, %v733, 0
          %743 = vmatpush.msra.mxu0 0.0
          %744 = vmatpush.msra.mxu0 0.0
          %745 = vmatpush.msra.mxu0 0.0
          %746 = vmatpush.msra.mxu0 0.0
          %747 = vmatpush.msra.mxu0 0.0
          %748 = vmatpush.msra.mxu0 0.0
          %749 = vmatpush.msra.mxu0 0.0
          %750 = vmatpush.msra.mxu0 0.0
          %751 = vmatpush.msra.mxu0 0.0
          %752 = vmatpush.msra.mxu0 0.0
          %753 = vmatpush.msra.mxu0 0.0
          %754 = vmatpush.msra.mxu0 0.0
          %755 = vmatpush.msra.mxu0 %v738
          %756 = vmatpush.msra.mxu0 %v737
          %757 = vmatpush.msra.mxu0 %v736
          %758 = vmatpush.msra.mxu0 %v735
          %759 = vmatmul.f32.gmra.mxu0 %v741
          %v760 = vpop.f32.mrf.mxu0
          %v761 = vadd.f32 %v739, %v760
          %762 = vdwg.mxu0
          %v763 = vmax.f32 %v761, 0.0
          %v764 = vld [vmem:[#allocation6 + $0xf0] sm:$0xff]
          %v765 = vld [vmem:[#allocation6 + $0xf8] sm:$0xff]
          %v766 = vld [vmem:[#allocation6 + $0x100] sm:$0xff]
          %v767 = vld [vmem:[#allocation6 + $0x108] sm:$0xff]
          %v768 = vld [vmem:[#allocation7 + $0xc0] sm:$0xff]
          %v770 = vsel %vm596, %v763, 0
          %772 = vmatpush.msra.mxu0 0.0
          %773 = vmatpush.msra.mxu0 0.0
          %774 = vmatpush.msra.mxu0 0.0
          %775 = vmatpush.msra.mxu0 0.0
          %776 = vmatpush.msra.mxu0 0.0
          %777 = vmatpush.msra.mxu0 0.0
          %778 = vmatpush.msra.mxu0 0.0
          %779 = vmatpush.msra.mxu0 0.0
          %780 = vmatpush.msra.mxu0 0.0
          %781 = vmatpush.msra.mxu0 0.0
          %782 = vmatpush.msra.mxu0 0.0
          %783 = vmatpush.msra.mxu0 0.0
          %784 = vmatpush.msra.mxu0 %v767
          %785 = vmatpush.msra.mxu0 %v766
          %786 = vmatpush.msra.mxu0 %v765
          %787 = vmatpush.msra.mxu0 %v764
          %788 = vmatmul.f32.gmra.mxu0 %v770
          %v789 = vpop.f32.mrf.mxu0
          %v790 = vadd.f32 %v768, %v789
          %791 = vdwg.mxu0
          %792 = vst [vmem:[%s518] sm:$0xff] %v790
        $region100: #{model_forward.1} parent=71 // pred_fallthru
          _
        %p793 = scmp.eq.s32.totalorder %s28, 1
        // Predicated region
        $region101: #{model_forward.1} parent=71 // pred_check
          %p794 = pneg %p793
        $region102: #{model_forward.1} parent=71 // pred_check_branch
          %796 = sbr.rel (%p794) target = $region104
        $region103: #{model_forward.1} parent=71 // pred_region
          %v797 = vld [vmem:[%s0] sm:$0xff]
          %v798 = vld [vmem:[%s0 + $0x8] sm:$0xff]
          %v799 = vld [vmem:[#allocation6] sm:$0xff]
          %v800 = vld [vmem:[#allocation6 + $0x8] sm:$0xff]
          %vm801 = vcmask 130048
          %v803 = vsel %vm801, %v797, 0
          %v806 = vsel %vm801, %v798, 0
          %808 = vmatpush.msra.mxu0 0.0
          %809 = vmatpush.msra.mxu0 0.0
          %810 = vmatpush.msra.mxu0 0.0
          %811 = vmatpush.msra.mxu0 0.0
          %812 = vmatpush.msra.mxu0 0.0
          %813 = vmatpush.msra.mxu0 0.0
          %814 = vmatpush.msra.mxu0 0.0
          %815 = vmatpush.msra.mxu0 0.0
          %816 = vmatpush.msra.mxu0 0.0
          %817 = vmatpush.msra.mxu0 0.0
          %818 = vmatpush.msra.mxu0 0.0
          %819 = vmatpush.msra.mxu0 0.0
          %820 = vmatpush.msra.mxu0 0.0
          %821 = vmatpush.msra.mxu0 0.0
          %822 = vmatpush.msra.mxu0 %v800
          %823 = vmatpush.msra.mxu0 %v799
          %824 = vmatmul.f32.gmra.mxu0 %v803
          %v825 = vpop.f32.mrf.mxu0
          %v826 = vadd.f32 0.0, %v825
          %827 = vmatmul.f32.gmra.mxu0 %v806
          %v828 = vpop.f32.mrf.mxu0
          %v829 = vadd.f32 0.0, %v828
          %830 = vdwg.mxu0
          %v831 = vld [vmem:[%s10] sm:$0xff]
          %v832 = vld [vmem:[%s10 + $0x8] sm:$0xff]
          %v833 = vld [vmem:[%s10 + $0x10] sm:$0xff]
          %v834 = vld [vmem:[%s10 + $0x18] sm:$0xff]
          %v835 = vld [vmem:[%s10 + $0x20] sm:$0xff]
          %v836 = vld [vmem:[%s10 + $0x28] sm:$0xff]
          %v837 = vld [vmem:[%s10 + $0x30] sm:$0xff]
          %v838 = vld [vmem:[%s10 + $0x38] sm:$0xff]
          %v839 = vld [vmem:[%s10 + $0x40] sm:$0xff]
          %v840 = vld [vmem:[%s10 + $0x48] sm:$0xff]
          %v841 = vld [vmem:[%s10 + $0x50] sm:$0xff]
          %v842 = vld [vmem:[%s10 + $0x58] sm:$0xff]
          %v843 = vld [vmem:[%s10 + $0x60] sm:$0xff]
          %v844 = vld [vmem:[%s10 + $0x68] sm:$0xff]
          %v845 = vld [vmem:[%s10 + $0x70] sm:$0xff]
          %v846 = vld [vmem:[%s10 + $0x78] sm:$0xff]
          %v847 = vld [vmem:[#allocation9] sm:$0xf]
          %848 = vmatpush.xpose.msra.mxu0 0.0
          %849 = vmatpush.xpose.msra.mxu0 0.0
          %850 = vmatpush.xpose.msra.mxu0 0.0
          %851 = vmatpush.xpose.msra.mxu0 0.0
          %852 = vmatpush.xpose.msra.mxu0 0.0
          %853 = vmatpush.xpose.msra.mxu0 0.0
          %854 = vmatpush.xpose.msra.mxu0 0.0
          %855 = vmatpush.xpose.msra.mxu0 0.0
          %856 = vmatpush.xpose.msra.mxu0 0.0
          %857 = vmatpush.xpose.msra.mxu0 0.0
          %858 = vmatpush.xpose.msra.mxu0 0.0
          %859 = vmatpush.xpose.msra.mxu0 0.0
          %860 = vmatpush.xpose.msra.mxu0 0.0
          %861 = vmatpush.xpose.msra.mxu0 0.0
          %862 = vmatpush.xpose.msra.mxu0 %v829
          %863 = vmatpush.xpose.msra.mxu0 %v826
          %864 = vmatmul.f32.gmra.mxu0 %v847
          %v865 = vpop.f32.mrf.mxu0
          %v866 = vadd.f32 0.0, %v865
          %867 = vdwg.mxu0
          %v869 = vrot.slane %v866, 1
          %870 = vrot.lane.b32.xlu0 %v869, 16
          %v871 = vpop.permute.xlu0 %870
          %v873 = vrot.slane %v866, 2
          %874 = vrot.lane.b32.xlu0 %v873, 32
          %v875 = vpop.permute.xlu0 %874
          %v877 = vrot.slane %v866, 3
          %878 = vrot.lane.b32.xlu0 %v877, 48
          %v879 = vpop.permute.xlu0 %878
          %v881 = vsel %vm801, %v866, %v871
          %vm882 = vcmask 261120
          %v883 = vsel %vm882, %v881, %v875
          %vm884 = vcmask 392192
          %v885 = vsel %vm884, %v883, %v879
          %v886 = vperm.slane %v885, 0
          %887 = vmatpush.msra.mxu0 %v846
          %888 = vmatpush.msra.mxu0 %v845
          %889 = vmatpush.msra.mxu0 %v844
          %890 = vmatpush.msra.mxu0 %v843
          %891 = vmatpush.msra.mxu0 %v842
          %892 = vmatpush.msra.mxu0 %v841
          %893 = vmatpush.msra.mxu0 %v840
          %894 = vmatpush.msra.mxu0 %v839
          %895 = vmatpush.msra.mxu0 %v838
          %896 = vmatpush.msra.mxu0 %v837
          %897 = vmatpush.msra.mxu0 %v836
          %898 = vmatpush.msra.mxu0 %v835
          %899 = vmatpush.msra.mxu0 %v834
          %900 = vmatpush.msra.mxu0 %v833
          %901 = vmatpush.msra.mxu0 %v832
          %902 = vmatpush.msra.mxu0 %v831
          %903 = vmatmul.f32.gmra.mxu0 %v826
          %v904 = vpop.f32.mrf.mxu0
          %v905 = vadd.f32 %v886, %v904
          %906 = vmatmul.f32.gmra.mxu0 %v829
          %v907 = vpop.f32.mrf.mxu0
          %v908 = vadd.f32 %v886, %v907
          %909 = vdwg.mxu0
          %vm910 = vcmp.gt.f32.partialorder %v905, 0.0
          %vm911 = vcmp.gt.f32.partialorder %v908, 0.0
          %v912 = vmul.f32 %v905, 0.2
          %v913 = vmul.f32 %v908, 0.2
          %v914 = vsel %vm910, %v905, %v912
          %v915 = vsel %vm911, %v908, %v913
          %v916 = vld [vmem:[%s3] sm:$0xff]
          %v917 = vld [vmem:[%s3 + $0x8] sm:$0xff]
          %v918 = vadd.f32 %v914, %v916
          %v919 = vadd.f32 %v915, %v917
          %vm920 = vcmask 523264
          %v921 = vsel %vm920, %v918, -inf
          %v922 = vsel %vm920, %v919, -inf
          %v923 = vmax.f32 %v921, %v922
          %v924 = vrot.slane %v923, 4
          %v925 = vmax.f32 %v923, %v924
          %v926 = vrot.slane %v925, 2
          %v927 = vmax.f32 %v925, %v926
          %v928 = vrot.slane %v927, 1
          %v929 = vmax.f32 %v927, %v928
          %v930 = vsub.f32 %v918, %v929
          %v931 = vsub.f32 %v919, %v929
          %v932 = vmul.f32 %v930, 1.442695
          %v933 = vpow.pop %v932
          %v934 = vmul.f32 %v931, 1.442695
          %v935 = vpow.pop %v934
          %v936 = vsel %vm920, %v933, 0.0
          %v937 = vsel %vm920, %v935, 0.0
          %v938 = vadd.f32 %v936, %v937
          %v939 = vrot.slane %v938, 4
          %v940 = vadd.f32 %v938, %v939
          %v941 = vrot.slane %v940, 2
          %v942 = vadd.f32 %v940, %v941
          %v943 = vrot.slane %v942, 1
          %v944 = vadd.f32 %v942, %v943
          %v945 = vrcp.pop %v944
          %v946 = vmul.f32 %v933, %v945
          %v947 = vmul.f32 %v935, %v945
          %v948 = vld [vmem:[#allocation7] sm:$0xff]
          %v949 = vld [vmem:[#allocation7 + $0x8] sm:$0xff]
          %950 = vxpose.xlu0.b32.start [1/16] %v946, 128
          %951 = vxpose.xlu0.b32.cont [2/16] %v947, 128
          %952 = vxpose.xlu0.b32.cont [3/16] 0.0, 128
          %953 = vxpose.xlu0.b32.cont [4/16] 0.0, 128
          %954 = vxpose.xlu0.b32.cont [5/16] 0.0, 128
          %955 = vxpose.xlu0.b32.cont [6/16] 0.0, 128
          %956 = vxpose.xlu0.b32.cont [7/16] 0.0, 128
          %957 = vxpose.xlu0.b32.cont [8/16] 0.0, 128
          %958 = vxpose.xlu0.b32.cont [9/16] 0.0, 128
          %959 = vxpose.xlu0.b32.cont [10/16] 0.0, 128
          %960 = vxpose.xlu0.b32.cont [11/16] 0.0, 128
          %961 = vxpose.xlu0.b32.cont [12/16] 0.0, 128
          %962 = vxpose.xlu0.b32.cont [13/16] 0.0, 128
          %963 = vxpose.xlu0.b32.cont [14/16] 0.0, 128
          %964 = vxpose.xlu0.b32.cont [15/16] 0.0, 128
          %965 = vxpose.xlu0.b32.end [16/16] 0.0, 128
          %v966 = vpop.trf.xlu0
          %v967 = vpop.trf.xlu0
          %v968 = vpop.trf.xlu0
          %v969 = vpop.trf.xlu0
          %v970 = vpop.trf.xlu0
          %v971 = vpop.trf.xlu0
          %v972 = vpop.trf.xlu0
          %v973 = vpop.trf.xlu0
          %v974 = vpop.trf.xlu0
          %v975 = vpop.trf.xlu0
          %v976 = vpop.trf.xlu0
          %v977 = vpop.trf.xlu0
          %v978 = vpop.trf.xlu0
          %v979 = vpop.trf.xlu0
          %v980 = vpop.trf.xlu0
          %v981 = vpop.trf.xlu0
          %v983 = vsel %vm801, %v966, 0
          %v986 = vsel %vm801, %v967, 0
          %v989 = vsel %vm801, %v968, 0
          %v992 = vsel %vm801, %v969, 0
          %v995 = vsel %vm801, %v970, 0
          %v998 = vsel %vm801, %v971, 0
          %v1001 = vsel %vm801, %v972, 0
          %v1004 = vsel %vm801, %v973, 0
          %1006 = vmatpush.msra.mxu0 0.0
          %1007 = vmatpush.msra.mxu0 0.0
          %1008 = vmatpush.msra.mxu0 0.0
          %1009 = vmatpush.msra.mxu0 0.0
          %1010 = vmatpush.msra.mxu0 0.0
          %1011 = vmatpush.msra.mxu0 0.0
          %1012 = vmatpush.msra.mxu0 0.0
          %1013 = vmatpush.msra.mxu0 0.0
          %1014 = vmatpush.msra.mxu0 0.0
          %1015 = vmatpush.msra.mxu0 0.0
          %1016 = vmatpush.msra.mxu0 0.0
          %1017 = vmatpush.msra.mxu0 0.0
          %1018 = vmatpush.msra.mxu0 0.0
          %1019 = vmatpush.msra.mxu0 0.0
          %1020 = vmatpush.msra.mxu0 %v829
          %1021 = vmatpush.msra.mxu0 %v826
          %1022 = vmatmul.f32.gmra.mxu0 %v983
          %v1023 = vpop.f32.mrf.mxu0
          %v1024 = vadd.f32 0.0, %v1023
          %1025 = vmatmul.f32.gmra.mxu0 %v986
          %v1026 = vpop.f32.mrf.mxu0
          %v1027 = vadd.f32 0.0, %v1026
          %1028 = vmatmul.f32.gmra.mxu0 %v989
          %v1029 = vpop.f32.mrf.mxu0
          %v1030 = vadd.f32 0.0, %v1029
          %1031 = vmatmul.f32.gmra.mxu0 %v992
          %v1032 = vpop.f32.mrf.mxu0
          %v1033 = vadd.f32 0.0, %v1032
          %1034 = vmatmul.f32.gmra.mxu0 %v995
          %v1035 = vpop.f32.mrf.mxu0
          %v1036 = vadd.f32 0.0, %v1035
          %1037 = vmatmul.f32.gmra.mxu0 %v998
          %v1038 = vpop.f32.mrf.mxu0
          %v1039 = vadd.f32 0.0, %v1038
          %1040 = vmatmul.f32.gmra.mxu0 %v1001
          %v1041 = vpop.f32.mrf.mxu0
          %v1042 = vadd.f32 0.0, %v1041
          %1043 = vmatmul.f32.gmra.mxu0 %v1004
          %v1044 = vpop.f32.mrf.mxu0
          %v1045 = vadd.f32 0.0, %v1044
          %1046 = vdwg.mxu0
          %v1047 = vld [vmem:[#allocation2] sm:$0xff]
          %v1048 = vld [vmem:[#allocation2 + $0x8] sm:$0xff]
          %v1049 = vld [vmem:[#allocation2 + $0x10] sm:$0xff]
          %v1050 = vld [vmem:[#allocation2 + $0x18] sm:$0xff]
          %v1051 = vld [vmem:[#allocation2 + $0x20] sm:$0xff]
          %v1052 = vld [vmem:[#allocation2 + $0x28] sm:$0xff]
          %v1053 = vld [vmem:[#allocation2 + $0x30] sm:$0xff]
          %v1054 = vld [vmem:[#allocation2 + $0x38] sm:$0xff]
          %v1055 = vmul.f32 %v1024, %v1047
          %v1056 = vmul.f32 %v1027, %v1048
          %v1057 = vmul.f32 %v1030, %v1049
          %v1058 = vmul.f32 %v1033, %v1050
          %v1059 = vmul.f32 %v1036, %v1051
          %v1060 = vmul.f32 %v1039, %v1052
          %v1061 = vmul.f32 %v1042, %v1053
          %v1062 = vmul.f32 %v1045, %v1054
          %v1063 = vadd.f32 %v1055, %v1057
          %v1064 = vadd.f32 %v1056, %v1058
          %v1065 = vadd.f32 %v1063, %v1059
          %v1066 = vadd.f32 %v1064, %v1060
          %v1067 = vadd.f32 %v1065, %v1061
          %v1068 = vadd.f32 %v1066, %v1062
          %v1069 = vadd.f32 %v1067, %v948
          %v1070 = vadd.f32 %v1068, %v949
          %v1071 = vld [vmem:[%s6 + $0x70] sm:$0xff]
          %v1072 = vld [vmem:[%s6 + $0x78] sm:$0xff]
          %v1073 = vld [vmem:[%s6 + $0x80] sm:$0xff]
          %v1074 = vld [vmem:[%s6 + $0x88] sm:$0xff]
          %v1075 = vld [vmem:[%s6 + $0x90] sm:$0xff]
          %v1076 = vld [vmem:[%s6 + $0x98] sm:$0xff]
          %v1077 = vld [vmem:[%s6 + $0xa0] sm:$0xff]
          %v1078 = vld [vmem:[%s6 + $0xa8] sm:$0xff]
          %v1079 = vld [vmem:[%s6 + $0xb0] sm:$0xff]
          %v1080 = vld [vmem:[%s6 + $0xb8] sm:$0xff]
          %v1081 = vld [vmem:[%s6 + $0xc0] sm:$0xff]
          %v1082 = vld [vmem:[%s6 + $0xc8] sm:$0xff]
          %v1083 = vld [vmem:[%s6 + $0xd0] sm:$0xff]
          %v1084 = vld [vmem:[%s6 + $0xd8] sm:$0xff]
          %v1085 = vld [vmem:[%s6 + $0xe0] sm:$0xff]
          %v1086 = vld [vmem:[%s6 + $0xe8] sm:$0xff]
          %v1087 = vld [vmem:[%s8 + $0x38] sm:$0xff]
          %v1088 = vld [vmem:[%s8 + $0x40] sm:$0xff]
          %1089 = vmatpush.msra.mxu0 %v1086
          %1090 = vmatpush.msra.mxu0 %v1085
          %1091 = vmatpush.msra.mxu0 %v1084
          %1092 = vmatpush.msra.mxu0 %v1083
          %1093 = vmatpush.msra.mxu0 %v1082
          %1094 = vmatpush.msra.mxu0 %v1081
          %1095 = vmatpush.msra.mxu0 %v1080
          %1096 = vmatpush.msra.mxu0 %v1079
          %1097 = vmatpush.msra.mxu0 %v1078
          %1098 = vmatpush.msra.mxu0 %v1077
          %1099 = vmatpush.msra.mxu0 %v1076
          %1100 = vmatpush.msra.mxu0 %v1075
          %1101 = vmatpush.msra.mxu0 %v1074
          %1102 = vmatpush.msra.mxu0 %v1073
          %1103 = vmatpush.msra.mxu0 %v1072
          %1104 = vmatpush.msra.mxu0 %v1071
          %1105 = vmatmul.f32.gmra.mxu0 %v1069
          %v1106 = vpop.f32.mrf.mxu0
          %v1107 = vadd.f32 %v1087, %v1106
          %1108 = vmatmul.f32.gmra.mxu0 %v1070
          %v1109 = vpop.f32.mrf.mxu0
          %v1110 = vadd.f32 %v1088, %v1109
          %1111 = vdwg.mxu0
          %v1112 = vmax.f32 %v1107, 0.0
          %v1113 = vmax.f32 %v1110, 0.0
          %v1114 = vld [vmem:[#allocation6 + $0x10] sm:$0xff]
          %v1115 = vld [vmem:[#allocation6 + $0x18] sm:$0xff]
          %v1116 = vld [vmem:[#allocation6 + $0x20] sm:$0xff]
          %v1117 = vld [vmem:[#allocation6 + $0x28] sm:$0xff]
          %v1119 = vsel %vm882, %v1112, 0
          %v1122 = vsel %vm882, %v1113, 0
          %1124 = vmatpush.msra.mxu0 0.0
          %1125 = vmatpush.msra.mxu0 0.0
          %1126 = vmatpush.msra.mxu0 0.0
          %1127 = vmatpush.msra.mxu0 0.0
          %1128 = vmatpush.msra.mxu0 0.0
          %1129 = vmatpush.msra.mxu0 0.0
          %1130 = vmatpush.msra.mxu0 0.0
          %1131 = vmatpush.msra.mxu0 0.0
          %1132 = vmatpush.msra.mxu0 0.0
          %1133 = vmatpush.msra.mxu0 0.0
          %1134 = vmatpush.msra.mxu0 0.0
          %1135 = vmatpush.msra.mxu0 0.0
          %1136 = vmatpush.msra.mxu0 %v1117
          %1137 = vmatpush.msra.mxu0 %v1116
          %1138 = vmatpush.msra.mxu0 %v1115
          %1139 = vmatpush.msra.mxu0 %v1114
          %1140 = vmatmul.f32.gmra.mxu0 %v1119
          %v1141 = vpop.f32.mrf.mxu0
          %v1142 = vadd.f32 0.0, %v1141
          %1143 = vmatmul.f32.gmra.mxu0 %v1122
          %v1144 = vpop.f32.mrf.mxu0
          %v1145 = vadd.f32 0.0, %v1144
          %1146 = vdwg.mxu0
          %v1147 = vld [vmem:[%s10 + $0x80] sm:$0xff]
          %v1148 = vld [vmem:[%s10 + $0x88] sm:$0xff]
          %v1149 = vld [vmem:[%s10 + $0x90] sm:$0xff]
          %v1150 = vld [vmem:[%s10 + $0x98] sm:$0xff]
          %v1151 = vld [vmem:[%s10 + $0xa0] sm:$0xff]
          %v1152 = vld [vmem:[%s10 + $0xa8] sm:$0xff]
          %v1153 = vld [vmem:[%s10 + $0xb0] sm:$0xff]
          %v1154 = vld [vmem:[%s10 + $0xb8] sm:$0xff]
          %v1155 = vld [vmem:[%s10 + $0xc0] sm:$0xff]
          %v1156 = vld [vmem:[%s10 + $0xc8] sm:$0xff]
          %v1157 = vld [vmem:[%s10 + $0xd0] sm:$0xff]
          %v1158 = vld [vmem:[%s10 + $0xd8] sm:$0xff]
          %v1159 = vld [vmem:[%s10 + $0xe0] sm:$0xff]
          %v1160 = vld [vmem:[%s10 + $0xe8] sm:$0xff]
          %v1161 = vld [vmem:[%s10 + $0xf0] sm:$0xff]
          %v1162 = vld [vmem:[%s10 + $0xf8] sm:$0xff]
          %v1163 = vld [vmem:[#allocation9 + $0x8] sm:$0xf]
          %1164 = vmatpush.xpose.msra.mxu0 0.0
          %1165 = vmatpush.xpose.msra.mxu0 0.0
          %1166 = vmatpush.xpose.msra.mxu0 0.0
          %1167 = vmatpush.xpose.msra.mxu0 0.0
          %1168 = vmatpush.xpose.msra.mxu0 0.0
          %1169 = vmatpush.xpose.msra.mxu0 0.0
          %1170 = vmatpush.xpose.msra.mxu0 0.0
          %1171 = vmatpush.xpose.msra.mxu0 0.0
          %1172 = vmatpush.xpose.msra.mxu0 0.0
          %1173 = vmatpush.xpose.msra.mxu0 0.0
          %1174 = vmatpush.xpose.msra.mxu0 0.0
          %1175 = vmatpush.xpose.msra.mxu0 0.0
          %1176 = vmatpush.xpose.msra.mxu0 0.0
          %1177 = vmatpush.xpose.msra.mxu0 0.0
          %1178 = vmatpush.xpose.msra.mxu0 %v1145
          %1179 = vmatpush.xpose.msra.mxu0 %v1142
          %1180 = vmatmul.f32.gmra.mxu0 %v1163
          %v1181 = vpop.f32.mrf.mxu0
          %v1182 = vadd.f32 0.0, %v1181
          %1183 = vdwg.mxu0
          %v1185 = vrot.slane %v1182, 1
          %1186 = vrot.lane.b32.xlu0 %v1185, 16
          %v1187 = vpop.permute.xlu0 %1186
          %v1189 = vrot.slane %v1182, 2
          %1190 = vrot.lane.b32.xlu0 %v1189, 32
          %v1191 = vpop.permute.xlu0 %1190
          %v1193 = vrot.slane %v1182, 3
          %1194 = vrot.lane.b32.xlu0 %v1193, 48
          %v1195 = vpop.permute.xlu0 %1194
          %v1197 = vsel %vm801, %v1182, %v1187
          %v1198 = vsel %vm882, %v1197, %v1191
          %v1199 = vsel %vm884, %v1198, %v1195
          %v1200 = vperm.slane %v1199, 0
          %1201 = vmatpush.msra.mxu0 %v1162
          %1202 = vmatpush.msra.mxu0 %v1161
          %1203 = vmatpush.msra.mxu0 %v1160
          %1204 = vmatpush.msra.mxu0 %v1159
          %1205 = vmatpush.msra.mxu0 %v1158
          %1206 = vmatpush.msra.mxu0 %v1157
          %1207 = vmatpush.msra.mxu0 %v1156
          %1208 = vmatpush.msra.mxu0 %v1155
          %1209 = vmatpush.msra.mxu0 %v1154
          %1210 = vmatpush.msra.mxu0 %v1153
          %1211 = vmatpush.msra.mxu0 %v1152
          %1212 = vmatpush.msra.mxu0 %v1151
          %1213 = vmatpush.msra.mxu0 %v1150
          %1214 = vmatpush.msra.mxu0 %v1149
          %1215 = vmatpush.msra.mxu0 %v1148
          %1216 = vmatpush.msra.mxu0 %v1147
          %1217 = vmatmul.f32.gmra.mxu0 %v1142
          %v1218 = vpop.f32.mrf.mxu0
          %v1219 = vadd.f32 %v1200, %v1218
          %1220 = vmatmul.f32.gmra.mxu0 %v1145
          %v1221 = vpop.f32.mrf.mxu0
          %v1222 = vadd.f32 %v1200, %v1221
          %1223 = vdwg.mxu0
          %vm1224 = vcmp.gt.f32.partialorder %v1219, 0.0
          %vm1225 = vcmp.gt.f32.partialorder %v1222, 0.0
          %v1226 = vmul.f32 %v1219, 0.2
          %v1227 = vmul.f32 %v1222, 0.2
          %v1228 = vsel %vm1224, %v1219, %v1226
          %v1229 = vsel %vm1225, %v1222, %v1227
          %v1230 = vadd.f32 %v1228, %v916
          %v1231 = vadd.f32 %v1229, %v917
          %v1232 = vsel %vm920, %v1230, -inf
          %v1233 = vsel %vm920, %v1231, -inf
          %v1234 = vmax.f32 %v1232, %v1233
          %v1235 = vrot.slane %v1234, 4
          %v1236 = vmax.f32 %v1234, %v1235
          %v1237 = vrot.slane %v1236, 2
          %v1238 = vmax.f32 %v1236, %v1237
          %v1239 = vrot.slane %v1238, 1
          %v1240 = vmax.f32 %v1238, %v1239
          %v1241 = vsub.f32 %v1230, %v1240
          %v1242 = vsub.f32 %v1231, %v1240
          %v1243 = vmul.f32 %v1241, 1.442695
          %v1244 = vpow.pop %v1243
          %v1245 = vmul.f32 %v1242, 1.442695
          %v1246 = vpow.pop %v1245
          %v1247 = vsel %vm920, %v1244, 0.0
          %v1248 = vsel %vm920, %v1246, 0.0
          %v1249 = vadd.f32 %v1247, %v1248
          %v1250 = vrot.slane %v1249, 4
          %v1251 = vadd.f32 %v1249, %v1250
          %v1252 = vrot.slane %v1251, 2
          %v1253 = vadd.f32 %v1251, %v1252
          %v1254 = vrot.slane %v1253, 1
          %v1255 = vadd.f32 %v1253, %v1254
          %v1256 = vrcp.pop %v1255
          %v1257 = vmul.f32 %v1244, %v1256
          %v1258 = vmul.f32 %v1246, %v1256
          %v1259 = vld [vmem:[#allocation7 + $0x10] sm:$0xff]
          %v1260 = vld [vmem:[#allocation7 + $0x18] sm:$0xff]
          %1261 = vxpose.xlu0.b32.start [1/16] %v1257, 128
          %1262 = vxpose.xlu0.b32.cont [2/16] %v1258, 128
          %1263 = vxpose.xlu0.b32.cont [3/16] 0.0, 128
          %1264 = vxpose.xlu0.b32.cont [4/16] 0.0, 128
          %1265 = vxpose.xlu0.b32.cont [5/16] 0.0, 128
          %1266 = vxpose.xlu0.b32.cont [6/16] 0.0, 128
          %1267 = vxpose.xlu0.b32.cont [7/16] 0.0, 128
          %1268 = vxpose.xlu0.b32.cont [8/16] 0.0, 128
          %1269 = vxpose.xlu0.b32.cont [9/16] 0.0, 128
          %1270 = vxpose.xlu0.b32.cont [10/16] 0.0, 128
          %1271 = vxpose.xlu0.b32.cont [11/16] 0.0, 128
          %1272 = vxpose.xlu0.b32.cont [12/16] 0.0, 128
          %1273 = vxpose.xlu0.b32.cont [13/16] 0.0, 128
          %1274 = vxpose.xlu0.b32.cont [14/16] 0.0, 128
          %1275 = vxpose.xlu0.b32.cont [15/16] 0.0, 128
          %1276 = vxpose.xlu0.b32.end [16/16] 0.0, 128
          %v1277 = vpop.trf.xlu0
          %v1278 = vpop.trf.xlu0
          %v1279 = vpop.trf.xlu0
          %v1280 = vpop.trf.xlu0
          %v1281 = vpop.trf.xlu0
          %v1282 = vpop.trf.xlu0
          %v1283 = vpop.trf.xlu0
          %v1284 = vpop.trf.xlu0
          %v1285 = vpop.trf.xlu0
          %v1286 = vpop.trf.xlu0
          %v1287 = vpop.trf.xlu0
          %v1288 = vpop.trf.xlu0
          %v1289 = vpop.trf.xlu0
          %v1290 = vpop.trf.xlu0
          %v1291 = vpop.trf.xlu0
          %v1292 = vpop.trf.xlu0
          %v1294 = vsel %vm801, %v1277, 0
          %v1297 = vsel %vm801, %v1278, 0
          %v1300 = vsel %vm801, %v1279, 0
          %v1303 = vsel %vm801, %v1280, 0
          %v1306 = vsel %vm801, %v1281, 0
          %v1309 = vsel %vm801, %v1282, 0
          %v1312 = vsel %vm801, %v1283, 0
          %v1315 = vsel %vm801, %v1284, 0
          %1317 = vmatpush.msra.mxu0 0.0
          %1318 = vmatpush.msra.mxu0 0.0
          %1319 = vmatpush.msra.mxu0 0.0
          %1320 = vmatpush.msra.mxu0 0.0
          %1321 = vmatpush.msra.mxu0 0.0
          %1322 = vmatpush.msra.mxu0 0.0
          %1323 = vmatpush.msra.mxu0 0.0
          %1324 = vmatpush.msra.mxu0 0.0
          %1325 = vmatpush.msra.mxu0 0.0
          %1326 = vmatpush.msra.mxu0 0.0
          %1327 = vmatpush.msra.mxu0 0.0
          %1328 = vmatpush.msra.mxu0 0.0
          %1329 = vmatpush.msra.mxu0 0.0
          %1330 = vmatpush.msra.mxu0 0.0
          %1331 = vmatpush.msra.mxu0 %v1145
          %1332 = vmatpush.msra.mxu0 %v1142
          %1333 = vmatmul.f32.gmra.mxu0 %v1294
          %v1334 = vpop.f32.mrf.mxu0
          %v1335 = vadd.f32 0.0, %v1334
          %1336 = vmatmul.f32.gmra.mxu0 %v1297
          %v1337 = vpop.f32.mrf.mxu0
          %v1338 = vadd.f32 0.0, %v1337
          %1339 = vmatmul.f32.gmra.mxu0 %v1300
          %v1340 = vpop.f32.mrf.mxu0
          %v1341 = vadd.f32 0.0, %v1340
          %1342 = vmatmul.f32.gmra.mxu0 %v1303
          %v1343 = vpop.f32.mrf.mxu0
          %v1344 = vadd.f32 0.0, %v1343
          %1345 = vmatmul.f32.gmra.mxu0 %v1306
          %v1346 = vpop.f32.mrf.mxu0
          %v1347 = vadd.f32 0.0, %v1346
          %1348 = vmatmul.f32.gmra.mxu0 %v1309
          %v1349 = vpop.f32.mrf.mxu0
          %v1350 = vadd.f32 0.0, %v1349
          %1351 = vmatmul.f32.gmra.mxu0 %v1312
          %v1352 = vpop.f32.mrf.mxu0
          %v1353 = vadd.f32 0.0, %v1352
          %1354 = vmatmul.f32.gmra.mxu0 %v1315
          %v1355 = vpop.f32.mrf.mxu0
          %v1356 = vadd.f32 0.0, %v1355
          %1357 = vdwg.mxu0
          %v1358 = vmul.f32 %v1335, %v1047
          %v1359 = vmul.f32 %v1338, %v1048
          %v1360 = vmul.f32 %v1341, %v1049
          %v1361 = vmul.f32 %v1344, %v1050
          %v1362 = vmul.f32 %v1347, %v1051
          %v1363 = vmul.f32 %v1350, %v1052
          %v1364 = vmul.f32 %v1353, %v1053
          %v1365 = vmul.f32 %v1356, %v1054
          %v1366 = vadd.f32 %v1358, %v1360
          %v1367 = vadd.f32 %v1359, %v1361
          %v1368 = vadd.f32 %v1366, %v1362
          %v1369 = vadd.f32 %v1367, %v1363
          %v1370 = vadd.f32 %v1368, %v1364
          %v1371 = vadd.f32 %v1369, %v1365
          %v1372 = vadd.f32 %v1370, %v1259
          %v1373 = vadd.f32 %v1371, %v1260
          %v1374 = vld [vmem:[%s6 + $0xf0] sm:$0xff]
          %v1375 = vld [vmem:[%s6 + $0xf8] sm:$0xff]
          %v1376 = vld [vmem:[%s6 + $0x100] sm:$0xff]
          %v1377 = vld [vmem:[%s6 + $0x108] sm:$0xff]
          %v1378 = vld [vmem:[%s6 + $0x110] sm:$0xff]
          %v1379 = vld [vmem:[%s6 + $0x118] sm:$0xff]
          %v1380 = vld [vmem:[%s6 + $0x120] sm:$0xff]
          %v1381 = vld [vmem:[%s6 + $0x128] sm:$0xff]
          %v1382 = vld [vmem:[%s6 + $0x130] sm:$0xff]
          %v1383 = vld [vmem:[%s6 + $0x138] sm:$0xff]
          %v1384 = vld [vmem:[%s6 + $0x140] sm:$0xff]
          %v1385 = vld [vmem:[%s6 + $0x148] sm:$0xff]
          %v1386 = vld [vmem:[%s6 + $0x150] sm:$0xff]
          %v1387 = vld [vmem:[%s6 + $0x158] sm:$0xff]
          %v1388 = vld [vmem:[%s6 + $0x160] sm:$0xff]
          %v1389 = vld [vmem:[%s6 + $0x168] sm:$0xff]
          %v1390 = vld [vmem:[%s8 + $0x48] sm:$0xff]
          %v1391 = vld [vmem:[%s8 + $0x50] sm:$0xff]
          %1392 = vmatpush.msra.mxu0 %v1389
          %1393 = vmatpush.msra.mxu0 %v1388
          %1394 = vmatpush.msra.mxu0 %v1387
          %1395 = vmatpush.msra.mxu0 %v1386
          %1396 = vmatpush.msra.mxu0 %v1385
          %1397 = vmatpush.msra.mxu0 %v1384
          %1398 = vmatpush.msra.mxu0 %v1383
          %1399 = vmatpush.msra.mxu0 %v1382
          %1400 = vmatpush.msra.mxu0 %v1381
          %1401 = vmatpush.msra.mxu0 %v1380
          %1402 = vmatpush.msra.mxu0 %v1379
          %1403 = vmatpush.msra.mxu0 %v1378
          %1404 = vmatpush.msra.mxu0 %v1377
          %1405 = vmatpush.msra.mxu0 %v1376
          %1406 = vmatpush.msra.mxu0 %v1375
          %1407 = vmatpush.msra.mxu0 %v1374
          %1408 = vmatmul.f32.gmra.mxu0 %v1372
          %v1409 = vpop.f32.mrf.mxu0
          %v1410 = vadd.f32 %v1390, %v1409
          %1411 = vmatmul.f32.gmra.mxu0 %v1373
          %v1412 = vpop.f32.mrf.mxu0
          %v1413 = vadd.f32 %v1391, %v1412
          %1414 = vdwg.mxu0
          %v1415 = vmax.f32 %v1410, 0.0
          %v1416 = vmax.f32 %v1413, 0.0
          %v1417 = vld [vmem:[#allocation6 + $0x30] sm:$0xff]
          %v1418 = vld [vmem:[#allocation6 + $0x38] sm:$0xff]
          %v1419 = vld [vmem:[#allocation6 + $0x40] sm:$0xff]
          %v1420 = vld [vmem:[#allocation6 + $0x48] sm:$0xff]
          %v1422 = vsel %vm882, %v1415, 0
          %v1425 = vsel %vm882, %v1416, 0
          %1427 = vmatpush.msra.mxu0 0.0
          %1428 = vmatpush.msra.mxu0 0.0
          %1429 = vmatpush.msra.mxu0 0.0
          %1430 = vmatpush.msra.mxu0 0.0
          %1431 = vmatpush.msra.mxu0 0.0
          %1432 = vmatpush.msra.mxu0 0.0
          %1433 = vmatpush.msra.mxu0 0.0
          %1434 = vmatpush.msra.mxu0 0.0
          %1435 = vmatpush.msra.mxu0 0.0
          %1436 = vmatpush.msra.mxu0 0.0
          %1437 = vmatpush.msra.mxu0 0.0
          %1438 = vmatpush.msra.mxu0 0.0
          %1439 = vmatpush.msra.mxu0 %v1420
          %1440 = vmatpush.msra.mxu0 %v1419
          %1441 = vmatpush.msra.mxu0 %v1418
          %1442 = vmatpush.msra.mxu0 %v1417
          %1443 = vmatmul.f32.gmra.mxu0 %v1422
          %v1444 = vpop.f32.mrf.mxu0
          %v1445 = vadd.f32 0.0, %v1444
          %1446 = vmatmul.f32.gmra.mxu0 %v1425
          %v1447 = vpop.f32.mrf.mxu0
          %v1448 = vadd.f32 0.0, %v1447
          %1449 = vdwg.mxu0
          %v1450 = vld [vmem:[%s10 + $0x100] sm:$0xff]
          %v1451 = vld [vmem:[%s10 + $0x108] sm:$0xff]
          %v1452 = vld [vmem:[%s10 + $0x110] sm:$0xff]
          %v1453 = vld [vmem:[%s10 + $0x118] sm:$0xff]
          %v1454 = vld [vmem:[%s10 + $0x120] sm:$0xff]
          %v1455 = vld [vmem:[%s10 + $0x128] sm:$0xff]
          %v1456 = vld [vmem:[%s10 + $0x130] sm:$0xff]
          %v1457 = vld [vmem:[%s10 + $0x138] sm:$0xff]
          %v1458 = vld [vmem:[%s10 + $0x140] sm:$0xff]
          %v1459 = vld [vmem:[%s10 + $0x148] sm:$0xff]
          %v1460 = vld [vmem:[%s10 + $0x150] sm:$0xff]
          %v1461 = vld [vmem:[%s10 + $0x158] sm:$0xff]
          %v1462 = vld [vmem:[%s10 + $0x160] sm:$0xff]
          %v1463 = vld [vmem:[%s10 + $0x168] sm:$0xff]
          %v1464 = vld [vmem:[%s10 + $0x170] sm:$0xff]
          %v1465 = vld [vmem:[%s10 + $0x178] sm:$0xff]
          %v1466 = vld [vmem:[#allocation9 + $0x10] sm:$0xf]
          %1467 = vmatpush.xpose.msra.mxu0 0.0
          %1468 = vmatpush.xpose.msra.mxu0 0.0
          %1469 = vmatpush.xpose.msra.mxu0 0.0
          %1470 = vmatpush.xpose.msra.mxu0 0.0
          %1471 = vmatpush.xpose.msra.mxu0 0.0
          %1472 = vmatpush.xpose.msra.mxu0 0.0
          %1473 = vmatpush.xpose.msra.mxu0 0.0
          %1474 = vmatpush.xpose.msra.mxu0 0.0
          %1475 = vmatpush.xpose.msra.mxu0 0.0
          %1476 = vmatpush.xpose.msra.mxu0 0.0
          %1477 = vmatpush.xpose.msra.mxu0 0.0
          %1478 = vmatpush.xpose.msra.mxu0 0.0
          %1479 = vmatpush.xpose.msra.mxu0 0.0
          %1480 = vmatpush.xpose.msra.mxu0 0.0
          %1481 = vmatpush.xpose.msra.mxu0 %v1448
          %1482 = vmatpush.xpose.msra.mxu0 %v1445
          %1483 = vmatmul.f32.gmra.mxu0 %v1466
          %v1484 = vpop.f32.mrf.mxu0
          %v1485 = vadd.f32 0.0, %v1484
          %1486 = vdwg.mxu0
          %v1488 = vrot.slane %v1485, 1
          %1489 = vrot.lane.b32.xlu0 %v1488, 16
          %v1490 = vpop.permute.xlu0 %1489
          %v1492 = vrot.slane %v1485, 2
          %1493 = vrot.lane.b32.xlu0 %v1492, 32
          %v1494 = vpop.permute.xlu0 %1493
          %v1496 = vrot.slane %v1485, 3
          %1497 = vrot.lane.b32.xlu0 %v1496, 48
          %v1498 = vpop.permute.xlu0 %1497
          %v1500 = vsel %vm801, %v1485, %v1490
          %v1501 = vsel %vm882, %v1500, %v1494
          %v1502 = vsel %vm884, %v1501, %v1498
          %v1503 = vperm.slane %v1502, 0
          %1504 = vmatpush.msra.mxu0 %v1465
          %1505 = vmatpush.msra.mxu0 %v1464
          %1506 = vmatpush.msra.mxu0 %v1463
          %1507 = vmatpush.msra.mxu0 %v1462
          %1508 = vmatpush.msra.mxu0 %v1461
          %1509 = vmatpush.msra.mxu0 %v1460
          %1510 = vmatpush.msra.mxu0 %v1459
          %1511 = vmatpush.msra.mxu0 %v1458
          %1512 = vmatpush.msra.mxu0 %v1457
          %1513 = vmatpush.msra.mxu0 %v1456
          %1514 = vmatpush.msra.mxu0 %v1455
          %1515 = vmatpush.msra.mxu0 %v1454
          %1516 = vmatpush.msra.mxu0 %v1453
          %1517 = vmatpush.msra.mxu0 %v1452
          %1518 = vmatpush.msra.mxu0 %v1451
          %1519 = vmatpush.msra.mxu0 %v1450
          %1520 = vmatmul.f32.gmra.mxu0 %v1445
          %v1521 = vpop.f32.mrf.mxu0
          %v1522 = vadd.f32 %v1503, %v1521
          %1523 = vmatmul.f32.gmra.mxu0 %v1448
          %v1524 = vpop.f32.mrf.mxu0
          %v1525 = vadd.f32 %v1503, %v1524
          %1526 = vdwg.mxu0
          %vm1527 = vcmp.gt.f32.partialorder %v1522, 0.0
          %vm1528 = vcmp.gt.f32.partialorder %v1525, 0.0
          %v1529 = vmul.f32 %v1522, 0.2
          %v1530 = vmul.f32 %v1525, 0.2
          %v1531 = vsel %vm1527, %v1522, %v1529
          %v1532 = vsel %vm1528, %v1525, %v1530
          %v1533 = vadd.f32 %v1531, %v916
          %v1534 = vadd.f32 %v1532, %v917
          %v1535 = vsel %vm920, %v1533, -inf
          %v1536 = vsel %vm920, %v1534, -inf
          %v1537 = vmax.f32 %v1535, %v1536
          %v1538 = vrot.slane %v1537, 4
          %v1539 = vmax.f32 %v1537, %v1538
          %v1540 = vrot.slane %v1539, 2
          %v1541 = vmax.f32 %v1539, %v1540
          %v1542 = vrot.slane %v1541, 1
          %v1543 = vmax.f32 %v1541, %v1542
          %v1544 = vsub.f32 %v1533, %v1543
          %v1545 = vsub.f32 %v1534, %v1543
          %v1546 = vmul.f32 %v1544, 1.442695
          %v1547 = vpow.pop %v1546
          %v1548 = vmul.f32 %v1545, 1.442695
          %v1549 = vpow.pop %v1548
          %v1550 = vsel %vm920, %v1547, 0.0
          %v1551 = vsel %vm920, %v1549, 0.0
          %v1552 = vadd.f32 %v1550, %v1551
          %v1553 = vrot.slane %v1552, 4
          %v1554 = vadd.f32 %v1552, %v1553
          %v1555 = vrot.slane %v1554, 2
          %v1556 = vadd.f32 %v1554, %v1555
          %v1557 = vrot.slane %v1556, 1
          %v1558 = vadd.f32 %v1556, %v1557
          %v1559 = vrcp.pop %v1558
          %v1560 = vmul.f32 %v1547, %v1559
          %v1561 = vmul.f32 %v1549, %v1559
          %v1562 = vld [vmem:[#allocation7 + $0x20] sm:$0xff]
          %v1563 = vld [vmem:[#allocation7 + $0x28] sm:$0xff]
          %1564 = vxpose.xlu0.b32.start [1/16] %v1560, 128
          %1565 = vxpose.xlu0.b32.cont [2/16] %v1561, 128
          %1566 = vxpose.xlu0.b32.cont [3/16] 0.0, 128
          %1567 = vxpose.xlu0.b32.cont [4/16] 0.0, 128
          %1568 = vxpose.xlu0.b32.cont [5/16] 0.0, 128
          %1569 = vxpose.xlu0.b32.cont [6/16] 0.0, 128
          %1570 = vxpose.xlu0.b32.cont [7/16] 0.0, 128
          %1571 = vxpose.xlu0.b32.cont [8/16] 0.0, 128
          %1572 = vxpose.xlu0.b32.cont [9/16] 0.0, 128
          %1573 = vxpose.xlu0.b32.cont [10/16] 0.0, 128
          %1574 = vxpose.xlu0.b32.cont [11/16] 0.0, 128
          %1575 = vxpose.xlu0.b32.cont [12/16] 0.0, 128
          %1576 = vxpose.xlu0.b32.cont [13/16] 0.0, 128
          %1577 = vxpose.xlu0.b32.cont [14/16] 0.0, 128
          %1578 = vxpose.xlu0.b32.cont [15/16] 0.0, 128
          %1579 = vxpose.xlu0.b32.end [16/16] 0.0, 128
          %v1580 = vpop.trf.xlu0
          %v1581 = vpop.trf.xlu0
          %v1582 = vpop.trf.xlu0
          %v1583 = vpop.trf.xlu0
          %v1584 = vpop.trf.xlu0
          %v1585 = vpop.trf.xlu0
          %v1586 = vpop.trf.xlu0
          %v1587 = vpop.trf.xlu0
          %v1588 = vpop.trf.xlu0
          %v1589 = vpop.trf.xlu0
          %v1590 = vpop.trf.xlu0
          %v1591 = vpop.trf.xlu0
          %v1592 = vpop.trf.xlu0
          %v1593 = vpop.trf.xlu0
          %v1594 = vpop.trf.xlu0
          %v1595 = vpop.trf.xlu0
          %v1597 = vsel %vm801, %v1580, 0
          %v1600 = vsel %vm801, %v1581, 0
          %v1603 = vsel %vm801, %v1582, 0
          %v1606 = vsel %vm801, %v1583, 0
          %v1609 = vsel %vm801, %v1584, 0
          %v1612 = vsel %vm801, %v1585, 0
          %v1615 = vsel %vm801, %v1586, 0
          %v1618 = vsel %vm801, %v1587, 0
          %1620 = vmatpush.msra.mxu0 0.0
          %1621 = vmatpush.msra.mxu0 0.0
          %1622 = vmatpush.msra.mxu0 0.0
          %1623 = vmatpush.msra.mxu0 0.0
          %1624 = vmatpush.msra.mxu0 0.0
          %1625 = vmatpush.msra.mxu0 0.0
          %1626 = vmatpush.msra.mxu0 0.0
          %1627 = vmatpush.msra.mxu0 0.0
          %1628 = vmatpush.msra.mxu0 0.0
          %1629 = vmatpush.msra.mxu0 0.0
          %1630 = vmatpush.msra.mxu0 0.0
          %1631 = vmatpush.msra.mxu0 0.0
          %1632 = vmatpush.msra.mxu0 0.0
          %1633 = vmatpush.msra.mxu0 0.0
          %1634 = vmatpush.msra.mxu0 %v1448
          %1635 = vmatpush.msra.mxu0 %v1445
          %1636 = vmatmul.f32.gmra.mxu0 %v1597
          %v1637 = vpop.f32.mrf.mxu0
          %v1638 = vadd.f32 0.0, %v1637
          %1639 = vmatmul.f32.gmra.mxu0 %v1600
          %v1640 = vpop.f32.mrf.mxu0
          %v1641 = vadd.f32 0.0, %v1640
          %1642 = vmatmul.f32.gmra.mxu0 %v1603
          %v1643 = vpop.f32.mrf.mxu0
          %v1644 = vadd.f32 0.0, %v1643
          %1645 = vmatmul.f32.gmra.mxu0 %v1606
          %v1646 = vpop.f32.mrf.mxu0
          %v1647 = vadd.f32 0.0, %v1646
          %1648 = vmatmul.f32.gmra.mxu0 %v1609
          %v1649 = vpop.f32.mrf.mxu0
          %v1650 = vadd.f32 0.0, %v1649
          %1651 = vmatmul.f32.gmra.mxu0 %v1612
          %v1652 = vpop.f32.mrf.mxu0
          %v1653 = vadd.f32 0.0, %v1652
          %1654 = vmatmul.f32.gmra.mxu0 %v1615
          %v1655 = vpop.f32.mrf.mxu0
          %v1656 = vadd.f32 0.0, %v1655
          %1657 = vmatmul.f32.gmra.mxu0 %v1618
          %v1658 = vpop.f32.mrf.mxu0
          %v1659 = vadd.f32 0.0, %v1658
          %1660 = vdwg.mxu0
          %v1661 = vmul.f32 %v1638, %v1047
          %v1662 = vmul.f32 %v1641, %v1048
          %v1663 = vmul.f32 %v1644, %v1049
          %v1664 = vmul.f32 %v1647, %v1050
          %v1665 = vmul.f32 %v1650, %v1051
          %v1666 = vmul.f32 %v1653, %v1052
          %v1667 = vmul.f32 %v1656, %v1053
          %v1668 = vmul.f32 %v1659, %v1054
          %v1669 = vadd.f32 %v1661, %v1663
          %v1670 = vadd.f32 %v1662, %v1664
          %v1671 = vadd.f32 %v1669, %v1665
          %v1672 = vadd.f32 %v1670, %v1666
          %v1673 = vadd.f32 %v1671, %v1667
          %v1674 = vadd.f32 %v1672, %v1668
          %v1675 = vadd.f32 %v1673, %v1562
          %v1676 = vadd.f32 %v1674, %v1563
          %v1677 = vld [vmem:[%s6 + $0x170] sm:$0xff]
          %v1678 = vld [vmem:[%s6 + $0x178] sm:$0xff]
          %v1679 = vld [vmem:[%s6 + $0x180] sm:$0xff]
          %v1680 = vld [vmem:[%s6 + $0x188] sm:$0xff]
          %v1681 = vld [vmem:[%s6 + $0x190] sm:$0xff]
          %v1682 = vld [vmem:[%s6 + $0x198] sm:$0xff]
          %v1683 = vld [vmem:[%s6 + $0x1a0] sm:$0xff]
          %v1684 = vld [vmem:[%s6 + $0x1a8] sm:$0xff]
          %v1685 = vld [vmem:[%s6 + $0x1b0] sm:$0xff]
          %v1686 = vld [vmem:[%s6 + $0x1b8] sm:$0xff]
          %v1687 = vld [vmem:[%s6 + $0x1c0] sm:$0xff]
          %v1688 = vld [vmem:[%s6 + $0x1c8] sm:$0xff]
          %v1689 = vld [vmem:[%s6 + $0x1d0] sm:$0xff]
          %v1690 = vld [vmem:[%s6 + $0x1d8] sm:$0xff]
          %v1691 = vld [vmem:[%s6 + $0x1e0] sm:$0xff]
          %v1692 = vld [vmem:[%s6 + $0x1e8] sm:$0xff]
          %v1693 = vld [vmem:[%s8 + $0x58] sm:$0xff]
          %v1694 = vld [vmem:[%s8 + $0x60] sm:$0xff]
          %1695 = vmatpush.msra.mxu0 %v1692
          %1696 = vmatpush.msra.mxu0 %v1691
          %1697 = vmatpush.msra.mxu0 %v1690
          %1698 = vmatpush.msra.mxu0 %v1689
          %1699 = vmatpush.msra.mxu0 %v1688
          %1700 = vmatpush.msra.mxu0 %v1687
          %1701 = vmatpush.msra.mxu0 %v1686
          %1702 = vmatpush.msra.mxu0 %v1685
          %1703 = vmatpush.msra.mxu0 %v1684
          %1704 = vmatpush.msra.mxu0 %v1683
          %1705 = vmatpush.msra.mxu0 %v1682
          %1706 = vmatpush.msra.mxu0 %v1681
          %1707 = vmatpush.msra.mxu0 %v1680
          %1708 = vmatpush.msra.mxu0 %v1679
          %1709 = vmatpush.msra.mxu0 %v1678
          %1710 = vmatpush.msra.mxu0 %v1677
          %1711 = vmatmul.f32.gmra.mxu0 %v1675
          %v1712 = vpop.f32.mrf.mxu0
          %v1713 = vadd.f32 %v1693, %v1712
          %1714 = vmatmul.f32.gmra.mxu0 %v1676
          %v1715 = vpop.f32.mrf.mxu0
          %v1716 = vadd.f32 %v1694, %v1715
          %1717 = vdwg.mxu0
          %v1718 = vld [vmem:[%s2] sm:$0xff]
          %v1720 = vsel %vm801, %v1718, 0
          %1722 = vmatpush.msra.mxu0 0.0
          %1723 = vmatpush.msra.mxu0 0.0
          %1724 = vmatpush.msra.mxu0 0.0
          %1725 = vmatpush.msra.mxu0 0.0
          %1726 = vmatpush.msra.mxu0 0.0
          %1727 = vmatpush.msra.mxu0 0.0
          %1728 = vmatpush.msra.mxu0 0.0
          %1729 = vmatpush.msra.mxu0 0.0
          %1730 = vmatpush.msra.mxu0 0.0
          %1731 = vmatpush.msra.mxu0 0.0
          %1732 = vmatpush.msra.mxu0 0.0
          %1733 = vmatpush.msra.mxu0 0.0
          %1734 = vmatpush.msra.mxu0 0.0
          %1735 = vmatpush.msra.mxu0 0.0
          %1736 = vmatpush.msra.mxu0 %v1716
          %1737 = vmatpush.msra.mxu0 %v1713
          %1738 = vmatmul.f32.gmra.mxu0 %v1720
          %v1739 = vpop.f32.mrf.mxu0
          %v1740 = vadd.f32 0.0, %v1739
          %1741 = vdwg.mxu0
          %v1742 = vld [vmem:[%s6 + $0x1f0] sm:$0xff]
          %v1743 = vld [vmem:[%s6 + $0x1f8] sm:$0xff]
          %v1744 = vld [vmem:[%s6 + $0x200] sm:$0xff]
          %v1745 = vld [vmem:[%s6 + $0x208] sm:$0xff]
          %v1746 = vld [vmem:[%s8 + $0x68] sm:$0xff]
          %v1748 = vsel %vm882, %v1740, 0
          %1750 = vmatpush.msra.mxu0 0.0
          %1751 = vmatpush.msra.mxu0 0.0
          %1752 = vmatpush.msra.mxu0 0.0
          %1753 = vmatpush.msra.mxu0 0.0
          %1754 = vmatpush.msra.mxu0 0.0
          %1755 = vmatpush.msra.mxu0 0.0
          %1756 = vmatpush.msra.mxu0 0.0
          %1757 = vmatpush.msra.mxu0 0.0
          %1758 = vmatpush.msra.mxu0 0.0
          %1759 = vmatpush.msra.mxu0 0.0
          %1760 = vmatpush.msra.mxu0 0.0
          %1761 = vmatpush.msra.mxu0 0.0
          %1762 = vmatpush.msra.mxu0 %v1745
          %1763 = vmatpush.msra.mxu0 %v1744
          %1764 = vmatpush.msra.mxu0 %v1743
          %1765 = vmatpush.msra.mxu0 %v1742
          %1766 = vmatmul.f32.gmra.mxu0 %v1748
          %v1767 = vpop.f32.mrf.mxu0
          %v1768 = vadd.f32 %v1746, %v1767
          %1769 = vdwg.mxu0
          %v1770 = vmax.f32 %v1768, 0.0
          %v1771 = vld [vmem:[#allocation6 + $0x110] sm:$0xff]
          %v1772 = vld [vmem:[#allocation6 + $0x118] sm:$0xff]
          %v1773 = vld [vmem:[#allocation6 + $0x120] sm:$0xff]
          %v1774 = vld [vmem:[#allocation6 + $0x128] sm:$0xff]
          %v1775 = vld [vmem:[#allocation7 + $0xc8] sm:$0xff]
          %v1777 = vsel %vm882, %v1770, 0
          %1779 = vmatpush.msra.mxu0 0.0
          %1780 = vmatpush.msra.mxu0 0.0
          %1781 = vmatpush.msra.mxu0 0.0
          %1782 = vmatpush.msra.mxu0 0.0
          %1783 = vmatpush.msra.mxu0 0.0
          %1784 = vmatpush.msra.mxu0 0.0
          %1785 = vmatpush.msra.mxu0 0.0
          %1786 = vmatpush.msra.mxu0 0.0
          %1787 = vmatpush.msra.mxu0 0.0
          %1788 = vmatpush.msra.mxu0 0.0
          %1789 = vmatpush.msra.mxu0 0.0
          %1790 = vmatpush.msra.mxu0 0.0
          %1791 = vmatpush.msra.mxu0 %v1774
          %1792 = vmatpush.msra.mxu0 %v1773
          %1793 = vmatpush.msra.mxu0 %v1772
          %1794 = vmatpush.msra.mxu0 %v1771
          %1795 = vmatmul.f32.gmra.mxu0 %v1777
          %v1796 = vpop.f32.mrf.mxu0
          %v1797 = vadd.f32 %v1775, %v1796
          %1798 = vdwg.mxu0
          %1799 = vst [vmem:[%s518] sm:$0xff] %v1797
        $region104: #{model_forward.1} parent=71 // pred_fallthru
          _
        %p1800 = scmp.eq.s32.totalorder %s28, 2
        // Predicated region
        $region105: #{model_forward.1} parent=71 // pred_check
          %p1801 = pneg %p1800
        $region106: #{model_forward.1} parent=71 // pred_check_branch
          %1803 = sbr.rel (%p1801) target = $region108
        $region107: #{model_forward.1} parent=71 // pred_region
          %v1804 = vld [vmem:[%s0] sm:$0xff]
          %v1805 = vld [vmem:[%s0 + $0x8] sm:$0xff]
          %v1806 = vld [vmem:[#allocation6 + $0x50] sm:$0xff]
          %v1807 = vld [vmem:[#allocation6 + $0x58] sm:$0xff]
          %v1808 = vld [vmem:[#allocation7 + $0x30] sm:$0xff]
          %v1809 = vld [vmem:[#allocation7 + $0x38] sm:$0xff]
          %vm1810 = vcmask 130048
          %v1812 = vsel %vm1810, %v1804, 0
          %v1815 = vsel %vm1810, %v1805, 0
          %1817 = vmatpush.msra.mxu0 0.0
          %1818 = vmatpush.msra.mxu0 0.0
          %1819 = vmatpush.msra.mxu0 0.0
          %1820 = vmatpush.msra.mxu0 0.0
          %1821 = vmatpush.msra.mxu0 0.0
          %1822 = vmatpush.msra.mxu0 0.0
          %1823 = vmatpush.msra.mxu0 0.0
          %1824 = vmatpush.msra.mxu0 0.0
          %1825 = vmatpush.msra.mxu0 0.0
          %1826 = vmatpush.msra.mxu0 0.0
          %1827 = vmatpush.msra.mxu0 0.0
          %1828 = vmatpush.msra.mxu0 0.0
          %1829 = vmatpush.msra.mxu0 0.0
          %1830 = vmatpush.msra.mxu0 0.0
          %1831 = vmatpush.msra.mxu0 %v1807
          %1832 = vmatpush.msra.mxu0 %v1806
          %1833 = vmatmul.f32.gmra.mxu0 %v1812
          %v1834 = vpop.f32.mrf.mxu0
          %v1835 = vadd.f32 %v1808, %v1834
          %1836 = vmatmul.f32.gmra.mxu0 %v1815
          %v1837 = vpop.f32.mrf.mxu0
          %v1838 = vadd.f32 %v1809, %v1837
          %1839 = vdwg.mxu0
          %v1840 = vld [vmem:[#allocation6 + $0x60] sm:$0xff]
          %v1841 = vld [vmem:[#allocation6 + $0x68] sm:$0xff]
          %v1842 = vld [vmem:[#allocation7 + $0x40] sm:$0xff]
          %v1843 = vld [vmem:[#allocation7 + $0x48] sm:$0xff]
          %1844 = vmatpush.msra.mxu0 0.0
          %1845 = vmatpush.msra.mxu0 0.0
          %1846 = vmatpush.msra.mxu0 0.0
          %1847 = vmatpush.msra.mxu0 0.0
          %1848 = vmatpush.msra.mxu0 0.0
          %1849 = vmatpush.msra.mxu0 0.0
          %1850 = vmatpush.msra.mxu0 0.0
          %1851 = vmatpush.msra.mxu0 0.0
          %1852 = vmatpush.msra.mxu0 0.0
          %1853 = vmatpush.msra.mxu0 0.0
          %1854 = vmatpush.msra.mxu0 0.0
          %1855 = vmatpush.msra.mxu0 0.0
          %1856 = vmatpush.msra.mxu0 0.0
          %1857 = vmatpush.msra.mxu0 0.0
          %1858 = vmatpush.msra.mxu0 %v1841
          %1859 = vmatpush.msra.mxu0 %v1840
          %1860 = vmatmul.f32.gmra.mxu0 %v1812
          %v1861 = vpop.f32.mrf.mxu0
          %v1862 = vadd.f32 %v1842, %v1861
          %1863 = vmatmul.f32.gmra.mxu0 %v1815
          %v1864 = vpop.f32.mrf.mxu0
          %v1865 = vadd.f32 %v1843, %v1864
          %1866 = vdwg.mxu0
          %v1868 = vrot.slane %v1862, 1
          %v1870 = vrot.slane %v1862, 2
          %v1872 = vrot.slane %v1862, 3
          %v1874 = vrot.slane %v1862, 4
          %v1876 = vrot.slane %v1862, 5
          %v1878 = vrot.slane %v1862, 6
          %v1880 = vrot.slane %v1862, 7
          %v1883 = vrot.slane %v1865, 1
          %v1885 = vrot.slane %v1865, 2
          %v1887 = vrot.slane %v1865, 3
          %v1889 = vrot.slane %v1865, 4
          %v1891 = vrot.slane %v1865, 5
          %v1893 = vrot.slane %v1865, 6
          %v1895 = vrot.slane %v1865, 7
          %v1897 = vperm.slane %v1862, 0
          %v1898 = vperm.slane %v1868, 0
          %v1899 = vperm.slane %v1870, 0
          %v1900 = vperm.slane %v1872, 0
          %v1901 = vperm.slane %v1874, 0
          %v1902 = vperm.slane %v1876, 0
          %v1903 = vperm.slane %v1878, 0
          %v1904 = vperm.slane %v1880, 0
          %v1905 = vperm.slane %v1865, 0
          %v1906 = vperm.slane %v1883, 0
          %v1907 = vperm.slane %v1885, 0
          %v1908 = vperm.slane %v1887, 0
          %v1909 = vperm.slane %v1889, 0
          %v1910 = vperm.slane %v1891, 0
          %v1911 = vperm.slane %v1893, 0
          %v1912 = vperm.slane %v1895, 0
          %v1913 = vadd.f32 %v1835, %v1897
          %v1914 = vadd.f32 %v1835, %v1898
          %v1915 = vadd.f32 %v1835, %v1899
          %v1916 = vadd.f32 %v1835, %v1900
          %v1917 = vadd.f32 %v1835, %v1901
          %v1918 = vadd.f32 %v1835, %v1902
          %v1919 = vadd.f32 %v1835, %v1903
          %v1920 = vadd.f32 %v1835, %v1904
          %v1921 = vadd.f32 %v1835, %v1905
          %v1922 = vadd.f32 %v1835, %v1906
          %v1923 = vadd.f32 %v1835, %v1907
          %v1924 = vadd.f32 %v1835, %v1908
          %v1925 = vadd.f32 %v1835, %v1909
          %v1926 = vadd.f32 %v1835, %v1910
          %v1927 = vadd.f32 %v1835, %v1911
          %v1928 = vadd.f32 %v1835, %v1912
          %v1929 = vadd.f32 %v1838, %v1897
          %v1930 = vadd.f32 %v1838, %v1898
          %v1931 = vadd.f32 %v1838, %v1899
          %v1932 = vadd.f32 %v1838, %v1900
          %v1933 = vadd.f32 %v1838, %v1901
          %v1934 = vadd.f32 %v1838, %v1902
          %v1935 = vadd.f32 %v1838, %v1903
          %v1936 = vadd.f32 %v1838, %v1904
          %v1937 = vadd.f32 %v1838, %v1905
          %v1938 = vadd.f32 %v1838, %v1906
          %v1939 = vadd.f32 %v1838, %v1907
          %v1940 = vadd.f32 %v1838, %v1908
          %v1941 = vadd.f32 %v1838, %v1909
          %v1942 = vadd.f32 %v1838, %v1910
          %v1943 = vadd.f32 %v1838, %v1911
          %v1944 = vadd.f32 %v1838, %v1912
          %vm1945 = vcmp.gt.f32.partialorder %v1913, 0.0
          %vm1946 = vcmp.gt.f32.partialorder %v1914, 0.0
          %vm1947 = vcmp.gt.f32.partialorder %v1915, 0.0
          %vm1948 = vcmp.gt.f32.partialorder %v1916, 0.0
          %vm1949 = vcmp.gt.f32.partialorder %v1917, 0.0
          %vm1950 = vcmp.gt.f32.partialorder %v1918, 0.0
          %vm1951 = vcmp.gt.f32.partialorder %v1919, 0.0
          %vm1952 = vcmp.gt.f32.partialorder %v1920, 0.0
          %vm1953 = vcmp.gt.f32.partialorder %v1921, 0.0
          %vm1954 = vcmp.gt.f32.partialorder %v1922, 0.0
          %vm1955 = vcmp.gt.f32.partialorder %v1923, 0.0
          %vm1956 = vcmp.gt.f32.partialorder %v1924, 0.0
          %vm1957 = vcmp.gt.f32.partialorder %v1925, 0.0
          %vm1958 = vcmp.gt.f32.partialorder %v1926, 0.0
          %vm1959 = vcmp.gt.f32.partialorder %v1927, 0.0
          %vm1960 = vcmp.gt.f32.partialorder %v1928, 0.0
          %vm1961 = vcmp.gt.f32.partialorder %v1929, 0.0
          %vm1962 = vcmp.gt.f32.partialorder %v1930, 0.0
          %vm1963 = vcmp.gt.f32.partialorder %v1931, 0.0
          %vm1964 = vcmp.gt.f32.partialorder %v1932, 0.0
          %vm1965 = vcmp.gt.f32.partialorder %v1933, 0.0
          %vm1966 = vcmp.gt.f32.partialorder %v1934, 0.0
          %vm1967 = vcmp.gt.f32.partialorder %v1935, 0.0
          %vm1968 = vcmp.gt.f32.partialorder %v1936, 0.0
          %vm1969 = vcmp.gt.f32.partialorder %v1937, 0.0
          %vm1970 = vcmp.gt.f32.partialorder %v1938, 0.0
          %vm1971 = vcmp.gt.f32.partialorder %v1939, 0.0
          %vm1972 = vcmp.gt.f32.partialorder %v1940, 0.0
          %vm1973 = vcmp.gt.f32.partialorder %v1941, 0.0
          %vm1974 = vcmp.gt.f32.partialorder %v1942, 0.0
          %vm1975 = vcmp.gt.f32.partialorder %v1943, 0.0
          %vm1976 = vcmp.gt.f32.partialorder %v1944, 0.0
          %v1977 = vmul.f32 %v1913, 0.2
          %v1978 = vmul.f32 %v1914, 0.2
          %v1979 = vmul.f32 %v1915, 0.2
          %v1980 = vmul.f32 %v1916, 0.2
          %v1981 = vmul.f32 %v1917, 0.2
          %v1982 = vmul.f32 %v1918, 0.2
          %v1983 = vmul.f32 %v1919, 0.2
          %v1984 = vmul.f32 %v1920, 0.2
          %v1985 = vmul.f32 %v1921, 0.2
          %v1986 = vmul.f32 %v1922, 0.2
          %v1987 = vmul.f32 %v1923, 0.2
          %v1988 = vmul.f32 %v1924, 0.2
          %v1989 = vmul.f32 %v1925, 0.2
          %v1990 = vmul.f32 %v1926, 0.2
          %v1991 = vmul.f32 %v1927, 0.2
          %v1992 = vmul.f32 %v1928, 0.2
          %v1993 = vmul.f32 %v1929, 0.2
          %v1994 = vmul.f32 %v1930, 0.2
          %v1995 = vmul.f32 %v1931, 0.2
          %v1996 = vmul.f32 %v1932, 0.2
          %v1997 = vmul.f32 %v1933, 0.2
          %v1998 = vmul.f32 %v1934, 0.2
          %v1999 = vmul.f32 %v1935, 0.2
          %v2000 = vmul.f32 %v1936, 0.2
          %v2001 = vmul.f32 %v1937, 0.2
          %v2002 = vmul.f32 %v1938, 0.2
          %v2003 = vmul.f32 %v1939, 0.2
          %v2004 = vmul.f32 %v1940, 0.2
          %v2005 = vmul.f32 %v1941, 0.2
          %v2006 = vmul.f32 %v1942, 0.2
          %v2007 = vmul.f32 %v1943, 0.2
          %v2008 = vmul.f32 %v1944, 0.2
          %v2009 = vsel %vm1945, %v1913, %v1977
          %v2010 = vsel %vm1946, %v1914, %v1978
          %v2011 = vsel %vm1947, %v1915, %v1979
          %v2012 = vsel %vm1948, %v1916, %v1980
          %v2013 = vsel %vm1949, %v1917, %v1981
          %v2014 = vsel %vm1950, %v1918, %v1982
          %v2015 = vsel %vm1951, %v1919, %v1983
          %v2016 = vsel %vm1952, %v1920, %v1984
          %v2017 = vsel %vm1953, %v1921, %v1985
          %v2018 = vsel %vm1954, %v1922, %v1986
          %v2019 = vsel %vm1955, %v1923, %v1987
          %v2020 = vsel %vm1956, %v1924, %v1988
          %v2021 = vsel %vm1957, %v1925, %v1989
          %v2022 = vsel %vm1958, %v1926, %v1990
          %v2023 = vsel %vm1959, %v1927, %v1991
          %v2024 = vsel %vm1960, %v1928, %v1992
          %v2025 = vsel %vm1961, %v1929, %v1993
          %v2026 = vsel %vm1962, %v1930, %v1994
          %v2027 = vsel %vm1963, %v1931, %v1995
          %v2028 = vsel %vm1964, %v1932, %v1996
          %v2029 = vsel %vm1965, %v1933, %v1997
          %v2030 = vsel %vm1966, %v1934, %v1998
          %v2031 = vsel %vm1967, %v1935, %v1999
          %v2032 = vsel %vm1968, %v1936, %v2000
          %v2033 = vsel %vm1969, %v1937, %v2001
          %v2034 = vsel %vm1970, %v1938, %v2002
          %v2035 = vsel %vm1971, %v1939, %v2003
          %v2036 = vsel %vm1972, %v1940, %v2004
          %v2037 = vsel %vm1973, %v1941, %v2005
          %v2038 = vsel %vm1974, %v1942, %v2006
          %v2039 = vsel %vm1975, %v1943, %v2007
          %v2040 = vsel %vm1976, %v1944, %v2008
          %v2041 = vld [vmem:[#allocation10] sm:$0x1]
          %v2042 = vperm.slane %v2041, 0
          %v2043 = vmul.f32 %v2009, %v2042
          %v2044 = vmul.f32 %v2010, %v2042
          %v2045 = vmul.f32 %v2011, %v2042
          %v2046 = vmul.f32 %v2012, %v2042
          %v2047 = vmul.f32 %v2013, %v2042
          %v2048 = vmul.f32 %v2014, %v2042
          %v2049 = vmul.f32 %v2015, %v2042
          %v2050 = vmul.f32 %v2016, %v2042
          %v2051 = vmul.f32 %v2017, %v2042
          %v2052 = vmul.f32 %v2018, %v2042
          %v2053 = vmul.f32 %v2019, %v2042
          %v2054 = vmul.f32 %v2020, %v2042
          %v2055 = vmul.f32 %v2021, %v2042
          %v2056 = vmul.f32 %v2022, %v2042
          %v2057 = vmul.f32 %v2023, %v2042
          %v2058 = vmul.f32 %v2024, %v2042
          %v2059 = vmul.f32 %v2025, %v2042
          %v2060 = vmul.f32 %v2026, %v2042
          %v2061 = vmul.f32 %v2027, %v2042
          %v2062 = vmul.f32 %v2028, %v2042
          %v2063 = vmul.f32 %v2029, %v2042
          %v2064 = vmul.f32 %v2030, %v2042
          %v2065 = vmul.f32 %v2031, %v2042
          %v2066 = vmul.f32 %v2032, %v2042
          %v2067 = vmul.f32 %v2033, %v2042
          %v2068 = vmul.f32 %v2034, %v2042
          %v2069 = vmul.f32 %v2035, %v2042
          %v2070 = vmul.f32 %v2036, %v2042
          %v2071 = vmul.f32 %v2037, %v2042
          %v2072 = vmul.f32 %v2038, %v2042
          %v2073 = vmul.f32 %v2039, %v2042
          %v2074 = vmul.f32 %v2040, %v2042
          %v2075 = vld [vmem:[#allocation4] sm:$0xff]
          %v2076 = vld [vmem:[#allocation4 + $0x8] sm:$0xff]
          %v2077 = vld [vmem:[#allocation4 + $0x10] sm:$0xff]
          %v2078 = vld [vmem:[#allocation4 + $0x18] sm:$0xff]
          %v2079 = vld [vmem:[#allocation4 + $0x20] sm:$0xff]
          %v2080 = vld [vmem:[#allocation4 + $0x28] sm:$0xff]
          %v2081 = vld [vmem:[#allocation4 + $0x30] sm:$0xff]
          %v2082 = vld [vmem:[#allocation4 + $0x38] sm:$0xff]
          %v2083 = vld [vmem:[#allocation4 + $0x40] sm:$0xff]
          %v2084 = vld [vmem:[#allocation4 + $0x48] sm:$0xff]
          %v2085 = vld [vmem:[#allocation4 + $0x50] sm:$0xff]
          %v2086 = vld [vmem:[#allocation4 + $0x58] sm:$0xff]
          %v2087 = vld [vmem:[#allocation4 + $0x60] sm:$0xff]
          %v2088 = vld [vmem:[#allocation4 + $0x68] sm:$0xff]
          %v2089 = vld [vmem:[#allocation4 + $0x70] sm:$0xff]
          %v2090 = vld [vmem:[#allocation4 + $0x78] sm:$0xff]
          %v2091 = vld [vmem:[#allocation4 + $0x80] sm:$0xff]
          %v2092 = vld [vmem:[#allocation4 + $0x88] sm:$0xff]
          %v2093 = vld [vmem:[#allocation4 + $0x90] sm:$0xff]
          %v2094 = vld [vmem:[#allocation4 + $0x98] sm:$0xff]
          %v2095 = vld [vmem:[#allocation4 + $0xa0] sm:$0xff]
          %v2096 = vld [vmem:[#allocation4 + $0xa8] sm:$0xff]
          %v2097 = vld [vmem:[#allocation4 + $0xb0] sm:$0xff]
          %v2098 = vld [vmem:[#allocation4 + $0xb8] sm:$0xff]
          %v2099 = vld [vmem:[#allocation4 + $0xc0] sm:$0xff]
          %v2100 = vld [vmem:[#allocation4 + $0xc8] sm:$0xff]
          %v2101 = vld [vmem:[#allocation4 + $0xd0] sm:$0xff]
          %v2102 = vld [vmem:[#allocation4 + $0xd8] sm:$0xff]
          %v2103 = vld [vmem:[#allocation4 + $0xe0] sm:$0xff]
          %v2104 = vld [vmem:[#allocation4 + $0xe8] sm:$0xff]
          %v2105 = vld [vmem:[#allocation4 + $0xf0] sm:$0xff]
          %v2106 = vld [vmem:[#allocation4 + $0xf8] sm:$0xff]
          %v2107 = vld [vmem:[#allocation4 + $0x100] sm:$0xff]
          %v2108 = vld [vmem:[#allocation4 + $0x108] sm:$0xff]
          %v2109 = vld [vmem:[#allocation4 + $0x110] sm:$0xff]
          %v2110 = vld [vmem:[#allocation4 + $0x118] sm:$0xff]
          %v2111 = vld [vmem:[#allocation4 + $0x120] sm:$0xff]
          %v2112 = vld [vmem:[#allocation4 + $0x128] sm:$0xff]
          %v2113 = vld [vmem:[#allocation4 + $0x130] sm:$0xff]
          %v2114 = vld [vmem:[#allocation4 + $0x138] sm:$0xff]
          %v2115 = vld [vmem:[#allocation4 + $0x140] sm:$0xff]
          %v2116 = vld [vmem:[#allocation4 + $0x148] sm:$0xff]
          %v2117 = vld [vmem:[#allocation4 + $0x150] sm:$0xff]
          %v2118 = vld [vmem:[#allocation4 + $0x158] sm:$0xff]
          %v2119 = vld [vmem:[#allocation4 + $0x160] sm:$0xff]
          %v2120 = vld [vmem:[#allocation4 + $0x168] sm:$0xff]
          %v2121 = vld [vmem:[#allocation4 + $0x170] sm:$0xff]
          %v2122 = vld [vmem:[#allocation4 + $0x178] sm:$0xff]
          %v2123 = vld [vmem:[#allocation4 + $0x180] sm:$0xff]
          %v2124 = vld [vmem:[#allocation4 + $0x188] sm:$0xff]
          %v2125 = vld [vmem:[#allocation4 + $0x190] sm:$0xff]
          %v2126 = vld [vmem:[#allocation4 + $0x198] sm:$0xff]
          %v2127 = vld [vmem:[#allocation4 + $0x1a0] sm:$0xff]
          %v2128 = vld [vmem:[#allocation4 + $0x1a8] sm:$0xff]
          %v2129 = vld [vmem:[#allocation4 + $0x1b0] sm:$0xff]
          %v2130 = vld [vmem:[#allocation4 + $0x1b8] sm:$0xff]
          %v2131 = vld [vmem:[#allocation4 + $0x1c0] sm:$0xff]
          %v2132 = vld [vmem:[#allocation4 + $0x1c8] sm:$0xff]
          %v2133 = vld [vmem:[#allocation4 + $0x1d0] sm:$0xff]
          %v2134 = vld [vmem:[#allocation4 + $0x1d8] sm:$0xff]
          %v2135 = vld [vmem:[#allocation4 + $0x1e0] sm:$0xff]
          %v2136 = vld [vmem:[#allocation4 + $0x1e8] sm:$0xff]
          %v2137 = vld [vmem:[#allocation4 + $0x1f0] sm:$0xff]
          %v2138 = vld [vmem:[#allocation4 + $0x1f8] sm:$0xff]
          %v2139 = vld [vmem:[#allocation4 + $0x200] sm:$0xff]
          %v2140 = vld [vmem:[#allocation4 + $0x208] sm:$0xff]
          %v2141 = vld [vmem:[#allocation4 + $0x210] sm:$0xff]
          %v2142 = vld [vmem:[#allocation4 + $0x218] sm:$0xff]
          %v2143 = vld [vmem:[#allocation4 + $0x220] sm:$0xff]
          %v2144 = vld [vmem:[#allocation4 + $0x228] sm:$0xff]
          %v2145 = vld [vmem:[#allocation4 + $0x230] sm:$0xff]
          %v2146 = vld [vmem:[#allocation4 + $0x238] sm:$0xff]
          %v2147 = vld [vmem:[#allocation4 + $0x240] sm:$0xff]
          %v2148 = vld [vmem:[#allocation4 + $0x248] sm:$0xff]
          %v2149 = vld [vmem:[#allocation4 + $0x250] sm:$0xff]
          %v2150 = vld [vmem:[#allocation4 + $0x258] sm:$0xff]
          %v2151 = vld [vmem:[#allocation4 + $0x260] sm:$0xff]
          %v2152 = vld [vmem:[#allocation4 + $0x268] sm:$0xff]
          %v2153 = vld [vmem:[#allocation4 + $0x270] sm:$0xff]
          %v2154 = vld [vmem:[#allocation4 + $0x278] sm:$0xff]
          %v2155 = vld [vmem:[#allocation4 + $0x280] sm:$0xff]
          %v2156 = vld [vmem:[#allocation4 + $0x288] sm:$0xff]
          %v2157 = vld [vmem:[#allocation4 + $0x290] sm:$0xff]
          %v2158 = vld [vmem:[#allocation4 + $0x298] sm:$0xff]
          %v2159 = vld [vmem:[#allocation4 + $0x2a0] sm:$0xff]
          %v2160 = vld [vmem:[#allocation4 + $0x2a8] sm:$0xff]
          %v2161 = vld [vmem:[#allocation4 + $0x2b0] sm:$0xff]
          %v2162 = vld [vmem:[#allocation4 + $0x2b8] sm:$0xff]
          %v2163 = vld [vmem:[#allocation4 + $0x2c0] sm:$0xff]
          %v2164 = vld [vmem:[#allocation4 + $0x2c8] sm:$0xff]
          %v2165 = vld [vmem:[#allocation4 + $0x2d0] sm:$0xff]
          %v2166 = vld [vmem:[#allocation4 + $0x2d8] sm:$0xff]
          %v2167 = vld [vmem:[#allocation4 + $0x2e0] sm:$0xff]
          %v2168 = vld [vmem:[#allocation4 + $0x2e8] sm:$0xff]
          %v2169 = vld [vmem:[#allocation4 + $0x2f0] sm:$0xff]
          %v2170 = vld [vmem:[#allocation4 + $0x2f8] sm:$0xff]
          %v2171 = vld [vmem:[#allocation4 + $0x300] sm:$0xff]
          %v2172 = vld [vmem:[#allocation4 + $0x308] sm:$0xff]
          %v2173 = vld [vmem:[#allocation4 + $0x310] sm:$0xff]
          %v2174 = vld [vmem:[#allocation4 + $0x318] sm:$0xff]
          %v2175 = vld [vmem:[#allocation4 + $0x320] sm:$0xff]
          %v2176 = vld [vmem:[#allocation4 + $0x328] sm:$0xff]
          %v2177 = vld [vmem:[#allocation4 + $0x330] sm:$0xff]
          %v2178 = vld [vmem:[#allocation4 + $0x338] sm:$0xff]
          %v2179 = vld [vmem:[#allocation4 + $0x340] sm:$0xff]
          %v2180 = vld [vmem:[#allocation4 + $0x348] sm:$0xff]
          %v2181 = vld [vmem:[#allocation4 + $0x350] sm:$0xff]
          %v2182 = vld [vmem:[#allocation4 + $0x358] sm:$0xff]
          %v2183 = vld [vmem:[#allocation4 + $0x360] sm:$0xff]
          %v2184 = vld [vmem:[#allocation4 + $0x368] sm:$0xff]
          %v2185 = vld [vmem:[#allocation4 + $0x370] sm:$0xff]
          %v2186 = vld [vmem:[#allocation4 + $0x378] sm:$0xff]
          %v2187 = vld [vmem:[#allocation4 + $0x380] sm:$0xff]
          %v2188 = vld [vmem:[#allocation4 + $0x388] sm:$0xff]
          %v2189 = vld [vmem:[#allocation4 + $0x390] sm:$0xff]
          %v2190 = vld [vmem:[#allocation4 + $0x398] sm:$0xff]
          %v2191 = vld [vmem:[#allocation4 + $0x3a0] sm:$0xff]
          %v2192 = vld [vmem:[#allocation4 + $0x3a8] sm:$0xff]
          %v2193 = vld [vmem:[#allocation4 + $0x3b0] sm:$0xff]
          %v2194 = vld [vmem:[#allocation4 + $0x3b8] sm:$0xff]
          %v2195 = vld [vmem:[#allocation4 + $0x3c0] sm:$0xff]
          %v2196 = vld [vmem:[#allocation4 + $0x3c8] sm:$0xff]
          %v2197 = vld [vmem:[#allocation4 + $0x3d0] sm:$0xff]
          %v2198 = vld [vmem:[#allocation4 + $0x3d8] sm:$0xff]
          %v2199 = vld [vmem:[#allocation4 + $0x3e0] sm:$0xff]
          %v2200 = vld [vmem:[#allocation4 + $0x3e8] sm:$0xff]
          %v2201 = vld [vmem:[#allocation4 + $0x3f0] sm:$0xff]
          %v2202 = vld [vmem:[#allocation4 + $0x3f8] sm:$0xff]
          %v2203 = vld [vmem:[%s3] sm:$0xff]
          %v2204 = vld [vmem:[%s3 + $0x8] sm:$0xff]
          %2205 = vmatpush.xpose.msra.mxu0 0.0
          %2206 = vmatpush.xpose.msra.mxu0 0.0
          %2207 = vmatpush.xpose.msra.mxu0 0.0
          %2208 = vmatpush.xpose.msra.mxu0 0.0
          %2209 = vmatpush.xpose.msra.mxu0 0.0
          %2210 = vmatpush.xpose.msra.mxu0 0.0
          %2211 = vmatpush.xpose.msra.mxu0 0.0
          %2212 = vmatpush.xpose.msra.mxu0 0.0
          %2213 = vmatpush.xpose.msra.mxu0 %v2187
          %2214 = vmatpush.xpose.msra.mxu0 %v2171
          %2215 = vmatpush.xpose.msra.mxu0 %v2155
          %2216 = vmatpush.xpose.msra.mxu0 %v2139
          %2217 = vmatpush.xpose.msra.mxu0 %v2123
          %2218 = vmatpush.xpose.msra.mxu0 %v2107
          %2219 = vmatpush.xpose.msra.mxu0 %v2091
          %2220 = vmatpush.xpose.msra.mxu0 %v2075
          %2221 = vmatmul.f32.gmra.mxu0 %v2043
          %v2222 = vpop.f32.mrf.mxu0
          %v2223 = vadd.f32 %v2203, %v2222
          %2224 = vmatmul.f32.gmra.mxu0 %v2059
          %v2225 = vpop.f32.mrf.mxu0
          %v2226 = vadd.f32 %v2204, %v2225
          %2227 = vdwg.mxu0
          %2228 = vmatpush.xpose.msra.mxu0 0.0
          %2229 = vmatpush.xpose.msra.mxu0 0.0
          %2230 = vmatpush.xpose.msra.mxu0 0.0
          %2231 = vmatpush.xpose.msra.mxu0 0.0
          %2232 = vmatpush.xpose.msra.mxu0 0.0
          %2233 = vmatpush.xpose.msra.mxu0 0.0
          %2234 = vmatpush.xpose.msra.mxu0 0.0
          %2235 = vmatpush.xpose.msra.mxu0 0.0
          %2236 = vmatpush.xpose.msra.mxu0 %v2188
          %2237 = vmatpush.xpose.msra.mxu0 %v2172
          %2238 = vmatpush.xpose.msra.mxu0 %v2156
          %2239 = vmatpush.xpose.msra.mxu0 %v2140
          %2240 = vmatpush.xpose.msra.mxu0 %v2124
          %2241 = vmatpush.xpose.msra.mxu0 %v2108
          %2242 = vmatpush.xpose.msra.mxu0 %v2092
          %2243 = vmatpush.xpose.msra.mxu0 %v2076
          %2244 = vmatmul.f32.gmra.mxu0 %v2044
          %v2245 = vpop.f32.mrf.mxu0
          %v2246 = vadd.f32 %v2223, %v2245
          %2247 = vmatmul.f32.gmra.mxu0 %v2060
          %v2248 = vpop.f32.mrf.mxu0
          %v2249 = vadd.f32 %v2226, %v2248
          %2250 = vdwg.mxu0
          %2251 = vmatpush.xpose.msra.mxu0 0.0
          %2252 = vmatpush.xpose.msra.mxu0 0.0
          %2253 = vmatpush.xpose.msra.mxu0 0.0
          %2254 = vmatpush.xpose.msra.mxu0 0.0
          %2255 = vmatpush.xpose.msra.mxu0 0.0
          %2256 = vmatpush.xpose.msra.mxu0 0.0
          %2257 = vmatpush.xpose.msra.mxu0 0.0
          %2258 = vmatpush.xpose.msra.mxu0 0.0
          %2259 = vmatpush.xpose.msra.mxu0 %v2189
          %2260 = vmatpush.xpose.msra.mxu0 %v2173
          %2261 = vmatpush.xpose.msra.mxu0 %v2157
          %2262 = vmatpush.xpose.msra.mxu0 %v2141
          %2263 = vmatpush.xpose.msra.mxu0 %v2125
          %2264 = vmatpush.xpose.msra.mxu0 %v2109
          %2265 = vmatpush.xpose.msra.mxu0 %v2093
          %2266 = vmatpush.xpose.msra.mxu0 %v2077
          %2267 = vmatmul.f32.gmra.mxu0 %v2045
          %v2268 = vpop.f32.mrf.mxu0
          %v2269 = vadd.f32 %v2246, %v2268
          %2270 = vmatmul.f32.gmra.mxu0 %v2061
          %v2271 = vpop.f32.mrf.mxu0
          %v2272 = vadd.f32 %v2249, %v2271
          %2273 = vdwg.mxu0
          %2274 = vmatpush.xpose.msra.mxu0 0.0
          %2275 = vmatpush.xpose.msra.mxu0 0.0
          %2276 = vmatpush.xpose.msra.mxu0 0.0
          %2277 = vmatpush.xpose.msra.mxu0 0.0
          %2278 = vmatpush.xpose.msra.mxu0 0.0
          %2279 = vmatpush.xpose.msra.mxu0 0.0
          %2280 = vmatpush.xpose.msra.mxu0 0.0
          %2281 = vmatpush.xpose.msra.mxu0 0.0
          %2282 = vmatpush.xpose.msra.mxu0 %v2190
          %2283 = vmatpush.xpose.msra.mxu0 %v2174
          %2284 = vmatpush.xpose.msra.mxu0 %v2158
          %2285 = vmatpush.xpose.msra.mxu0 %v2142
          %2286 = vmatpush.xpose.msra.mxu0 %v2126
          %2287 = vmatpush.xpose.msra.mxu0 %v2110
          %2288 = vmatpush.xpose.msra.mxu0 %v2094
          %2289 = vmatpush.xpose.msra.mxu0 %v2078
          %2290 = vmatmul.f32.gmra.mxu0 %v2046
          %v2291 = vpop.f32.mrf.mxu0
          %v2292 = vadd.f32 %v2269, %v2291
          %2293 = vmatmul.f32.gmra.mxu0 %v2062
          %v2294 = vpop.f32.mrf.mxu0
          %v2295 = vadd.f32 %v2272, %v2294
          %2296 = vdwg.mxu0
          %2297 = vmatpush.xpose.msra.mxu0 0.0
          %2298 = vmatpush.xpose.msra.mxu0 0.0
          %2299 = vmatpush.xpose.msra.mxu0 0.0
          %2300 = vmatpush.xpose.msra.mxu0 0.0
          %2301 = vmatpush.xpose.msra.mxu0 0.0
          %2302 = vmatpush.xpose.msra.mxu0 0.0
          %2303 = vmatpush.xpose.msra.mxu0 0.0
          %2304 = vmatpush.xpose.msra.mxu0 0.0
          %2305 = vmatpush.xpose.msra.mxu0 %v2191
          %2306 = vmatpush.xpose.msra.mxu0 %v2175
          %2307 = vmatpush.xpose.msra.mxu0 %v2159
          %2308 = vmatpush.xpose.msra.mxu0 %v2143
          %2309 = vmatpush.xpose.msra.mxu0 %v2127
          %2310 = vmatpush.xpose.msra.mxu0 %v2111
          %2311 = vmatpush.xpose.msra.mxu0 %v2095
          %2312 = vmatpush.xpose.msra.mxu0 %v2079
          %2313 = vmatmul.f32.gmra.mxu0 %v2047
          %v2314 = vpop.f32.mrf.mxu0
          %v2315 = vadd.f32 %v2292, %v2314
          %2316 = vmatmul.f32.gmra.mxu0 %v2063
          %v2317 = vpop.f32.mrf.mxu0
          %v2318 = vadd.f32 %v2295, %v2317
          %2319 = vdwg.mxu0
          %2320 = vmatpush.xpose.msra.mxu0 0.0
          %2321 = vmatpush.xpose.msra.mxu0 0.0
          %2322 = vmatpush.xpose.msra.mxu0 0.0
          %2323 = vmatpush.xpose.msra.mxu0 0.0
          %2324 = vmatpush.xpose.msra.mxu0 0.0
          %2325 = vmatpush.xpose.msra.mxu0 0.0
          %2326 = vmatpush.xpose.msra.mxu0 0.0
          %2327 = vmatpush.xpose.msra.mxu0 0.0
          %2328 = vmatpush.xpose.msra.mxu0 %v2192
          %2329 = vmatpush.xpose.msra.mxu0 %v2176
          %2330 = vmatpush.xpose.msra.mxu0 %v2160
          %2331 = vmatpush.xpose.msra.mxu0 %v2144
          %2332 = vmatpush.xpose.msra.mxu0 %v2128
          %2333 = vmatpush.xpose.msra.mxu0 %v2112
          %2334 = vmatpush.xpose.msra.mxu0 %v2096
          %2335 = vmatpush.xpose.msra.mxu0 %v2080
          %2336 = vmatmul.f32.gmra.mxu0 %v2048
          %v2337 = vpop.f32.mrf.mxu0
          %v2338 = vadd.f32 %v2315, %v2337
          %2339 = vmatmul.f32.gmra.mxu0 %v2064
          %v2340 = vpop.f32.mrf.mxu0
          %v2341 = vadd.f32 %v2318, %v2340
          %2342 = vdwg.mxu0
          %2343 = vmatpush.xpose.msra.mxu0 0.0
          %2344 = vmatpush.xpose.msra.mxu0 0.0
          %2345 = vmatpush.xpose.msra.mxu0 0.0
          %2346 = vmatpush.xpose.msra.mxu0 0.0
          %2347 = vmatpush.xpose.msra.mxu0 0.0
          %2348 = vmatpush.xpose.msra.mxu0 0.0
          %2349 = vmatpush.xpose.msra.mxu0 0.0
          %2350 = vmatpush.xpose.msra.mxu0 0.0
          %2351 = vmatpush.xpose.msra.mxu0 %v2193
          %2352 = vmatpush.xpose.msra.mxu0 %v2177
          %2353 = vmatpush.xpose.msra.mxu0 %v2161
          %2354 = vmatpush.xpose.msra.mxu0 %v2145
          %2355 = vmatpush.xpose.msra.mxu0 %v2129
          %2356 = vmatpush.xpose.msra.mxu0 %v2113
          %2357 = vmatpush.xpose.msra.mxu0 %v2097
          %2358 = vmatpush.xpose.msra.mxu0 %v2081
          %2359 = vmatmul.f32.gmra.mxu0 %v2049
          %v2360 = vpop.f32.mrf.mxu0
          %v2361 = vadd.f32 %v2338, %v2360
          %2362 = vmatmul.f32.gmra.mxu0 %v2065
          %v2363 = vpop.f32.mrf.mxu0
          %v2364 = vadd.f32 %v2341, %v2363
          %2365 = vdwg.mxu0
          %2366 = vmatpush.xpose.msra.mxu0 0.0
          %2367 = vmatpush.xpose.msra.mxu0 0.0
          %2368 = vmatpush.xpose.msra.mxu0 0.0
          %2369 = vmatpush.xpose.msra.mxu0 0.0
          %2370 = vmatpush.xpose.msra.mxu0 0.0
          %2371 = vmatpush.xpose.msra.mxu0 0.0
          %2372 = vmatpush.xpose.msra.mxu0 0.0
          %2373 = vmatpush.xpose.msra.mxu0 0.0
          %2374 = vmatpush.xpose.msra.mxu0 %v2194
          %2375 = vmatpush.xpose.msra.mxu0 %v2178
          %2376 = vmatpush.xpose.msra.mxu0 %v2162
          %2377 = vmatpush.xpose.msra.mxu0 %v2146
          %2378 = vmatpush.xpose.msra.mxu0 %v2130
          %2379 = vmatpush.xpose.msra.mxu0 %v2114
          %2380 = vmatpush.xpose.msra.mxu0 %v2098
          %2381 = vmatpush.xpose.msra.mxu0 %v2082
          %2382 = vmatmul.f32.gmra.mxu0 %v2050
          %v2383 = vpop.f32.mrf.mxu0
          %v2384 = vadd.f32 %v2361, %v2383
          %2385 = vmatmul.f32.gmra.mxu0 %v2066
          %v2386 = vpop.f32.mrf.mxu0
          %v2387 = vadd.f32 %v2364, %v2386
          %2388 = vdwg.mxu0
          %2389 = vmatpush.xpose.msra.mxu0 0.0
          %2390 = vmatpush.xpose.msra.mxu0 0.0
          %2391 = vmatpush.xpose.msra.mxu0 0.0
          %2392 = vmatpush.xpose.msra.mxu0 0.0
          %2393 = vmatpush.xpose.msra.mxu0 0.0
          %2394 = vmatpush.xpose.msra.mxu0 0.0
          %2395 = vmatpush.xpose.msra.mxu0 0.0
          %2396 = vmatpush.xpose.msra.mxu0 0.0
          %2397 = vmatpush.xpose.msra.mxu0 %v2195
          %2398 = vmatpush.xpose.msra.mxu0 %v2179
          %2399 = vmatpush.xpose.msra.mxu0 %v2163
          %2400 = vmatpush.xpose.msra.mxu0 %v2147
          %2401 = vmatpush.xpose.msra.mxu0 %v2131
          %2402 = vmatpush.xpose.msra.mxu0 %v2115
          %2403 = vmatpush.xpose.msra.mxu0 %v2099
          %2404 = vmatpush.xpose.msra.mxu0 %v2083
          %2405 = vmatmul.f32.gmra.mxu0 %v2051
          %v2406 = vpop.f32.mrf.mxu0
          %v2407 = vadd.f32 %v2384, %v2406
          %2408 = vmatmul.f32.gmra.mxu0 %v2067
          %v2409 = vpop.f32.mrf.mxu0
          %v2410 = vadd.f32 %v2387, %v2409
          %2411 = vdwg.mxu0
          %2412 = vmatpush.xpose.msra.mxu0 0.0
          %2413 = vmatpush.xpose.msra.mxu0 0.0
          %2414 = vmatpush.xpose.msra.mxu0 0.0
          %2415 = vmatpush.xpose.msra.mxu0 0.0
          %2416 = vmatpush.xpose.msra.mxu0 0.0
          %2417 = vmatpush.xpose.msra.mxu0 0.0
          %2418 = vmatpush.xpose.msra.mxu0 0.0
          %2419 = vmatpush.xpose.msra.mxu0 0.0
          %2420 = vmatpush.xpose.msra.mxu0 %v2196
          %2421 = vmatpush.xpose.msra.mxu0 %v2180
          %2422 = vmatpush.xpose.msra.mxu0 %v2164
          %2423 = vmatpush.xpose.msra.mxu0 %v2148
          %2424 = vmatpush.xpose.msra.mxu0 %v2132
          %2425 = vmatpush.xpose.msra.mxu0 %v2116
          %2426 = vmatpush.xpose.msra.mxu0 %v2100
          %2427 = vmatpush.xpose.msra.mxu0 %v2084
          %2428 = vmatmul.f32.gmra.mxu0 %v2052
          %v2429 = vpop.f32.mrf.mxu0
          %v2430 = vadd.f32 %v2407, %v2429
          %2431 = vmatmul.f32.gmra.mxu0 %v2068
          %v2432 = vpop.f32.mrf.mxu0
          %v2433 = vadd.f32 %v2410, %v2432
          %2434 = vdwg.mxu0
          %2435 = vmatpush.xpose.msra.mxu0 0.0
          %2436 = vmatpush.xpose.msra.mxu0 0.0
          %2437 = vmatpush.xpose.msra.mxu0 0.0
          %2438 = vmatpush.xpose.msra.mxu0 0.0
          %2439 = vmatpush.xpose.msra.mxu0 0.0
          %2440 = vmatpush.xpose.msra.mxu0 0.0
          %2441 = vmatpush.xpose.msra.mxu0 0.0
          %2442 = vmatpush.xpose.msra.mxu0 0.0
          %2443 = vmatpush.xpose.msra.mxu0 %v2197
          %2444 = vmatpush.xpose.msra.mxu0 %v2181
          %2445 = vmatpush.xpose.msra.mxu0 %v2165
          %2446 = vmatpush.xpose.msra.mxu0 %v2149
          %2447 = vmatpush.xpose.msra.mxu0 %v2133
          %2448 = vmatpush.xpose.msra.mxu0 %v2117
          %2449 = vmatpush.xpose.msra.mxu0 %v2101
          %2450 = vmatpush.xpose.msra.mxu0 %v2085
          %2451 = vmatmul.f32.gmra.mxu0 %v2053
          %v2452 = vpop.f32.mrf.mxu0
          %v2453 = vadd.f32 %v2430, %v2452
          %2454 = vmatmul.f32.gmra.mxu0 %v2069
          %v2455 = vpop.f32.mrf.mxu0
          %v2456 = vadd.f32 %v2433, %v2455
          %2457 = vdwg.mxu0
          %2458 = vmatpush.xpose.msra.mxu0 0.0
          %2459 = vmatpush.xpose.msra.mxu0 0.0
          %2460 = vmatpush.xpose.msra.mxu0 0.0
          %2461 = vmatpush.xpose.msra.mxu0 0.0
          %2462 = vmatpush.xpose.msra.mxu0 0.0
          %2463 = vmatpush.xpose.msra.mxu0 0.0
          %2464 = vmatpush.xpose.msra.mxu0 0.0
          %2465 = vmatpush.xpose.msra.mxu0 0.0
          %2466 = vmatpush.xpose.msra.mxu0 %v2198
          %2467 = vmatpush.xpose.msra.mxu0 %v2182
          %2468 = vmatpush.xpose.msra.mxu0 %v2166
          %2469 = vmatpush.xpose.msra.mxu0 %v2150
          %2470 = vmatpush.xpose.msra.mxu0 %v2134
          %2471 = vmatpush.xpose.msra.mxu0 %v2118
          %2472 = vmatpush.xpose.msra.mxu0 %v2102
          %2473 = vmatpush.xpose.msra.mxu0 %v2086
          %2474 = vmatmul.f32.gmra.mxu0 %v2054
          %v2475 = vpop.f32.mrf.mxu0
          %v2476 = vadd.f32 %v2453, %v2475
          %2477 = vmatmul.f32.gmra.mxu0 %v2070
          %v2478 = vpop.f32.mrf.mxu0
          %v2479 = vadd.f32 %v2456, %v2478
          %2480 = vdwg.mxu0
          %2481 = vmatpush.xpose.msra.mxu0 0.0
          %2482 = vmatpush.xpose.msra.mxu0 0.0
          %2483 = vmatpush.xpose.msra.mxu0 0.0
          %2484 = vmatpush.xpose.msra.mxu0 0.0
          %2485 = vmatpush.xpose.msra.mxu0 0.0
          %2486 = vmatpush.xpose.msra.mxu0 0.0
          %2487 = vmatpush.xpose.msra.mxu0 0.0
          %2488 = vmatpush.xpose.msra.mxu0 0.0
          %2489 = vmatpush.xpose.msra.mxu0 %v2199
          %2490 = vmatpush.xpose.msra.mxu0 %v2183
          %2491 = vmatpush.xpose.msra.mxu0 %v2167
          %2492 = vmatpush.xpose.msra.mxu0 %v2151
          %2493 = vmatpush.xpose.msra.mxu0 %v2135
          %2494 = vmatpush.xpose.msra.mxu0 %v2119
          %2495 = vmatpush.xpose.msra.mxu0 %v2103
          %2496 = vmatpush.xpose.msra.mxu0 %v2087
          %2497 = vmatmul.f32.gmra.mxu0 %v2055
          %v2498 = vpop.f32.mrf.mxu0
          %v2499 = vadd.f32 %v2476, %v2498
          %2500 = vmatmul.f32.gmra.mxu0 %v2071
          %v2501 = vpop.f32.mrf.mxu0
          %v2502 = vadd.f32 %v2479, %v2501
          %2503 = vdwg.mxu0
          %2504 = vmatpush.xpose.msra.mxu0 0.0
          %2505 = vmatpush.xpose.msra.mxu0 0.0
          %2506 = vmatpush.xpose.msra.mxu0 0.0
          %2507 = vmatpush.xpose.msra.mxu0 0.0
          %2508 = vmatpush.xpose.msra.mxu0 0.0
          %2509 = vmatpush.xpose.msra.mxu0 0.0
          %2510 = vmatpush.xpose.msra.mxu0 0.0
          %2511 = vmatpush.xpose.msra.mxu0 0.0
          %2512 = vmatpush.xpose.msra.mxu0 %v2200
          %2513 = vmatpush.xpose.msra.mxu0 %v2184
          %2514 = vmatpush.xpose.msra.mxu0 %v2168
          %2515 = vmatpush.xpose.msra.mxu0 %v2152
          %2516 = vmatpush.xpose.msra.mxu0 %v2136
          %2517 = vmatpush.xpose.msra.mxu0 %v2120
          %2518 = vmatpush.xpose.msra.mxu0 %v2104
          %2519 = vmatpush.xpose.msra.mxu0 %v2088
          %2520 = vmatmul.f32.gmra.mxu0 %v2056
          %v2521 = vpop.f32.mrf.mxu0
          %v2522 = vadd.f32 %v2499, %v2521
          %2523 = vmatmul.f32.gmra.mxu0 %v2072
          %v2524 = vpop.f32.mrf.mxu0
          %v2525 = vadd.f32 %v2502, %v2524
          %2526 = vdwg.mxu0
          %2527 = vmatpush.xpose.msra.mxu0 0.0
          %2528 = vmatpush.xpose.msra.mxu0 0.0
          %2529 = vmatpush.xpose.msra.mxu0 0.0
          %2530 = vmatpush.xpose.msra.mxu0 0.0
          %2531 = vmatpush.xpose.msra.mxu0 0.0
          %2532 = vmatpush.xpose.msra.mxu0 0.0
          %2533 = vmatpush.xpose.msra.mxu0 0.0
          %2534 = vmatpush.xpose.msra.mxu0 0.0
          %2535 = vmatpush.xpose.msra.mxu0 %v2201
          %2536 = vmatpush.xpose.msra.mxu0 %v2185
          %2537 = vmatpush.xpose.msra.mxu0 %v2169
          %2538 = vmatpush.xpose.msra.mxu0 %v2153
          %2539 = vmatpush.xpose.msra.mxu0 %v2137
          %2540 = vmatpush.xpose.msra.mxu0 %v2121
          %2541 = vmatpush.xpose.msra.mxu0 %v2105
          %2542 = vmatpush.xpose.msra.mxu0 %v2089
          %2543 = vmatmul.f32.gmra.mxu0 %v2057
          %v2544 = vpop.f32.mrf.mxu0
          %v2545 = vadd.f32 %v2522, %v2544
          %2546 = vmatmul.f32.gmra.mxu0 %v2073
          %v2547 = vpop.f32.mrf.mxu0
          %v2548 = vadd.f32 %v2525, %v2547
          %2549 = vdwg.mxu0
          %2550 = vmatpush.xpose.msra.mxu0 0.0
          %2551 = vmatpush.xpose.msra.mxu0 0.0
          %2552 = vmatpush.xpose.msra.mxu0 0.0
          %2553 = vmatpush.xpose.msra.mxu0 0.0
          %2554 = vmatpush.xpose.msra.mxu0 0.0
          %2555 = vmatpush.xpose.msra.mxu0 0.0
          %2556 = vmatpush.xpose.msra.mxu0 0.0
          %2557 = vmatpush.xpose.msra.mxu0 0.0
          %2558 = vmatpush.xpose.msra.mxu0 %v2202
          %2559 = vmatpush.xpose.msra.mxu0 %v2186
          %2560 = vmatpush.xpose.msra.mxu0 %v2170
          %2561 = vmatpush.xpose.msra.mxu0 %v2154
          %2562 = vmatpush.xpose.msra.mxu0 %v2138
          %2563 = vmatpush.xpose.msra.mxu0 %v2122
          %2564 = vmatpush.xpose.msra.mxu0 %v2106
          %2565 = vmatpush.xpose.msra.mxu0 %v2090
          %2566 = vmatmul.f32.gmra.mxu0 %v2058
          %v2567 = vpop.f32.mrf.mxu0
          %v2568 = vadd.f32 %v2545, %v2567
          %2569 = vmatmul.f32.gmra.mxu0 %v2074
          %v2570 = vpop.f32.mrf.mxu0
          %v2571 = vadd.f32 %v2548, %v2570
          %2572 = vdwg.mxu0
          %vm2573 = vcmask 523264
          %v2574 = vsel %vm2573, %v2568, -inf
          %v2575 = vsel %vm2573, %v2571, -inf
          %v2576 = vmax.f32 %v2574, %v2575
          %v2577 = vrot.slane %v2576, 4
          %v2578 = vmax.f32 %v2576, %v2577
          %v2579 = vrot.slane %v2578, 2
          %v2580 = vmax.f32 %v2578, %v2579
          %v2581 = vrot.slane %v2580, 1
          %v2582 = vmax.f32 %v2580, %v2581
          %v2583 = vsub.f32 %v2568, %v2582
          %v2584 = vsub.f32 %v2571, %v2582
          %v2585 = vmul.f32 %v2583, 1.442695
          %v2586 = vpow.pop %v2585
          %v2587 = vmul.f32 %v2584, 1.442695
          %v2588 = vpow.pop %v2587
          %v2589 = vsel %vm2573, %v2586, 0.0
          %v2590 = vsel %vm2573, %v2588, 0.0
          %v2591 = vadd.f32 %v2589, %v2590
          %v2592 = vrot.slane %v2591, 4
          %v2593 = vadd.f32 %v2591, %v2592
          %v2594 = vrot.slane %v2593, 2
          %v2595 = vadd.f32 %v2593, %v2594
          %v2596 = vrot.slane %v2595, 1
          %v2597 = vadd.f32 %v2595, %v2596
          %v2598 = vrcp.pop %v2597
          %v2599 = vmul.f32 %v2586, %v2598
          %v2600 = vmul.f32 %v2588, %v2598
          %v2601 = vld [vmem:[#allocation7 + $0x50] sm:$0xff]
          %v2602 = vld [vmem:[#allocation7 + $0x58] sm:$0xff]
          %2603 = vxpose.xlu0.b32.start [1/16] %v2599, 128
          %2604 = vxpose.xlu0.b32.cont [2/16] %v2600, 128
          %2605 = vxpose.xlu0.b32.cont [3/16] 0.0, 128
          %2606 = vxpose.xlu0.b32.cont [4/16] 0.0, 128
          %2607 = vxpose.xlu0.b32.cont [5/16] 0.0, 128
          %2608 = vxpose.xlu0.b32.cont [6/16] 0.0, 128
          %2609 = vxpose.xlu0.b32.cont [7/16] 0.0, 128
          %2610 = vxpose.xlu0.b32.cont [8/16] 0.0, 128
          %2611 = vxpose.xlu0.b32.cont [9/16] 0.0, 128
          %2612 = vxpose.xlu0.b32.cont [10/16] 0.0, 128
          %2613 = vxpose.xlu0.b32.cont [11/16] 0.0, 128
          %2614 = vxpose.xlu0.b32.cont [12/16] 0.0, 128
          %2615 = vxpose.xlu0.b32.cont [13/16] 0.0, 128
          %2616 = vxpose.xlu0.b32.cont [14/16] 0.0, 128
          %2617 = vxpose.xlu0.b32.cont [15/16] 0.0, 128
          %2618 = vxpose.xlu0.b32.end [16/16] 0.0, 128
          %v2619 = vpop.trf.xlu0
          %v2620 = vpop.trf.xlu0
          %v2621 = vpop.trf.xlu0
          %v2622 = vpop.trf.xlu0
          %v2623 = vpop.trf.xlu0
          %v2624 = vpop.trf.xlu0
          %v2625 = vpop.trf.xlu0
          %v2626 = vpop.trf.xlu0
          %v2627 = vpop.trf.xlu0
          %v2628 = vpop.trf.xlu0
          %v2629 = vpop.trf.xlu0
          %v2630 = vpop.trf.xlu0
          %v2631 = vpop.trf.xlu0
          %v2632 = vpop.trf.xlu0
          %v2633 = vpop.trf.xlu0
          %v2634 = vpop.trf.xlu0
          %v2636 = vsel %vm1810, %v2619, 0
          %v2639 = vsel %vm1810, %v2620, 0
          %v2642 = vsel %vm1810, %v2621, 0
          %v2645 = vsel %vm1810, %v2622, 0
          %v2648 = vsel %vm1810, %v2623, 0
          %v2651 = vsel %vm1810, %v2624, 0
          %v2654 = vsel %vm1810, %v2625, 0
          %v2657 = vsel %vm1810, %v2626, 0
          %2659 = vmatpush.msra.mxu0 0.0
          %2660 = vmatpush.msra.mxu0 0.0
          %2661 = vmatpush.msra.mxu0 0.0
          %2662 = vmatpush.msra.mxu0 0.0
          %2663 = vmatpush.msra.mxu0 0.0
          %2664 = vmatpush.msra.mxu0 0.0
          %2665 = vmatpush.msra.mxu0 0.0
          %2666 = vmatpush.msra.mxu0 0.0
          %2667 = vmatpush.msra.mxu0 0.0
          %2668 = vmatpush.msra.mxu0 0.0
          %2669 = vmatpush.msra.mxu0 0.0
          %2670 = vmatpush.msra.mxu0 0.0
          %2671 = vmatpush.msra.mxu0 0.0
          %2672 = vmatpush.msra.mxu0 0.0
          %2673 = vmatpush.msra.mxu0 %v1838
          %2674 = vmatpush.msra.mxu0 %v1835
          %2675 = vmatmul.f32.gmra.mxu0 %v2636
          %v2676 = vpop.f32.mrf.mxu0
          %v2677 = vadd.f32 0.0, %v2676
          %2678 = vmatmul.f32.gmra.mxu0 %v2639
          %v2679 = vpop.f32.mrf.mxu0
          %v2680 = vadd.f32 0.0, %v2679
          %2681 = vmatmul.f32.gmra.mxu0 %v2642
          %v2682 = vpop.f32.mrf.mxu0
          %v2683 = vadd.f32 0.0, %v2682
          %2684 = vmatmul.f32.gmra.mxu0 %v2645
          %v2685 = vpop.f32.mrf.mxu0
          %v2686 = vadd.f32 0.0, %v2685
          %2687 = vmatmul.f32.gmra.mxu0 %v2648
          %v2688 = vpop.f32.mrf.mxu0
          %v2689 = vadd.f32 0.0, %v2688
          %2690 = vmatmul.f32.gmra.mxu0 %v2651
          %v2691 = vpop.f32.mrf.mxu0
          %v2692 = vadd.f32 0.0, %v2691
          %2693 = vmatmul.f32.gmra.mxu0 %v2654
          %v2694 = vpop.f32.mrf.mxu0
          %v2695 = vadd.f32 0.0, %v2694
          %2696 = vmatmul.f32.gmra.mxu0 %v2657
          %v2697 = vpop.f32.mrf.mxu0
          %v2698 = vadd.f32 0.0, %v2697
          %2699 = vdwg.mxu0
          %v2700 = vld [vmem:[#allocation2] sm:$0xff]
          %v2701 = vld [vmem:[#allocation2 + $0x8] sm:$0xff]
          %v2702 = vld [vmem:[#allocation2 + $0x10] sm:$0xff]
          %v2703 = vld [vmem:[#allocation2 + $0x18] sm:$0xff]
          %v2704 = vld [vmem:[#allocation2 + $0x20] sm:$0xff]
          %v2705 = vld [vmem:[#allocation2 + $0x28] sm:$0xff]
          %v2706 = vld [vmem:[#allocation2 + $0x30] sm:$0xff]
          %v2707 = vld [vmem:[#allocation2 + $0x38] sm:$0xff]
          %v2708 = vmul.f32 %v2677, %v2700
          %v2709 = vmul.f32 %v2680, %v2701
          %v2710 = vmul.f32 %v2683, %v2702
          %v2711 = vmul.f32 %v2686, %v2703
          %v2712 = vmul.f32 %v2689, %v2704
          %v2713 = vmul.f32 %v2692, %v2705
          %v2714 = vmul.f32 %v2695, %v2706
          %v2715 = vmul.f32 %v2698, %v2707
          %v2716 = vadd.f32 %v2708, %v2710
          %v2717 = vadd.f32 %v2709, %v2711
          %v2718 = vadd.f32 %v2716, %v2712
          %v2719 = vadd.f32 %v2717, %v2713
          %v2720 = vadd.f32 %v2718, %v2714
          %v2721 = vadd.f32 %v2719, %v2715
          %v2722 = vadd.f32 %v2720, %v2601
          %v2723 = vadd.f32 %v2721, %v2602
          %v2724 = vld [vmem:[%s6 + $0x210] sm:$0xff]
          %v2725 = vld [vmem:[%s6 + $0x218] sm:$0xff]
          %v2726 = vld [vmem:[%s6 + $0x220] sm:$0xff]
          %v2727 = vld [vmem:[%s6 + $0x228] sm:$0xff]
          %v2728 = vld [vmem:[%s6 + $0x230] sm:$0xff]
          %v2729 = vld [vmem:[%s6 + $0x238] sm:$0xff]
          %v2730 = vld [vmem:[%s6 + $0x240] sm:$0xff]
          %v2731 = vld [vmem:[%s6 + $0x248] sm:$0xff]
          %v2732 = vld [vmem:[%s6 + $0x250] sm:$0xff]
          %v2733 = vld [vmem:[%s6 + $0x258] sm:$0xff]
          %v2734 = vld [vmem:[%s6 + $0x260] sm:$0xff]
          %v2735 = vld [vmem:[%s6 + $0x268] sm:$0xff]
          %v2736 = vld [vmem:[%s6 + $0x270] sm:$0xff]
          %v2737 = vld [vmem:[%s6 + $0x278] sm:$0xff]
          %v2738 = vld [vmem:[%s6 + $0x280] sm:$0xff]
          %v2739 = vld [vmem:[%s6 + $0x288] sm:$0xff]
          %v2740 = vld [vmem:[%s8 + $0x70] sm:$0xff]
          %v2741 = vld [vmem:[%s8 + $0x78] sm:$0xff]
          %2742 = vmatpush.msra.mxu0 %v2739
          %2743 = vmatpush.msra.mxu0 %v2738
          %2744 = vmatpush.msra.mxu0 %v2737
          %2745 = vmatpush.msra.mxu0 %v2736
          %2746 = vmatpush.msra.mxu0 %v2735
          %2747 = vmatpush.msra.mxu0 %v2734
          %2748 = vmatpush.msra.mxu0 %v2733
          %2749 = vmatpush.msra.mxu0 %v2732
          %2750 = vmatpush.msra.mxu0 %v2731
          %2751 = vmatpush.msra.mxu0 %v2730
          %2752 = vmatpush.msra.mxu0 %v2729
          %2753 = vmatpush.msra.mxu0 %v2728
          %2754 = vmatpush.msra.mxu0 %v2727
          %2755 = vmatpush.msra.mxu0 %v2726
          %2756 = vmatpush.msra.mxu0 %v2725
          %2757 = vmatpush.msra.mxu0 %v2724
          %2758 = vmatmul.f32.gmra.mxu0 %v2722
          %v2759 = vpop.f32.mrf.mxu0
          %v2760 = vadd.f32 %v2740, %v2759
          %2761 = vmatmul.f32.gmra.mxu0 %v2723
          %v2762 = vpop.f32.mrf.mxu0
          %v2763 = vadd.f32 %v2741, %v2762
          %2764 = vdwg.mxu0
          %v2765 = vmax.f32 %v2760, 0.0
          %v2766 = vmax.f32 %v2763, 0.0
          %v2767 = vld [vmem:[#allocation6 + $0x70] sm:$0xff]
          %v2768 = vld [vmem:[#allocation6 + $0x78] sm:$0xff]
          %v2769 = vld [vmem:[#allocation6 + $0x80] sm:$0xff]
          %v2770 = vld [vmem:[#allocation6 + $0x88] sm:$0xff]
          %v2771 = vld [vmem:[#allocation7 + $0x60] sm:$0xff]
          %v2772 = vld [vmem:[#allocation7 + $0x68] sm:$0xff]
          %vm2773 = vcmask 261120
          %v2775 = vsel %vm2773, %v2765, 0
          %v2778 = vsel %vm2773, %v2766, 0
          %2780 = vmatpush.msra.mxu0 0.0
          %2781 = vmatpush.msra.mxu0 0.0
          %2782 = vmatpush.msra.mxu0 0.0
          %2783 = vmatpush.msra.mxu0 0.0
          %2784 = vmatpush.msra.mxu0 0.0
          %2785 = vmatpush.msra.mxu0 0.0
          %2786 = vmatpush.msra.mxu0 0.0
          %2787 = vmatpush.msra.mxu0 0.0
          %2788 = vmatpush.msra.mxu0 0.0
          %2789 = vmatpush.msra.mxu0 0.0
          %2790 = vmatpush.msra.mxu0 0.0
          %2791 = vmatpush.msra.mxu0 0.0
          %2792 = vmatpush.msra.mxu0 %v2770
          %2793 = vmatpush.msra.mxu0 %v2769
          %2794 = vmatpush.msra.mxu0 %v2768
          %2795 = vmatpush.msra.mxu0 %v2767
          %2796 = vmatmul.f32.gmra.mxu0 %v2775
          %v2797 = vpop.f32.mrf.mxu0
          %v2798 = vadd.f32 %v2771, %v2797
          %2799 = vmatmul.f32.gmra.mxu0 %v2778
          %v2800 = vpop.f32.mrf.mxu0
          %v2801 = vadd.f32 %v2772, %v2800
          %2802 = vdwg.mxu0
          %v2803 = vld [vmem:[#allocation6 + $0x90] sm:$0xff]
          %v2804 = vld [vmem:[#allocation6 + $0x98] sm:$0xff]
          %v2805 = vld [vmem:[#allocation6 + $0xa0] sm:$0xff]
          %v2806 = vld [vmem:[#allocation6 + $0xa8] sm:$0xff]
          %v2807 = vld [vmem:[#allocation7 + $0x70] sm:$0xff]
          %v2808 = vld [vmem:[#allocation7 + $0x78] sm:$0xff]
          %2809 = vmatpush.msra.mxu0 0.0
          %2810 = vmatpush.msra.mxu0 0.0
          %2811 = vmatpush.msra.mxu0 0.0
          %2812 = vmatpush.msra.mxu0 0.0
          %2813 = vmatpush.msra.mxu0 0.0
          %2814 = vmatpush.msra.mxu0 0.0
          %2815 = vmatpush.msra.mxu0 0.0
          %2816 = vmatpush.msra.mxu0 0.0
          %2817 = vmatpush.msra.mxu0 0.0
          %2818 = vmatpush.msra.mxu0 0.0
          %2819 = vmatpush.msra.mxu0 0.0
          %2820 = vmatpush.msra.mxu0 0.0
          %2821 = vmatpush.msra.mxu0 %v2806
          %2822 = vmatpush.msra.mxu0 %v2805
          %2823 = vmatpush.msra.mxu0 %v2804
          %2824 = vmatpush.msra.mxu0 %v2803
          %2825 = vmatmul.f32.gmra.mxu0 %v2775
          %v2826 = vpop.f32.mrf.mxu0
          %v2827 = vadd.f32 %v2807, %v2826
          %2828 = vmatmul.f32.gmra.mxu0 %v2778
          %v2829 = vpop.f32.mrf.mxu0
          %v2830 = vadd.f32 %v2808, %v2829
          %2831 = vdwg.mxu0
          %v2833 = vrot.slane %v2827, 1
          %v2835 = vrot.slane %v2827, 2
          %v2837 = vrot.slane %v2827, 3
          %v2839 = vrot.slane %v2827, 4
          %v2841 = vrot.slane %v2827, 5
          %v2843 = vrot.slane %v2827, 6
          %v2845 = vrot.slane %v2827, 7
          %v2848 = vrot.slane %v2830, 1
          %v2850 = vrot.slane %v2830, 2
          %v2852 = vrot.slane %v2830, 3
          %v2854 = vrot.slane %v2830, 4
          %v2856 = vrot.slane %v2830, 5
          %v2858 = vrot.slane %v2830, 6
          %v2860 = vrot.slane %v2830, 7
          %v2862 = vperm.slane %v2827, 0
          %v2863 = vperm.slane %v2833, 0
          %v2864 = vperm.slane %v2835, 0
          %v2865 = vperm.slane %v2837, 0
          %v2866 = vperm.slane %v2839, 0
          %v2867 = vperm.slane %v2841, 0
          %v2868 = vperm.slane %v2843, 0
          %v2869 = vperm.slane %v2845, 0
          %v2870 = vperm.slane %v2830, 0
          %v2871 = vperm.slane %v2848, 0
          %v2872 = vperm.slane %v2850, 0
          %v2873 = vperm.slane %v2852, 0
          %v2874 = vperm.slane %v2854, 0
          %v2875 = vperm.slane %v2856, 0
          %v2876 = vperm.slane %v2858, 0
          %v2877 = vperm.slane %v2860, 0
          %v2878 = vadd.f32 %v2798, %v2862
          %v2879 = vadd.f32 %v2798, %v2863
          %v2880 = vadd.f32 %v2798, %v2864
          %v2881 = vadd.f32 %v2798, %v2865
          %v2882 = vadd.f32 %v2798, %v2866
          %v2883 = vadd.f32 %v2798, %v2867
          %v2884 = vadd.f32 %v2798, %v2868
          %v2885 = vadd.f32 %v2798, %v2869
          %v2886 = vadd.f32 %v2798, %v2870
          %v2887 = vadd.f32 %v2798, %v2871
          %v2888 = vadd.f32 %v2798, %v2872
          %v2889 = vadd.f32 %v2798, %v2873
          %v2890 = vadd.f32 %v2798, %v2874
          %v2891 = vadd.f32 %v2798, %v2875
          %v2892 = vadd.f32 %v2798, %v2876
          %v2893 = vadd.f32 %v2798, %v2877
          %v2894 = vadd.f32 %v2801, %v2862
          %v2895 = vadd.f32 %v2801, %v2863
          %v2896 = vadd.f32 %v2801, %v2864
          %v2897 = vadd.f32 %v2801, %v2865
          %v2898 = vadd.f32 %v2801, %v2866
          %v2899 = vadd.f32 %v2801, %v2867
          %v2900 = vadd.f32 %v2801, %v2868
          %v2901 = vadd.f32 %v2801, %v2869
          %v2902 = vadd.f32 %v2801, %v2870
          %v2903 = vadd.f32 %v2801, %v2871
          %v2904 = vadd.f32 %v2801, %v2872
          %v2905 = vadd.f32 %v2801, %v2873
          %v2906 = vadd.f32 %v2801, %v2874
          %v2907 = vadd.f32 %v2801, %v2875
          %v2908 = vadd.f32 %v2801, %v2876
          %v2909 = vadd.f32 %v2801, %v2877
          %vm2910 = vcmp.gt.f32.partialorder %v2878, 0.0
          %vm2911 = vcmp.gt.f32.partialorder %v2879, 0.0
          %vm2912 = vcmp.gt.f32.partialorder %v2880, 0.0
          %vm2913 = vcmp.gt.f32.partialorder %v2881, 0.0
          %vm2914 = vcmp.gt.f32.partialorder %v2882, 0.0
          %vm2915 = vcmp.gt.f32.partialorder %v2883, 0.0
          %vm2916 = vcmp.gt.f32.partialorder %v2884, 0.0
          %vm2917 = vcmp.gt.f32.partialorder %v2885, 0.0
          %vm2918 = vcmp.gt.f32.partialorder %v2886, 0.0
          %vm2919 = vcmp.gt.f32.partialorder %v2887, 0.0
          %vm2920 = vcmp.gt.f32.partialorder %v2888, 0.0
          %vm2921 = vcmp.gt.f32.partialorder %v2889, 0.0
          %vm2922 = vcmp.gt.f32.partialorder %v2890, 0.0
          %vm2923 = vcmp.gt.f32.partialorder %v2891, 0.0
          %vm2924 = vcmp.gt.f32.partialorder %v2892, 0.0
          %vm2925 = vcmp.gt.f32.partialorder %v2893, 0.0
          %vm2926 = vcmp.gt.f32.partialorder %v2894, 0.0
          %vm2927 = vcmp.gt.f32.partialorder %v2895, 0.0
          %vm2928 = vcmp.gt.f32.partialorder %v2896, 0.0
          %vm2929 = vcmp.gt.f32.partialorder %v2897, 0.0
          %vm2930 = vcmp.gt.f32.partialorder %v2898, 0.0
          %vm2931 = vcmp.gt.f32.partialorder %v2899, 0.0
          %vm2932 = vcmp.gt.f32.partialorder %v2900, 0.0
          %vm2933 = vcmp.gt.f32.partialorder %v2901, 0.0
          %vm2934 = vcmp.gt.f32.partialorder %v2902, 0.0
          %vm2935 = vcmp.gt.f32.partialorder %v2903, 0.0
          %vm2936 = vcmp.gt.f32.partialorder %v2904, 0.0
          %vm2937 = vcmp.gt.f32.partialorder %v2905, 0.0
          %vm2938 = vcmp.gt.f32.partialorder %v2906, 0.0
          %vm2939 = vcmp.gt.f32.partialorder %v2907, 0.0
          %vm2940 = vcmp.gt.f32.partialorder %v2908, 0.0
          %vm2941 = vcmp.gt.f32.partialorder %v2909, 0.0
          %v2942 = vmul.f32 %v2878, 0.2
          %v2943 = vmul.f32 %v2879, 0.2
          %v2944 = vmul.f32 %v2880, 0.2
          %v2945 = vmul.f32 %v2881, 0.2
          %v2946 = vmul.f32 %v2882, 0.2
          %v2947 = vmul.f32 %v2883, 0.2
          %v2948 = vmul.f32 %v2884, 0.2
          %v2949 = vmul.f32 %v2885, 0.2
          %v2950 = vmul.f32 %v2886, 0.2
          %v2951 = vmul.f32 %v2887, 0.2
          %v2952 = vmul.f32 %v2888, 0.2
          %v2953 = vmul.f32 %v2889, 0.2
          %v2954 = vmul.f32 %v2890, 0.2
          %v2955 = vmul.f32 %v2891, 0.2
          %v2956 = vmul.f32 %v2892, 0.2
          %v2957 = vmul.f32 %v2893, 0.2
          %v2958 = vmul.f32 %v2894, 0.2
          %v2959 = vmul.f32 %v2895, 0.2
          %v2960 = vmul.f32 %v2896, 0.2
          %v2961 = vmul.f32 %v2897, 0.2
          %v2962 = vmul.f32 %v2898, 0.2
          %v2963 = vmul.f32 %v2899, 0.2
          %v2964 = vmul.f32 %v2900, 0.2
          %v2965 = vmul.f32 %v2901, 0.2
          %v2966 = vmul.f32 %v2902, 0.2
          %v2967 = vmul.f32 %v2903, 0.2
          %v2968 = vmul.f32 %v2904, 0.2
          %v2969 = vmul.f32 %v2905, 0.2
          %v2970 = vmul.f32 %v2906, 0.2
          %v2971 = vmul.f32 %v2907, 0.2
          %v2972 = vmul.f32 %v2908, 0.2
          %v2973 = vmul.f32 %v2909, 0.2
          %v2974 = vsel %vm2910, %v2878, %v2942
          %v2975 = vsel %vm2911, %v2879, %v2943
          %v2976 = vsel %vm2912, %v2880, %v2944
          %v2977 = vsel %vm2913, %v2881, %v2945
          %v2978 = vsel %vm2914, %v2882, %v2946
          %v2979 = vsel %vm2915, %v2883, %v2947
          %v2980 = vsel %vm2916, %v2884, %v2948
          %v2981 = vsel %vm2917, %v2885, %v2949
          %v2982 = vsel %vm2918, %v2886, %v2950
          %v2983 = vsel %vm2919, %v2887, %v2951
          %v2984 = vsel %vm2920, %v2888, %v2952
          %v2985 = vsel %vm2921, %v2889, %v2953
          %v2986 = vsel %vm2922, %v2890, %v2954
          %v2987 = vsel %vm2923, %v2891, %v2955
          %v2988 = vsel %vm2924, %v2892, %v2956
          %v2989 = vsel %vm2925, %v2893, %v2957
          %v2990 = vsel %vm2926, %v2894, %v2958
          %v2991 = vsel %vm2927, %v2895, %v2959
          %v2992 = vsel %vm2928, %v2896, %v2960
          %v2993 = vsel %vm2929, %v2897, %v2961
          %v2994 = vsel %vm2930, %v2898, %v2962
          %v2995 = vsel %vm2931, %v2899, %v2963
          %v2996 = vsel %vm2932, %v2900, %v2964
          %v2997 = vsel %vm2933, %v2901, %v2965
          %v2998 = vsel %vm2934, %v2902, %v2966
          %v2999 = vsel %vm2935, %v2903, %v2967
          %v3000 = vsel %vm2936, %v2904, %v2968
          %v3001 = vsel %vm2937, %v2905, %v2969
          %v3002 = vsel %vm2938, %v2906, %v2970
          %v3003 = vsel %vm2939, %v2907, %v2971
          %v3004 = vsel %vm2940, %v2908, %v2972
          %v3005 = vsel %vm2941, %v2909, %v2973
          %v3006 = vld [vmem:[#allocation10 + $0x8] sm:$0x1]
          %v3007 = vperm.slane %v3006, 0
          %v3008 = vmul.f32 %v2974, %v3007
          %v3009 = vmul.f32 %v2975, %v3007
          %v3010 = vmul.f32 %v2976, %v3007
          %v3011 = vmul.f32 %v2977, %v3007
          %v3012 = vmul.f32 %v2978, %v3007
          %v3013 = vmul.f32 %v2979, %v3007
          %v3014 = vmul.f32 %v2980, %v3007
          %v3015 = vmul.f32 %v2981, %v3007
          %v3016 = vmul.f32 %v2982, %v3007
          %v3017 = vmul.f32 %v2983, %v3007
          %v3018 = vmul.f32 %v2984, %v3007
          %v3019 = vmul.f32 %v2985, %v3007
          %v3020 = vmul.f32 %v2986, %v3007
          %v3021 = vmul.f32 %v2987, %v3007
          %v3022 = vmul.f32 %v2988, %v3007
          %v3023 = vmul.f32 %v2989, %v3007
          %v3024 = vmul.f32 %v2990, %v3007
          %v3025 = vmul.f32 %v2991, %v3007
          %v3026 = vmul.f32 %v2992, %v3007
          %v3027 = vmul.f32 %v2993, %v3007
          %v3028 = vmul.f32 %v2994, %v3007
          %v3029 = vmul.f32 %v2995, %v3007
          %v3030 = vmul.f32 %v2996, %v3007
          %v3031 = vmul.f32 %v2997, %v3007
          %v3032 = vmul.f32 %v2998, %v3007
          %v3033 = vmul.f32 %v2999, %v3007
          %v3034 = vmul.f32 %v3000, %v3007
          %v3035 = vmul.f32 %v3001, %v3007
          %v3036 = vmul.f32 %v3002, %v3007
          %v3037 = vmul.f32 %v3003, %v3007
          %v3038 = vmul.f32 %v3004, %v3007
          %v3039 = vmul.f32 %v3005, %v3007
          %3040 = vmatpush.xpose.msra.mxu0 0.0
          %3041 = vmatpush.xpose.msra.mxu0 0.0
          %3042 = vmatpush.xpose.msra.mxu0 0.0
          %3043 = vmatpush.xpose.msra.mxu0 0.0
          %3044 = vmatpush.xpose.msra.mxu0 0.0
          %3045 = vmatpush.xpose.msra.mxu0 0.0
          %3046 = vmatpush.xpose.msra.mxu0 0.0
          %3047 = vmatpush.xpose.msra.mxu0 0.0
          %3048 = vmatpush.xpose.msra.mxu0 %v2187
          %3049 = vmatpush.xpose.msra.mxu0 %v2171
          %3050 = vmatpush.xpose.msra.mxu0 %v2155
          %3051 = vmatpush.xpose.msra.mxu0 %v2139
          %3052 = vmatpush.xpose.msra.mxu0 %v2123
          %3053 = vmatpush.xpose.msra.mxu0 %v2107
          %3054 = vmatpush.xpose.msra.mxu0 %v2091
          %3055 = vmatpush.xpose.msra.mxu0 %v2075
          %3056 = vmatmul.f32.gmra.mxu0 %v3008
          %v3057 = vpop.f32.mrf.mxu0
          %v3058 = vadd.f32 %v2203, %v3057
          %3059 = vmatmul.f32.gmra.mxu0 %v3024
          %v3060 = vpop.f32.mrf.mxu0
          %v3061 = vadd.f32 %v2204, %v3060
          %3062 = vdwg.mxu0
          %3063 = vmatpush.xpose.msra.mxu0 0.0
          %3064 = vmatpush.xpose.msra.mxu0 0.0
          %3065 = vmatpush.xpose.msra.mxu0 0.0
          %3066 = vmatpush.xpose.msra.mxu0 0.0
          %3067 = vmatpush.xpose.msra.mxu0 0.0
          %3068 = vmatpush.xpose.msra.mxu0 0.0
          %3069 = vmatpush.xpose.msra.mxu0 0.0
          %3070 = vmatpush.xpose.msra.mxu0 0.0
          %3071 = vmatpush.xpose.msra.mxu0 %v2188
          %3072 = vmatpush.xpose.msra.mxu0 %v2172
          %3073 = vmatpush.xpose.msra.mxu0 %v2156
          %3074 = vmatpush.xpose.msra.mxu0 %v2140
          %3075 = vmatpush.xpose.msra.mxu0 %v2124
          %3076 = vmatpush.xpose.msra.mxu0 %v2108
          %3077 = vmatpush.xpose.msra.mxu0 %v2092
          %3078 = vmatpush.xpose.msra.mxu0 %v2076
          %3079 = vmatmul.f32.gmra.mxu0 %v3009
          %v3080 = vpop.f32.mrf.mxu0
          %v3081 = vadd.f32 %v3058, %v3080
          %3082 = vmatmul.f32.gmra.mxu0 %v3025
          %v3083 = vpop.f32.mrf.mxu0
          %v3084 = vadd.f32 %v3061, %v3083
          %3085 = vdwg.mxu0
          %3086 = vmatpush.xpose.msra.mxu0 0.0
          %3087 = vmatpush.xpose.msra.mxu0 0.0
          %3088 = vmatpush.xpose.msra.mxu0 0.0
          %3089 = vmatpush.xpose.msra.mxu0 0.0
          %3090 = vmatpush.xpose.msra.mxu0 0.0
          %3091 = vmatpush.xpose.msra.mxu0 0.0
          %3092 = vmatpush.xpose.msra.mxu0 0.0
          %3093 = vmatpush.xpose.msra.mxu0 0.0
          %3094 = vmatpush.xpose.msra.mxu0 %v2189
          %3095 = vmatpush.xpose.msra.mxu0 %v2173
          %3096 = vmatpush.xpose.msra.mxu0 %v2157
          %3097 = vmatpush.xpose.msra.mxu0 %v2141
          %3098 = vmatpush.xpose.msra.mxu0 %v2125
          %3099 = vmatpush.xpose.msra.mxu0 %v2109
          %3100 = vmatpush.xpose.msra.mxu0 %v2093
          %3101 = vmatpush.xpose.msra.mxu0 %v2077
          %3102 = vmatmul.f32.gmra.mxu0 %v3010
          %v3103 = vpop.f32.mrf.mxu0
          %v3104 = vadd.f32 %v3081, %v3103
          %3105 = vmatmul.f32.gmra.mxu0 %v3026
          %v3106 = vpop.f32.mrf.mxu0
          %v3107 = vadd.f32 %v3084, %v3106
          %3108 = vdwg.mxu0
          %3109 = vmatpush.xpose.msra.mxu0 0.0
          %3110 = vmatpush.xpose.msra.mxu0 0.0
          %3111 = vmatpush.xpose.msra.mxu0 0.0
          %3112 = vmatpush.xpose.msra.mxu0 0.0
          %3113 = vmatpush.xpose.msra.mxu0 0.0
          %3114 = vmatpush.xpose.msra.mxu0 0.0
          %3115 = vmatpush.xpose.msra.mxu0 0.0
          %3116 = vmatpush.xpose.msra.mxu0 0.0
          %3117 = vmatpush.xpose.msra.mxu0 %v2190
          %3118 = vmatpush.xpose.msra.mxu0 %v2174
          %3119 = vmatpush.xpose.msra.mxu0 %v2158
          %3120 = vmatpush.xpose.msra.mxu0 %v2142
          %3121 = vmatpush.xpose.msra.mxu0 %v2126
          %3122 = vmatpush.xpose.msra.mxu0 %v2110
          %3123 = vmatpush.xpose.msra.mxu0 %v2094
          %3124 = vmatpush.xpose.msra.mxu0 %v2078
          %3125 = vmatmul.f32.gmra.mxu0 %v3011
          %v3126 = vpop.f32.mrf.mxu0
          %v3127 = vadd.f32 %v3104, %v3126
          %3128 = vmatmul.f32.gmra.mxu0 %v3027
          %v3129 = vpop.f32.mrf.mxu0
          %v3130 = vadd.f32 %v3107, %v3129
          %3131 = vdwg.mxu0
          %3132 = vmatpush.xpose.msra.mxu0 0.0
          %3133 = vmatpush.xpose.msra.mxu0 0.0
          %3134 = vmatpush.xpose.msra.mxu0 0.0
          %3135 = vmatpush.xpose.msra.mxu0 0.0
          %3136 = vmatpush.xpose.msra.mxu0 0.0
          %3137 = vmatpush.xpose.msra.mxu0 0.0
          %3138 = vmatpush.xpose.msra.mxu0 0.0
          %3139 = vmatpush.xpose.msra.mxu0 0.0
          %3140 = vmatpush.xpose.msra.mxu0 %v2191
          %3141 = vmatpush.xpose.msra.mxu0 %v2175
          %3142 = vmatpush.xpose.msra.mxu0 %v2159
          %3143 = vmatpush.xpose.msra.mxu0 %v2143
          %3144 = vmatpush.xpose.msra.mxu0 %v2127
          %3145 = vmatpush.xpose.msra.mxu0 %v2111
          %3146 = vmatpush.xpose.msra.mxu0 %v2095
          %3147 = vmatpush.xpose.msra.mxu0 %v2079
          %3148 = vmatmul.f32.gmra.mxu0 %v3012
          %v3149 = vpop.f32.mrf.mxu0
          %v3150 = vadd.f32 %v3127, %v3149
          %3151 = vmatmul.f32.gmra.mxu0 %v3028
          %v3152 = vpop.f32.mrf.mxu0
          %v3153 = vadd.f32 %v3130, %v3152
          %3154 = vdwg.mxu0
          %3155 = vmatpush.xpose.msra.mxu0 0.0
          %3156 = vmatpush.xpose.msra.mxu0 0.0
          %3157 = vmatpush.xpose.msra.mxu0 0.0
          %3158 = vmatpush.xpose.msra.mxu0 0.0
          %3159 = vmatpush.xpose.msra.mxu0 0.0
          %3160 = vmatpush.xpose.msra.mxu0 0.0
          %3161 = vmatpush.xpose.msra.mxu0 0.0
          %3162 = vmatpush.xpose.msra.mxu0 0.0
          %3163 = vmatpush.xpose.msra.mxu0 %v2192
          %3164 = vmatpush.xpose.msra.mxu0 %v2176
          %3165 = vmatpush.xpose.msra.mxu0 %v2160
          %3166 = vmatpush.xpose.msra.mxu0 %v2144
          %3167 = vmatpush.xpose.msra.mxu0 %v2128
          %3168 = vmatpush.xpose.msra.mxu0 %v2112
          %3169 = vmatpush.xpose.msra.mxu0 %v2096
          %3170 = vmatpush.xpose.msra.mxu0 %v2080
          %3171 = vmatmul.f32.gmra.mxu0 %v3013
          %v3172 = vpop.f32.mrf.mxu0
          %v3173 = vadd.f32 %v3150, %v3172
          %3174 = vmatmul.f32.gmra.mxu0 %v3029
          %v3175 = vpop.f32.mrf.mxu0
          %v3176 = vadd.f32 %v3153, %v3175
          %3177 = vdwg.mxu0
          %3178 = vmatpush.xpose.msra.mxu0 0.0
          %3179 = vmatpush.xpose.msra.mxu0 0.0
          %3180 = vmatpush.xpose.msra.mxu0 0.0
          %3181 = vmatpush.xpose.msra.mxu0 0.0
          %3182 = vmatpush.xpose.msra.mxu0 0.0
          %3183 = vmatpush.xpose.msra.mxu0 0.0
          %3184 = vmatpush.xpose.msra.mxu0 0.0
          %3185 = vmatpush.xpose.msra.mxu0 0.0
          %3186 = vmatpush.xpose.msra.mxu0 %v2193
          %3187 = vmatpush.xpose.msra.mxu0 %v2177
          %3188 = vmatpush.xpose.msra.mxu0 %v2161
          %3189 = vmatpush.xpose.msra.mxu0 %v2145
          %3190 = vmatpush.xpose.msra.mxu0 %v2129
          %3191 = vmatpush.xpose.msra.mxu0 %v2113
          %3192 = vmatpush.xpose.msra.mxu0 %v2097
          %3193 = vmatpush.xpose.msra.mxu0 %v2081
          %3194 = vmatmul.f32.gmra.mxu0 %v3014
          %v3195 = vpop.f32.mrf.mxu0
          %v3196 = vadd.f32 %v3173, %v3195
          %3197 = vmatmul.f32.gmra.mxu0 %v3030
          %v3198 = vpop.f32.mrf.mxu0
          %v3199 = vadd.f32 %v3176, %v3198
          %3200 = vdwg.mxu0
          %3201 = vmatpush.xpose.msra.mxu0 0.0
          %3202 = vmatpush.xpose.msra.mxu0 0.0
          %3203 = vmatpush.xpose.msra.mxu0 0.0
          %3204 = vmatpush.xpose.msra.mxu0 0.0
          %3205 = vmatpush.xpose.msra.mxu0 0.0
          %3206 = vmatpush.xpose.msra.mxu0 0.0
          %3207 = vmatpush.xpose.msra.mxu0 0.0
          %3208 = vmatpush.xpose.msra.mxu0 0.0
          %3209 = vmatpush.xpose.msra.mxu0 %v2194
          %3210 = vmatpush.xpose.msra.mxu0 %v2178
          %3211 = vmatpush.xpose.msra.mxu0 %v2162
          %3212 = vmatpush.xpose.msra.mxu0 %v2146
          %3213 = vmatpush.xpose.msra.mxu0 %v2130
          %3214 = vmatpush.xpose.msra.mxu0 %v2114
          %3215 = vmatpush.xpose.msra.mxu0 %v2098
          %3216 = vmatpush.xpose.msra.mxu0 %v2082
          %3217 = vmatmul.f32.gmra.mxu0 %v3015
          %v3218 = vpop.f32.mrf.mxu0
          %v3219 = vadd.f32 %v3196, %v3218
          %3220 = vmatmul.f32.gmra.mxu0 %v3031
          %v3221 = vpop.f32.mrf.mxu0
          %v3222 = vadd.f32 %v3199, %v3221
          %3223 = vdwg.mxu0
          %3224 = vmatpush.xpose.msra.mxu0 0.0
          %3225 = vmatpush.xpose.msra.mxu0 0.0
          %3226 = vmatpush.xpose.msra.mxu0 0.0
          %3227 = vmatpush.xpose.msra.mxu0 0.0
          %3228 = vmatpush.xpose.msra.mxu0 0.0
          %3229 = vmatpush.xpose.msra.mxu0 0.0
          %3230 = vmatpush.xpose.msra.mxu0 0.0
          %3231 = vmatpush.xpose.msra.mxu0 0.0
          %3232 = vmatpush.xpose.msra.mxu0 %v2195
          %3233 = vmatpush.xpose.msra.mxu0 %v2179
          %3234 = vmatpush.xpose.msra.mxu0 %v2163
          %3235 = vmatpush.xpose.msra.mxu0 %v2147
          %3236 = vmatpush.xpose.msra.mxu0 %v2131
          %3237 = vmatpush.xpose.msra.mxu0 %v2115
          %3238 = vmatpush.xpose.msra.mxu0 %v2099
          %3239 = vmatpush.xpose.msra.mxu0 %v2083
          %3240 = vmatmul.f32.gmra.mxu0 %v3016
          %v3241 = vpop.f32.mrf.mxu0
          %v3242 = vadd.f32 %v3219, %v3241
          %3243 = vmatmul.f32.gmra.mxu0 %v3032
          %v3244 = vpop.f32.mrf.mxu0
          %v3245 = vadd.f32 %v3222, %v3244
          %3246 = vdwg.mxu0
          %3247 = vmatpush.xpose.msra.mxu0 0.0
          %3248 = vmatpush.xpose.msra.mxu0 0.0
          %3249 = vmatpush.xpose.msra.mxu0 0.0
          %3250 = vmatpush.xpose.msra.mxu0 0.0
          %3251 = vmatpush.xpose.msra.mxu0 0.0
          %3252 = vmatpush.xpose.msra.mxu0 0.0
          %3253 = vmatpush.xpose.msra.mxu0 0.0
          %3254 = vmatpush.xpose.msra.mxu0 0.0
          %3255 = vmatpush.xpose.msra.mxu0 %v2196
          %3256 = vmatpush.xpose.msra.mxu0 %v2180
          %3257 = vmatpush.xpose.msra.mxu0 %v2164
          %3258 = vmatpush.xpose.msra.mxu0 %v2148
          %3259 = vmatpush.xpose.msra.mxu0 %v2132
          %3260 = vmatpush.xpose.msra.mxu0 %v2116
          %3261 = vmatpush.xpose.msra.mxu0 %v2100
          %3262 = vmatpush.xpose.msra.mxu0 %v2084
          %3263 = vmatmul.f32.gmra.mxu0 %v3017
          %v3264 = vpop.f32.mrf.mxu0
          %v3265 = vadd.f32 %v3242, %v3264
          %3266 = vmatmul.f32.gmra.mxu0 %v3033
          %v3267 = vpop.f32.mrf.mxu0
          %v3268 = vadd.f32 %v3245, %v3267
          %3269 = vdwg.mxu0
          %3270 = vmatpush.xpose.msra.mxu0 0.0
          %3271 = vmatpush.xpose.msra.mxu0 0.0
          %3272 = vmatpush.xpose.msra.mxu0 0.0
          %3273 = vmatpush.xpose.msra.mxu0 0.0
          %3274 = vmatpush.xpose.msra.mxu0 0.0
          %3275 = vmatpush.xpose.msra.mxu0 0.0
          %3276 = vmatpush.xpose.msra.mxu0 0.0
          %3277 = vmatpush.xpose.msra.mxu0 0.0
          %3278 = vmatpush.xpose.msra.mxu0 %v2197
          %3279 = vmatpush.xpose.msra.mxu0 %v2181
          %3280 = vmatpush.xpose.msra.mxu0 %v2165
          %3281 = vmatpush.xpose.msra.mxu0 %v2149
          %3282 = vmatpush.xpose.msra.mxu0 %v2133
          %3283 = vmatpush.xpose.msra.mxu0 %v2117
          %3284 = vmatpush.xpose.msra.mxu0 %v2101
          %3285 = vmatpush.xpose.msra.mxu0 %v2085
          %3286 = vmatmul.f32.gmra.mxu0 %v3018
          %v3287 = vpop.f32.mrf.mxu0
          %v3288 = vadd.f32 %v3265, %v3287
          %3289 = vmatmul.f32.gmra.mxu0 %v3034
          %v3290 = vpop.f32.mrf.mxu0
          %v3291 = vadd.f32 %v3268, %v3290
          %3292 = vdwg.mxu0
          %3293 = vmatpush.xpose.msra.mxu0 0.0
          %3294 = vmatpush.xpose.msra.mxu0 0.0
          %3295 = vmatpush.xpose.msra.mxu0 0.0
          %3296 = vmatpush.xpose.msra.mxu0 0.0
          %3297 = vmatpush.xpose.msra.mxu0 0.0
          %3298 = vmatpush.xpose.msra.mxu0 0.0
          %3299 = vmatpush.xpose.msra.mxu0 0.0
          %3300 = vmatpush.xpose.msra.mxu0 0.0
          %3301 = vmatpush.xpose.msra.mxu0 %v2198
          %3302 = vmatpush.xpose.msra.mxu0 %v2182
          %3303 = vmatpush.xpose.msra.mxu0 %v2166
          %3304 = vmatpush.xpose.msra.mxu0 %v2150
          %3305 = vmatpush.xpose.msra.mxu0 %v2134
          %3306 = vmatpush.xpose.msra.mxu0 %v2118
          %3307 = vmatpush.xpose.msra.mxu0 %v2102
          %3308 = vmatpush.xpose.msra.mxu0 %v2086
          %3309 = vmatmul.f32.gmra.mxu0 %v3019
          %v3310 = vpop.f32.mrf.mxu0
          %v3311 = vadd.f32 %v3288, %v3310
          %3312 = vmatmul.f32.gmra.mxu0 %v3035
          %v3313 = vpop.f32.mrf.mxu0
          %v3314 = vadd.f32 %v3291, %v3313
          %3315 = vdwg.mxu0
          %3316 = vmatpush.xpose.msra.mxu0 0.0
          %3317 = vmatpush.xpose.msra.mxu0 0.0
          %3318 = vmatpush.xpose.msra.mxu0 0.0
          %3319 = vmatpush.xpose.msra.mxu0 0.0
          %3320 = vmatpush.xpose.msra.mxu0 0.0
          %3321 = vmatpush.xpose.msra.mxu0 0.0
          %3322 = vmatpush.xpose.msra.mxu0 0.0
          %3323 = vmatpush.xpose.msra.mxu0 0.0
          %3324 = vmatpush.xpose.msra.mxu0 %v2199
          %3325 = vmatpush.xpose.msra.mxu0 %v2183
          %3326 = vmatpush.xpose.msra.mxu0 %v2167
          %3327 = vmatpush.xpose.msra.mxu0 %v2151
          %3328 = vmatpush.xpose.msra.mxu0 %v2135
          %3329 = vmatpush.xpose.msra.mxu0 %v2119
          %3330 = vmatpush.xpose.msra.mxu0 %v2103
          %3331 = vmatpush.xpose.msra.mxu0 %v2087
          %3332 = vmatmul.f32.gmra.mxu0 %v3020
          %v3333 = vpop.f32.mrf.mxu0
          %v3334 = vadd.f32 %v3311, %v3333
          %3335 = vmatmul.f32.gmra.mxu0 %v3036
          %v3336 = vpop.f32.mrf.mxu0
          %v3337 = vadd.f32 %v3314, %v3336
          %3338 = vdwg.mxu0
          %3339 = vmatpush.xpose.msra.mxu0 0.0
          %3340 = vmatpush.xpose.msra.mxu0 0.0
          %3341 = vmatpush.xpose.msra.mxu0 0.0
          %3342 = vmatpush.xpose.msra.mxu0 0.0
          %3343 = vmatpush.xpose.msra.mxu0 0.0
          %3344 = vmatpush.xpose.msra.mxu0 0.0
          %3345 = vmatpush.xpose.msra.mxu0 0.0
          %3346 = vmatpush.xpose.msra.mxu0 0.0
          %3347 = vmatpush.xpose.msra.mxu0 %v2200
          %3348 = vmatpush.xpose.msra.mxu0 %v2184
          %3349 = vmatpush.xpose.msra.mxu0 %v2168
          %3350 = vmatpush.xpose.msra.mxu0 %v2152
          %3351 = vmatpush.xpose.msra.mxu0 %v2136
          %3352 = vmatpush.xpose.msra.mxu0 %v2120
          %3353 = vmatpush.xpose.msra.mxu0 %v2104
          %3354 = vmatpush.xpose.msra.mxu0 %v2088
          %3355 = vmatmul.f32.gmra.mxu0 %v3021
          %v3356 = vpop.f32.mrf.mxu0
          %v3357 = vadd.f32 %v3334, %v3356
          %3358 = vmatmul.f32.gmra.mxu0 %v3037
          %v3359 = vpop.f32.mrf.mxu0
          %v3360 = vadd.f32 %v3337, %v3359
          %3361 = vdwg.mxu0
          %3362 = vmatpush.xpose.msra.mxu0 0.0
          %3363 = vmatpush.xpose.msra.mxu0 0.0
          %3364 = vmatpush.xpose.msra.mxu0 0.0
          %3365 = vmatpush.xpose.msra.mxu0 0.0
          %3366 = vmatpush.xpose.msra.mxu0 0.0
          %3367 = vmatpush.xpose.msra.mxu0 0.0
          %3368 = vmatpush.xpose.msra.mxu0 0.0
          %3369 = vmatpush.xpose.msra.mxu0 0.0
          %3370 = vmatpush.xpose.msra.mxu0 %v2201
          %3371 = vmatpush.xpose.msra.mxu0 %v2185
          %3372 = vmatpush.xpose.msra.mxu0 %v2169
          %3373 = vmatpush.xpose.msra.mxu0 %v2153
          %3374 = vmatpush.xpose.msra.mxu0 %v2137
          %3375 = vmatpush.xpose.msra.mxu0 %v2121
          %3376 = vmatpush.xpose.msra.mxu0 %v2105
          %3377 = vmatpush.xpose.msra.mxu0 %v2089
          %3378 = vmatmul.f32.gmra.mxu0 %v3022
          %v3379 = vpop.f32.mrf.mxu0
          %v3380 = vadd.f32 %v3357, %v3379
          %3381 = vmatmul.f32.gmra.mxu0 %v3038
          %v3382 = vpop.f32.mrf.mxu0
          %v3383 = vadd.f32 %v3360, %v3382
          %3384 = vdwg.mxu0
          %3385 = vmatpush.xpose.msra.mxu0 0.0
          %3386 = vmatpush.xpose.msra.mxu0 0.0
          %3387 = vmatpush.xpose.msra.mxu0 0.0
          %3388 = vmatpush.xpose.msra.mxu0 0.0
          %3389 = vmatpush.xpose.msra.mxu0 0.0
          %3390 = vmatpush.xpose.msra.mxu0 0.0
          %3391 = vmatpush.xpose.msra.mxu0 0.0
          %3392 = vmatpush.xpose.msra.mxu0 0.0
          %3393 = vmatpush.xpose.msra.mxu0 %v2202
          %3394 = vmatpush.xpose.msra.mxu0 %v2186
          %3395 = vmatpush.xpose.msra.mxu0 %v2170
          %3396 = vmatpush.xpose.msra.mxu0 %v2154
          %3397 = vmatpush.xpose.msra.mxu0 %v2138
          %3398 = vmatpush.xpose.msra.mxu0 %v2122
          %3399 = vmatpush.xpose.msra.mxu0 %v2106
          %3400 = vmatpush.xpose.msra.mxu0 %v2090
          %3401 = vmatmul.f32.gmra.mxu0 %v3023
          %v3402 = vpop.f32.mrf.mxu0
          %v3403 = vadd.f32 %v3380, %v3402
          %3404 = vmatmul.f32.gmra.mxu0 %v3039
          %v3405 = vpop.f32.mrf.mxu0
          %v3406 = vadd.f32 %v3383, %v3405
          %3407 = vdwg.mxu0
          %v3408 = vsel %vm2573, %v3403, -inf
          %v3409 = vsel %vm2573, %v3406, -inf
          %v3410 = vmax.f32 %v3408, %v3409
          %v3411 = vrot.slane %v3410, 4
          %v3412 = vmax.f32 %v3410, %v3411
          %v3413 = vrot.slane %v3412, 2
          %v3414 = vmax.f32 %v3412, %v3413
          %v3415 = vrot.slane %v3414, 1
          %v3416 = vmax.f32 %v3414, %v3415
          %v3417 = vsub.f32 %v3403, %v3416
          %v3418 = vsub.f32 %v3406, %v3416
          %v3419 = vmul.f32 %v3417, 1.442695
          %v3420 = vpow.pop %v3419
          %v3421 = vmul.f32 %v3418, 1.442695
          %v3422 = vpow.pop %v3421
          %v3423 = vsel %vm2573, %v3420, 0.0
          %v3424 = vsel %vm2573, %v3422, 0.0
          %v3425 = vadd.f32 %v3423, %v3424
          %v3426 = vrot.slane %v3425, 4
          %v3427 = vadd.f32 %v3425, %v3426
          %v3428 = vrot.slane %v3427, 2
          %v3429 = vadd.f32 %v3427, %v3428
          %v3430 = vrot.slane %v3429, 1
          %v3431 = vadd.f32 %v3429, %v3430
          %v3432 = vrcp.pop %v3431
          %v3433 = vmul.f32 %v3420, %v3432
          %v3434 = vmul.f32 %v3422, %v3432
          %v3435 = vld [vmem:[#allocation7 + $0x80] sm:$0xff]
          %v3436 = vld [vmem:[#allocation7 + $0x88] sm:$0xff]
          %3437 = vxpose.xlu0.b32.start [1/16] %v3433, 128
          %3438 = vxpose.xlu0.b32.cont [2/16] %v3434, 128
          %3439 = vxpose.xlu0.b32.cont [3/16] 0.0, 128
          %3440 = vxpose.xlu0.b32.cont [4/16] 0.0, 128
          %3441 = vxpose.xlu0.b32.cont [5/16] 0.0, 128
          %3442 = vxpose.xlu0.b32.cont [6/16] 0.0, 128
          %3443 = vxpose.xlu0.b32.cont [7/16] 0.0, 128
          %3444 = vxpose.xlu0.b32.cont [8/16] 0.0, 128
          %3445 = vxpose.xlu0.b32.cont [9/16] 0.0, 128
          %3446 = vxpose.xlu0.b32.cont [10/16] 0.0, 128
          %3447 = vxpose.xlu0.b32.cont [11/16] 0.0, 128
          %3448 = vxpose.xlu0.b32.cont [12/16] 0.0, 128
          %3449 = vxpose.xlu0.b32.cont [13/16] 0.0, 128
          %3450 = vxpose.xlu0.b32.cont [14/16] 0.0, 128
          %3451 = vxpose.xlu0.b32.cont [15/16] 0.0, 128
          %3452 = vxpose.xlu0.b32.end [16/16] 0.0, 128
          %v3453 = vpop.trf.xlu0
          %v3454 = vpop.trf.xlu0
          %v3455 = vpop.trf.xlu0
          %v3456 = vpop.trf.xlu0
          %v3457 = vpop.trf.xlu0
          %v3458 = vpop.trf.xlu0
          %v3459 = vpop.trf.xlu0
          %v3460 = vpop.trf.xlu0
          %v3461 = vpop.trf.xlu0
          %v3462 = vpop.trf.xlu0
          %v3463 = vpop.trf.xlu0
          %v3464 = vpop.trf.xlu0
          %v3465 = vpop.trf.xlu0
          %v3466 = vpop.trf.xlu0
          %v3467 = vpop.trf.xlu0
          %v3468 = vpop.trf.xlu0
          %v3470 = vsel %vm1810, %v3453, 0
          %v3473 = vsel %vm1810, %v3454, 0
          %v3476 = vsel %vm1810, %v3455, 0
          %v3479 = vsel %vm1810, %v3456, 0
          %v3482 = vsel %vm1810, %v3457, 0
          %v3485 = vsel %vm1810, %v3458, 0
          %v3488 = vsel %vm1810, %v3459, 0
          %v3491 = vsel %vm1810, %v3460, 0
          %3493 = vmatpush.msra.mxu0 0.0
          %3494 = vmatpush.msra.mxu0 0.0
          %3495 = vmatpush.msra.mxu0 0.0
          %3496 = vmatpush.msra.mxu0 0.0
          %3497 = vmatpush.msra.mxu0 0.0
          %3498 = vmatpush.msra.mxu0 0.0
          %3499 = vmatpush.msra.mxu0 0.0
          %3500 = vmatpush.msra.mxu0 0.0
          %3501 = vmatpush.msra.mxu0 0.0
          %3502 = vmatpush.msra.mxu0 0.0
          %3503 = vmatpush.msra.mxu0 0.0
          %3504 = vmatpush.msra.mxu0 0.0
          %3505 = vmatpush.msra.mxu0 0.0
          %3506 = vmatpush.msra.mxu0 0.0
          %3507 = vmatpush.msra.mxu0 %v2801
          %3508 = vmatpush.msra.mxu0 %v2798
          %3509 = vmatmul.f32.gmra.mxu0 %v3470
          %v3510 = vpop.f32.mrf.mxu0
          %v3511 = vadd.f32 0.0, %v3510
          %3512 = vmatmul.f32.gmra.mxu0 %v3473
          %v3513 = vpop.f32.mrf.mxu0
          %v3514 = vadd.f32 0.0, %v3513
          %3515 = vmatmul.f32.gmra.mxu0 %v3476
          %v3516 = vpop.f32.mrf.mxu0
          %v3517 = vadd.f32 0.0, %v3516
          %3518 = vmatmul.f32.gmra.mxu0 %v3479
          %v3519 = vpop.f32.mrf.mxu0
          %v3520 = vadd.f32 0.0, %v3519
          %3521 = vmatmul.f32.gmra.mxu0 %v3482
          %v3522 = vpop.f32.mrf.mxu0
          %v3523 = vadd.f32 0.0, %v3522
          %3524 = vmatmul.f32.gmra.mxu0 %v3485
          %v3525 = vpop.f32.mrf.mxu0
          %v3526 = vadd.f32 0.0, %v3525
          %3527 = vmatmul.f32.gmra.mxu0 %v3488
          %v3528 = vpop.f32.mrf.mxu0
          %v3529 = vadd.f32 0.0, %v3528
          %3530 = vmatmul.f32.gmra.mxu0 %v3491
          %v3531 = vpop.f32.mrf.mxu0
          %v3532 = vadd.f32 0.0, %v3531
          %3533 = vdwg.mxu0
          %v3534 = vmul.f32 %v3511, %v2700
          %v3535 = vmul.f32 %v3514, %v2701
          %v3536 = vmul.f32 %v3517, %v2702
          %v3537 = vmul.f32 %v3520, %v2703
          %v3538 = vmul.f32 %v3523, %v2704
          %v3539 = vmul.f32 %v3526, %v2705
          %v3540 = vmul.f32 %v3529, %v2706
          %v3541 = vmul.f32 %v3532, %v2707
          %v3542 = vadd.f32 %v3534, %v3536
          %v3543 = vadd.f32 %v3535, %v3537
          %v3544 = vadd.f32 %v3542, %v3538
          %v3545 = vadd.f32 %v3543, %v3539
          %v3546 = vadd.f32 %v3544, %v3540
          %v3547 = vadd.f32 %v3545, %v3541
          %v3548 = vadd.f32 %v3546, %v3435
          %v3549 = vadd.f32 %v3547, %v3436
          %v3550 = vld [vmem:[%s6 + $0x290] sm:$0xff]
          %v3551 = vld [vmem:[%s6 + $0x298] sm:$0xff]
          %v3552 = vld [vmem:[%s6 + $0x2a0] sm:$0xff]
          %v3553 = vld [vmem:[%s6 + $0x2a8] sm:$0xff]
          %v3554 = vld [vmem:[%s6 + $0x2b0] sm:$0xff]
          %v3555 = vld [vmem:[%s6 + $0x2b8] sm:$0xff]
          %v3556 = vld [vmem:[%s6 + $0x2c0] sm:$0xff]
          %v3557 = vld [vmem:[%s6 + $0x2c8] sm:$0xff]
          %v3558 = vld [vmem:[%s6 + $0x2d0] sm:$0xff]
          %v3559 = vld [vmem:[%s6 + $0x2d8] sm:$0xff]
          %v3560 = vld [vmem:[%s6 + $0x2e0] sm:$0xff]
          %v3561 = vld [vmem:[%s6 + $0x2e8] sm:$0xff]
          %v3562 = vld [vmem:[%s6 + $0x2f0] sm:$0xff]
          %v3563 = vld [vmem:[%s6 + $0x2f8] sm:$0xff]
          %v3564 = vld [vmem:[%s6 + $0x300] sm:$0xff]
          %v3565 = vld [vmem:[%s6 + $0x308] sm:$0xff]
          %v3566 = vld [vmem:[%s8 + $0x80] sm:$0xff]
          %v3567 = vld [vmem:[%s8 + $0x88] sm:$0xff]
          %3568 = vmatpush.msra.mxu0 %v3565
          %3569 = vmatpush.msra.mxu0 %v3564
          %3570 = vmatpush.msra.mxu0 %v3563
          %3571 = vmatpush.msra.mxu0 %v3562
          %3572 = vmatpush.msra.mxu0 %v3561
          %3573 = vmatpush.msra.mxu0 %v3560
          %3574 = vmatpush.msra.mxu0 %v3559
          %3575 = vmatpush.msra.mxu0 %v3558
          %3576 = vmatpush.msra.mxu0 %v3557
          %3577 = vmatpush.msra.mxu0 %v3556
          %3578 = vmatpush.msra.mxu0 %v3555
          %3579 = vmatpush.msra.mxu0 %v3554
          %3580 = vmatpush.msra.mxu0 %v3553
          %3581 = vmatpush.msra.mxu0 %v3552
          %3582 = vmatpush.msra.mxu0 %v3551
          %3583 = vmatpush.msra.mxu0 %v3550
          %3584 = vmatmul.f32.gmra.mxu0 %v3548
          %v3585 = vpop.f32.mrf.mxu0
          %v3586 = vadd.f32 %v3566, %v3585
          %3587 = vmatmul.f32.gmra.mxu0 %v3549
          %v3588 = vpop.f32.mrf.mxu0
          %v3589 = vadd.f32 %v3567, %v3588
          %3590 = vdwg.mxu0
          %v3591 = vmax.f32 %v3586, 0.0
          %v3592 = vmax.f32 %v3589, 0.0
          %v3593 = vld [vmem:[#allocation6 + $0xb0] sm:$0xff]
          %v3594 = vld [vmem:[#allocation6 + $0xb8] sm:$0xff]
          %v3595 = vld [vmem:[#allocation6 + $0xc0] sm:$0xff]
          %v3596 = vld [vmem:[#allocation6 + $0xc8] sm:$0xff]
          %v3597 = vld [vmem:[#allocation7 + $0x90] sm:$0xff]
          %v3598 = vld [vmem:[#allocation7 + $0x98] sm:$0xff]
          %v3600 = vsel %vm2773, %v3591, 0
          %v3603 = vsel %vm2773, %v3592, 0
          %3605 = vmatpush.msra.mxu0 0.0
          %3606 = vmatpush.msra.mxu0 0.0
          %3607 = vmatpush.msra.mxu0 0.0
          %3608 = vmatpush.msra.mxu0 0.0
          %3609 = vmatpush.msra.mxu0 0.0
          %3610 = vmatpush.msra.mxu0 0.0
          %3611 = vmatpush.msra.mxu0 0.0
          %3612 = vmatpush.msra.mxu0 0.0
          %3613 = vmatpush.msra.mxu0 0.0
          %3614 = vmatpush.msra.mxu0 0.0
          %3615 = vmatpush.msra.mxu0 0.0
          %3616 = vmatpush.msra.mxu0 0.0
          %3617 = vmatpush.msra.mxu0 %v3596
          %3618 = vmatpush.msra.mxu0 %v3595
          %3619 = vmatpush.msra.mxu0 %v3594
          %3620 = vmatpush.msra.mxu0 %v3593
          %3621 = vmatmul.f32.gmra.mxu0 %v3600
          %v3622 = vpop.f32.mrf.mxu0
          %v3623 = vadd.f32 %v3597, %v3622
          %3624 = vmatmul.f32.gmra.mxu0 %v3603
          %v3625 = vpop.f32.mrf.mxu0
          %v3626 = vadd.f32 %v3598, %v3625
          %3627 = vdwg.mxu0
          %v3628 = vld [vmem:[#allocation6 + $0xd0] sm:$0xff]
          %v3629 = vld [vmem:[#allocation6 + $0xd8] sm:$0xff]
          %v3630 = vld [vmem:[#allocation6 + $0xe0] sm:$0xff]
          %v3631 = vld [vmem:[#allocation6 + $0xe8] sm:$0xff]
          %v3632 = vld [vmem:[#allocation7 + $0xa0] sm:$0xff]
          %v3633 = vld [vmem:[#allocation7 + $0xa8] sm:$0xff]
          %3634 = vmatpush.msra.mxu0 0.0
          %3635 = vmatpush.msra.mxu0 0.0
          %3636 = vmatpush.msra.mxu0 0.0
          %3637 = vmatpush.msra.mxu0 0.0
          %3638 = vmatpush.msra.mxu0 0.0
          %3639 = vmatpush.msra.mxu0 0.0
          %3640 = vmatpush.msra.mxu0 0.0
          %3641 = vmatpush.msra.mxu0 0.0
          %3642 = vmatpush.msra.mxu0 0.0
          %3643 = vmatpush.msra.mxu0 0.0
          %3644 = vmatpush.msra.mxu0 0.0
          %3645 = vmatpush.msra.mxu0 0.0
          %3646 = vmatpush.msra.mxu0 %v3631
          %3647 = vmatpush.msra.mxu0 %v3630
          %3648 = vmatpush.msra.mxu0 %v3629
          %3649 = vmatpush.msra.mxu0 %v3628
          %3650 = vmatmul.f32.gmra.mxu0 %v3600
          %v3651 = vpop.f32.mrf.mxu0
          %v3652 = vadd.f32 %v3632, %v3651
          %3653 = vmatmul.f32.gmra.mxu0 %v3603
          %v3654 = vpop.f32.mrf.mxu0
          %v3655 = vadd.f32 %v3633, %v3654
          %3656 = vdwg.mxu0
          %v3658 = vrot.slane %v3652, 1
          %v3660 = vrot.slane %v3652, 2
          %v3662 = vrot.slane %v3652, 3
          %v3664 = vrot.slane %v3652, 4
          %v3666 = vrot.slane %v3652, 5
          %v3668 = vrot.slane %v3652, 6
          %v3670 = vrot.slane %v3652, 7
          %v3673 = vrot.slane %v3655, 1
          %v3675 = vrot.slane %v3655, 2
          %v3677 = vrot.slane %v3655, 3
          %v3679 = vrot.slane %v3655, 4
          %v3681 = vrot.slane %v3655, 5
          %v3683 = vrot.slane %v3655, 6
          %v3685 = vrot.slane %v3655, 7
          %v3687 = vperm.slane %v3652, 0
          %v3688 = vperm.slane %v3658, 0
          %v3689 = vperm.slane %v3660, 0
          %v3690 = vperm.slane %v3662, 0
          %v3691 = vperm.slane %v3664, 0
          %v3692 = vperm.slane %v3666, 0
          %v3693 = vperm.slane %v3668, 0
          %v3694 = vperm.slane %v3670, 0
          %v3695 = vperm.slane %v3655, 0
          %v3696 = vperm.slane %v3673, 0
          %v3697 = vperm.slane %v3675, 0
          %v3698 = vperm.slane %v3677, 0
          %v3699 = vperm.slane %v3679, 0
          %v3700 = vperm.slane %v3681, 0
          %v3701 = vperm.slane %v3683, 0
          %v3702 = vperm.slane %v3685, 0
          %v3703 = vadd.f32 %v3623, %v3687
          %v3704 = vadd.f32 %v3623, %v3688
          %v3705 = vadd.f32 %v3623, %v3689
          %v3706 = vadd.f32 %v3623, %v3690
          %v3707 = vadd.f32 %v3623, %v3691
          %v3708 = vadd.f32 %v3623, %v3692
          %v3709 = vadd.f32 %v3623, %v3693
          %v3710 = vadd.f32 %v3623, %v3694
          %v3711 = vadd.f32 %v3623, %v3695
          %v3712 = vadd.f32 %v3623, %v3696
          %v3713 = vadd.f32 %v3623, %v3697
          %v3714 = vadd.f32 %v3623, %v3698
          %v3715 = vadd.f32 %v3623, %v3699
          %v3716 = vadd.f32 %v3623, %v3700
          %v3717 = vadd.f32 %v3623, %v3701
          %v3718 = vadd.f32 %v3623, %v3702
          %v3719 = vadd.f32 %v3626, %v3687
          %v3720 = vadd.f32 %v3626, %v3688
          %v3721 = vadd.f32 %v3626, %v3689
          %v3722 = vadd.f32 %v3626, %v3690
          %v3723 = vadd.f32 %v3626, %v3691
          %v3724 = vadd.f32 %v3626, %v3692
          %v3725 = vadd.f32 %v3626, %v3693
          %v3726 = vadd.f32 %v3626, %v3694
          %v3727 = vadd.f32 %v3626, %v3695
          %v3728 = vadd.f32 %v3626, %v3696
          %v3729 = vadd.f32 %v3626, %v3697
          %v3730 = vadd.f32 %v3626, %v3698
          %v3731 = vadd.f32 %v3626, %v3699
          %v3732 = vadd.f32 %v3626, %v3700
          %v3733 = vadd.f32 %v3626, %v3701
          %v3734 = vadd.f32 %v3626, %v3702
          %vm3735 = vcmp.gt.f32.partialorder %v3703, 0.0
          %vm3736 = vcmp.gt.f32.partialorder %v3704, 0.0
          %vm3737 = vcmp.gt.f32.partialorder %v3705, 0.0
          %vm3738 = vcmp.gt.f32.partialorder %v3706, 0.0
          %vm3739 = vcmp.gt.f32.partialorder %v3707, 0.0
          %vm3740 = vcmp.gt.f32.partialorder %v3708, 0.0
          %vm3741 = vcmp.gt.f32.partialorder %v3709, 0.0
          %vm3742 = vcmp.gt.f32.partialorder %v3710, 0.0
          %vm3743 = vcmp.gt.f32.partialorder %v3711, 0.0
          %vm3744 = vcmp.gt.f32.partialorder %v3712, 0.0
          %vm3745 = vcmp.gt.f32.partialorder %v3713, 0.0
          %vm3746 = vcmp.gt.f32.partialorder %v3714, 0.0
          %vm3747 = vcmp.gt.f32.partialorder %v3715, 0.0
          %vm3748 = vcmp.gt.f32.partialorder %v3716, 0.0
          %vm3749 = vcmp.gt.f32.partialorder %v3717, 0.0
          %vm3750 = vcmp.gt.f32.partialorder %v3718, 0.0
          %vm3751 = vcmp.gt.f32.partialorder %v3719, 0.0
          %vm3752 = vcmp.gt.f32.partialorder %v3720, 0.0
          %vm3753 = vcmp.gt.f32.partialorder %v3721, 0.0
          %vm3754 = vcmp.gt.f32.partialorder %v3722, 0.0
          %vm3755 = vcmp.gt.f32.partialorder %v3723, 0.0
          %vm3756 = vcmp.gt.f32.partialorder %v3724, 0.0
          %vm3757 = vcmp.gt.f32.partialorder %v3725, 0.0
          %vm3758 = vcmp.gt.f32.partialorder %v3726, 0.0
          %vm3759 = vcmp.gt.f32.partialorder %v3727, 0.0
          %vm3760 = vcmp.gt.f32.partialorder %v3728, 0.0
          %vm3761 = vcmp.gt.f32.partialorder %v3729, 0.0
          %vm3762 = vcmp.gt.f32.partialorder %v3730, 0.0
          %vm3763 = vcmp.gt.f32.partialorder %v3731, 0.0
          %vm3764 = vcmp.gt.f32.partialorder %v3732, 0.0
          %vm3765 = vcmp.gt.f32.partialorder %v3733, 0.0
          %vm3766 = vcmp.gt.f32.partialorder %v3734, 0.0
          %v3767 = vmul.f32 %v3703, 0.2
          %v3768 = vmul.f32 %v3704, 0.2
          %v3769 = vmul.f32 %v3705, 0.2
          %v3770 = vmul.f32 %v3706, 0.2
          %v3771 = vmul.f32 %v3707, 0.2
          %v3772 = vmul.f32 %v3708, 0.2
          %v3773 = vmul.f32 %v3709, 0.2
          %v3774 = vmul.f32 %v3710, 0.2
          %v3775 = vmul.f32 %v3711, 0.2
          %v3776 = vmul.f32 %v3712, 0.2
          %v3777 = vmul.f32 %v3713, 0.2
          %v3778 = vmul.f32 %v3714, 0.2
          %v3779 = vmul.f32 %v3715, 0.2
          %v3780 = vmul.f32 %v3716, 0.2
          %v3781 = vmul.f32 %v3717, 0.2
          %v3782 = vmul.f32 %v3718, 0.2
          %v3783 = vmul.f32 %v3719, 0.2
          %v3784 = vmul.f32 %v3720, 0.2
          %v3785 = vmul.f32 %v3721, 0.2
          %v3786 = vmul.f32 %v3722, 0.2
          %v3787 = vmul.f32 %v3723, 0.2
          %v3788 = vmul.f32 %v3724, 0.2
          %v3789 = vmul.f32 %v3725, 0.2
          %v3790 = vmul.f32 %v3726, 0.2
          %v3791 = vmul.f32 %v3727, 0.2
          %v3792 = vmul.f32 %v3728, 0.2
          %v3793 = vmul.f32 %v3729, 0.2
          %v3794 = vmul.f32 %v3730, 0.2
          %v3795 = vmul.f32 %v3731, 0.2
          %v3796 = vmul.f32 %v3732, 0.2
          %v3797 = vmul.f32 %v3733, 0.2
          %v3798 = vmul.f32 %v3734, 0.2
          %v3799 = vsel %vm3735, %v3703, %v3767
          %v3800 = vsel %vm3736, %v3704, %v3768
          %v3801 = vsel %vm3737, %v3705, %v3769
          %v3802 = vsel %vm3738, %v3706, %v3770
          %v3803 = vsel %vm3739, %v3707, %v3771
          %v3804 = vsel %vm3740, %v3708, %v3772
          %v3805 = vsel %vm3741, %v3709, %v3773
          %v3806 = vsel %vm3742, %v3710, %v3774
          %v3807 = vsel %vm3743, %v3711, %v3775
          %v3808 = vsel %vm3744, %v3712, %v3776
          %v3809 = vsel %vm3745, %v3713, %v3777
          %v3810 = vsel %vm3746, %v3714, %v3778
          %v3811 = vsel %vm3747, %v3715, %v3779
          %v3812 = vsel %vm3748, %v3716, %v3780
          %v3813 = vsel %vm3749, %v3717, %v3781
          %v3814 = vsel %vm3750, %v3718, %v3782
          %v3815 = vsel %vm3751, %v3719, %v3783
          %v3816 = vsel %vm3752, %v3720, %v3784
          %v3817 = vsel %vm3753, %v3721, %v3785
          %v3818 = vsel %vm3754, %v3722, %v3786
          %v3819 = vsel %vm3755, %v3723, %v3787
          %v3820 = vsel %vm3756, %v3724, %v3788
          %v3821 = vsel %vm3757, %v3725, %v3789
          %v3822 = vsel %vm3758, %v3726, %v3790
          %v3823 = vsel %vm3759, %v3727, %v3791
          %v3824 = vsel %vm3760, %v3728, %v3792
          %v3825 = vsel %vm3761, %v3729, %v3793
          %v3826 = vsel %vm3762, %v3730, %v3794
          %v3827 = vsel %vm3763, %v3731, %v3795
          %v3828 = vsel %vm3764, %v3732, %v3796
          %v3829 = vsel %vm3765, %v3733, %v3797
          %v3830 = vsel %vm3766, %v3734, %v3798
          %v3831 = vld [vmem:[#allocation10 + $0x10] sm:$0x1]
          %v3832 = vperm.slane %v3831, 0
          %v3833 = vmul.f32 %v3799, %v3832
          %v3834 = vmul.f32 %v3800, %v3832
          %v3835 = vmul.f32 %v3801, %v3832
          %v3836 = vmul.f32 %v3802, %v3832
          %v3837 = vmul.f32 %v3803, %v3832
          %v3838 = vmul.f32 %v3804, %v3832
          %v3839 = vmul.f32 %v3805, %v3832
          %v3840 = vmul.f32 %v3806, %v3832
          %v3841 = vmul.f32 %v3807, %v3832
          %v3842 = vmul.f32 %v3808, %v3832
          %v3843 = vmul.f32 %v3809, %v3832
          %v3844 = vmul.f32 %v3810, %v3832
          %v3845 = vmul.f32 %v3811, %v3832
          %v3846 = vmul.f32 %v3812, %v3832
          %v3847 = vmul.f32 %v3813, %v3832
          %v3848 = vmul.f32 %v3814, %v3832
          %v3849 = vmul.f32 %v3815, %v3832
          %v3850 = vmul.f32 %v3816, %v3832
          %v3851 = vmul.f32 %v3817, %v3832
          %v3852 = vmul.f32 %v3818, %v3832
          %v3853 = vmul.f32 %v3819, %v3832
          %v3854 = vmul.f32 %v3820, %v3832
          %v3855 = vmul.f32 %v3821, %v3832
          %v3856 = vmul.f32 %v3822, %v3832
          %v3857 = vmul.f32 %v3823, %v3832
          %v3858 = vmul.f32 %v3824, %v3832
          %v3859 = vmul.f32 %v3825, %v3832
          %v3860 = vmul.f32 %v3826, %v3832
          %v3861 = vmul.f32 %v3827, %v3832
          %v3862 = vmul.f32 %v3828, %v3832
          %v3863 = vmul.f32 %v3829, %v3832
          %v3864 = vmul.f32 %v3830, %v3832
          %3865 = vmatpush.xpose.msra.mxu0 0.0
          %3866 = vmatpush.xpose.msra.mxu0 0.0
          %3867 = vmatpush.xpose.msra.mxu0 0.0
          %3868 = vmatpush.xpose.msra.mxu0 0.0
          %3869 = vmatpush.xpose.msra.mxu0 0.0
          %3870 = vmatpush.xpose.msra.mxu0 0.0
          %3871 = vmatpush.xpose.msra.mxu0 0.0
          %3872 = vmatpush.xpose.msra.mxu0 0.0
          %3873 = vmatpush.xpose.msra.mxu0 %v2187
          %3874 = vmatpush.xpose.msra.mxu0 %v2171
          %3875 = vmatpush.xpose.msra.mxu0 %v2155
          %3876 = vmatpush.xpose.msra.mxu0 %v2139
          %3877 = vmatpush.xpose.msra.mxu0 %v2123
          %3878 = vmatpush.xpose.msra.mxu0 %v2107
          %3879 = vmatpush.xpose.msra.mxu0 %v2091
          %3880 = vmatpush.xpose.msra.mxu0 %v2075
          %3881 = vmatmul.f32.gmra.mxu0 %v3833
          %v3882 = vpop.f32.mrf.mxu0
          %v3883 = vadd.f32 %v2203, %v3882
          %3884 = vmatmul.f32.gmra.mxu0 %v3849
          %v3885 = vpop.f32.mrf.mxu0
          %v3886 = vadd.f32 %v2204, %v3885
          %3887 = vdwg.mxu0
          %3888 = vmatpush.xpose.msra.mxu0 0.0
          %3889 = vmatpush.xpose.msra.mxu0 0.0
          %3890 = vmatpush.xpose.msra.mxu0 0.0
          %3891 = vmatpush.xpose.msra.mxu0 0.0
          %3892 = vmatpush.xpose.msra.mxu0 0.0
          %3893 = vmatpush.xpose.msra.mxu0 0.0
          %3894 = vmatpush.xpose.msra.mxu0 0.0
          %3895 = vmatpush.xpose.msra.mxu0 0.0
          %3896 = vmatpush.xpose.msra.mxu0 %v2188
          %3897 = vmatpush.xpose.msra.mxu0 %v2172
          %3898 = vmatpush.xpose.msra.mxu0 %v2156
          %3899 = vmatpush.xpose.msra.mxu0 %v2140
          %3900 = vmatpush.xpose.msra.mxu0 %v2124
          %3901 = vmatpush.xpose.msra.mxu0 %v2108
          %3902 = vmatpush.xpose.msra.mxu0 %v2092
          %3903 = vmatpush.xpose.msra.mxu0 %v2076
          %3904 = vmatmul.f32.gmra.mxu0 %v3834
          %v3905 = vpop.f32.mrf.mxu0
          %v3906 = vadd.f32 %v3883, %v3905
          %3907 = vmatmul.f32.gmra.mxu0 %v3850
          %v3908 = vpop.f32.mrf.mxu0
          %v3909 = vadd.f32 %v3886, %v3908
          %3910 = vdwg.mxu0
          %3911 = vmatpush.xpose.msra.mxu0 0.0
          %3912 = vmatpush.xpose.msra.mxu0 0.0
          %3913 = vmatpush.xpose.msra.mxu0 0.0
          %3914 = vmatpush.xpose.msra.mxu0 0.0
          %3915 = vmatpush.xpose.msra.mxu0 0.0
          %3916 = vmatpush.xpose.msra.mxu0 0.0
          %3917 = vmatpush.xpose.msra.mxu0 0.0
          %3918 = vmatpush.xpose.msra.mxu0 0.0
          %3919 = vmatpush.xpose.msra.mxu0 %v2189
          %3920 = vmatpush.xpose.msra.mxu0 %v2173
          %3921 = vmatpush.xpose.msra.mxu0 %v2157
          %3922 = vmatpush.xpose.msra.mxu0 %v2141
          %3923 = vmatpush.xpose.msra.mxu0 %v2125
          %3924 = vmatpush.xpose.msra.mxu0 %v2109
          %3925 = vmatpush.xpose.msra.mxu0 %v2093
          %3926 = vmatpush.xpose.msra.mxu0 %v2077
          %3927 = vmatmul.f32.gmra.mxu0 %v3835
          %v3928 = vpop.f32.mrf.mxu0
          %v3929 = vadd.f32 %v3906, %v3928
          %3930 = vmatmul.f32.gmra.mxu0 %v3851
          %v3931 = vpop.f32.mrf.mxu0
          %v3932 = vadd.f32 %v3909, %v3931
          %3933 = vdwg.mxu0
          %3934 = vmatpush.xpose.msra.mxu0 0.0
          %3935 = vmatpush.xpose.msra.mxu0 0.0
          %3936 = vmatpush.xpose.msra.mxu0 0.0
          %3937 = vmatpush.xpose.msra.mxu0 0.0
          %3938 = vmatpush.xpose.msra.mxu0 0.0
          %3939 = vmatpush.xpose.msra.mxu0 0.0
          %3940 = vmatpush.xpose.msra.mxu0 0.0
          %3941 = vmatpush.xpose.msra.mxu0 0.0
          %3942 = vmatpush.xpose.msra.mxu0 %v2190
          %3943 = vmatpush.xpose.msra.mxu0 %v2174
          %3944 = vmatpush.xpose.msra.mxu0 %v2158
          %3945 = vmatpush.xpose.msra.mxu0 %v2142
          %3946 = vmatpush.xpose.msra.mxu0 %v2126
          %3947 = vmatpush.xpose.msra.mxu0 %v2110
          %3948 = vmatpush.xpose.msra.mxu0 %v2094
          %3949 = vmatpush.xpose.msra.mxu0 %v2078
          %3950 = vmatmul.f32.gmra.mxu0 %v3836
          %v3951 = vpop.f32.mrf.mxu0
          %v3952 = vadd.f32 %v3929, %v3951
          %3953 = vmatmul.f32.gmra.mxu0 %v3852
          %v3954 = vpop.f32.mrf.mxu0
          %v3955 = vadd.f32 %v3932, %v3954
          %3956 = vdwg.mxu0
          %3957 = vmatpush.xpose.msra.mxu0 0.0
          %3958 = vmatpush.xpose.msra.mxu0 0.0
          %3959 = vmatpush.xpose.msra.mxu0 0.0
          %3960 = vmatpush.xpose.msra.mxu0 0.0
          %3961 = vmatpush.xpose.msra.mxu0 0.0
          %3962 = vmatpush.xpose.msra.mxu0 0.0
          %3963 = vmatpush.xpose.msra.mxu0 0.0
          %3964 = vmatpush.xpose.msra.mxu0 0.0
          %3965 = vmatpush.xpose.msra.mxu0 %v2191
          %3966 = vmatpush.xpose.msra.mxu0 %v2175
          %3967 = vmatpush.xpose.msra.mxu0 %v2159
          %3968 = vmatpush.xpose.msra.mxu0 %v2143
          %3969 = vmatpush.xpose.msra.mxu0 %v2127
          %3970 = vmatpush.xpose.msra.mxu0 %v2111
          %3971 = vmatpush.xpose.msra.mxu0 %v2095
          %3972 = vmatpush.xpose.msra.mxu0 %v2079
          %3973 = vmatmul.f32.gmra.mxu0 %v3837
          %v3974 = vpop.f32.mrf.mxu0
          %v3975 = vadd.f32 %v3952, %v3974
          %3976 = vmatmul.f32.gmra.mxu0 %v3853
          %v3977 = vpop.f32.mrf.mxu0
          %v3978 = vadd.f32 %v3955, %v3977
          %3979 = vdwg.mxu0
          %3980 = vmatpush.xpose.msra.mxu0 0.0
          %3981 = vmatpush.xpose.msra.mxu0 0.0
          %3982 = vmatpush.xpose.msra.mxu0 0.0
          %3983 = vmatpush.xpose.msra.mxu0 0.0
          %3984 = vmatpush.xpose.msra.mxu0 0.0
          %3985 = vmatpush.xpose.msra.mxu0 0.0
          %3986 = vmatpush.xpose.msra.mxu0 0.0
          %3987 = vmatpush.xpose.msra.mxu0 0.0
          %3988 = vmatpush.xpose.msra.mxu0 %v2192
          %3989 = vmatpush.xpose.msra.mxu0 %v2176
          %3990 = vmatpush.xpose.msra.mxu0 %v2160
          %3991 = vmatpush.xpose.msra.mxu0 %v2144
          %3992 = vmatpush.xpose.msra.mxu0 %v2128
          %3993 = vmatpush.xpose.msra.mxu0 %v2112
          %3994 = vmatpush.xpose.msra.mxu0 %v2096
          %3995 = vmatpush.xpose.msra.mxu0 %v2080
          %3996 = vmatmul.f32.gmra.mxu0 %v3838
          %v3997 = vpop.f32.mrf.mxu0
          %v3998 = vadd.f32 %v3975, %v3997
          %3999 = vmatmul.f32.gmra.mxu0 %v3854
          %v4000 = vpop.f32.mrf.mxu0
          %v4001 = vadd.f32 %v3978, %v4000
          %4002 = vdwg.mxu0
          %4003 = vmatpush.xpose.msra.mxu0 0.0
          %4004 = vmatpush.xpose.msra.mxu0 0.0
          %4005 = vmatpush.xpose.msra.mxu0 0.0
          %4006 = vmatpush.xpose.msra.mxu0 0.0
          %4007 = vmatpush.xpose.msra.mxu0 0.0
          %4008 = vmatpush.xpose.msra.mxu0 0.0
          %4009 = vmatpush.xpose.msra.mxu0 0.0
          %4010 = vmatpush.xpose.msra.mxu0 0.0
          %4011 = vmatpush.xpose.msra.mxu0 %v2193
          %4012 = vmatpush.xpose.msra.mxu0 %v2177
          %4013 = vmatpush.xpose.msra.mxu0 %v2161
          %4014 = vmatpush.xpose.msra.mxu0 %v2145
          %4015 = vmatpush.xpose.msra.mxu0 %v2129
          %4016 = vmatpush.xpose.msra.mxu0 %v2113
          %4017 = vmatpush.xpose.msra.mxu0 %v2097
          %4018 = vmatpush.xpose.msra.mxu0 %v2081
          %4019 = vmatmul.f32.gmra.mxu0 %v3839
          %v4020 = vpop.f32.mrf.mxu0
          %v4021 = vadd.f32 %v3998, %v4020
          %4022 = vmatmul.f32.gmra.mxu0 %v3855
          %v4023 = vpop.f32.mrf.mxu0
          %v4024 = vadd.f32 %v4001, %v4023
          %4025 = vdwg.mxu0
          %4026 = vmatpush.xpose.msra.mxu0 0.0
          %4027 = vmatpush.xpose.msra.mxu0 0.0
          %4028 = vmatpush.xpose.msra.mxu0 0.0
          %4029 = vmatpush.xpose.msra.mxu0 0.0
          %4030 = vmatpush.xpose.msra.mxu0 0.0
          %4031 = vmatpush.xpose.msra.mxu0 0.0
          %4032 = vmatpush.xpose.msra.mxu0 0.0
          %4033 = vmatpush.xpose.msra.mxu0 0.0
          %4034 = vmatpush.xpose.msra.mxu0 %v2194
          %4035 = vmatpush.xpose.msra.mxu0 %v2178
          %4036 = vmatpush.xpose.msra.mxu0 %v2162
          %4037 = vmatpush.xpose.msra.mxu0 %v2146
          %4038 = vmatpush.xpose.msra.mxu0 %v2130
          %4039 = vmatpush.xpose.msra.mxu0 %v2114
          %4040 = vmatpush.xpose.msra.mxu0 %v2098
          %4041 = vmatpush.xpose.msra.mxu0 %v2082
          %4042 = vmatmul.f32.gmra.mxu0 %v3840
          %v4043 = vpop.f32.mrf.mxu0
          %v4044 = vadd.f32 %v4021, %v4043
          %4045 = vmatmul.f32.gmra.mxu0 %v3856
          %v4046 = vpop.f32.mrf.mxu0
          %v4047 = vadd.f32 %v4024, %v4046
          %4048 = vdwg.mxu0
          %4049 = vmatpush.xpose.msra.mxu0 0.0
          %4050 = vmatpush.xpose.msra.mxu0 0.0
          %4051 = vmatpush.xpose.msra.mxu0 0.0
          %4052 = vmatpush.xpose.msra.mxu0 0.0
          %4053 = vmatpush.xpose.msra.mxu0 0.0
          %4054 = vmatpush.xpose.msra.mxu0 0.0
          %4055 = vmatpush.xpose.msra.mxu0 0.0
          %4056 = vmatpush.xpose.msra.mxu0 0.0
          %4057 = vmatpush.xpose.msra.mxu0 %v2195
          %4058 = vmatpush.xpose.msra.mxu0 %v2179
          %4059 = vmatpush.xpose.msra.mxu0 %v2163
          %4060 = vmatpush.xpose.msra.mxu0 %v2147
          %4061 = vmatpush.xpose.msra.mxu0 %v2131
          %4062 = vmatpush.xpose.msra.mxu0 %v2115
          %4063 = vmatpush.xpose.msra.mxu0 %v2099
          %4064 = vmatpush.xpose.msra.mxu0 %v2083
          %4065 = vmatmul.f32.gmra.mxu0 %v3841
          %v4066 = vpop.f32.mrf.mxu0
          %v4067 = vadd.f32 %v4044, %v4066
          %4068 = vmatmul.f32.gmra.mxu0 %v3857
          %v4069 = vpop.f32.mrf.mxu0
          %v4070 = vadd.f32 %v4047, %v4069
          %4071 = vdwg.mxu0
          %4072 = vmatpush.xpose.msra.mxu0 0.0
          %4073 = vmatpush.xpose.msra.mxu0 0.0
          %4074 = vmatpush.xpose.msra.mxu0 0.0
          %4075 = vmatpush.xpose.msra.mxu0 0.0
          %4076 = vmatpush.xpose.msra.mxu0 0.0
          %4077 = vmatpush.xpose.msra.mxu0 0.0
          %4078 = vmatpush.xpose.msra.mxu0 0.0
          %4079 = vmatpush.xpose.msra.mxu0 0.0
          %4080 = vmatpush.xpose.msra.mxu0 %v2196
          %4081 = vmatpush.xpose.msra.mxu0 %v2180
          %4082 = vmatpush.xpose.msra.mxu0 %v2164
          %4083 = vmatpush.xpose.msra.mxu0 %v2148
          %4084 = vmatpush.xpose.msra.mxu0 %v2132
          %4085 = vmatpush.xpose.msra.mxu0 %v2116
          %4086 = vmatpush.xpose.msra.mxu0 %v2100
          %4087 = vmatpush.xpose.msra.mxu0 %v2084
          %4088 = vmatmul.f32.gmra.mxu0 %v3842
          %v4089 = vpop.f32.mrf.mxu0
          %v4090 = vadd.f32 %v4067, %v4089
          %4091 = vmatmul.f32.gmra.mxu0 %v3858
          %v4092 = vpop.f32.mrf.mxu0
          %v4093 = vadd.f32 %v4070, %v4092
          %4094 = vdwg.mxu0
          %4095 = vmatpush.xpose.msra.mxu0 0.0
          %4096 = vmatpush.xpose.msra.mxu0 0.0
          %4097 = vmatpush.xpose.msra.mxu0 0.0
          %4098 = vmatpush.xpose.msra.mxu0 0.0
          %4099 = vmatpush.xpose.msra.mxu0 0.0
          %4100 = vmatpush.xpose.msra.mxu0 0.0
          %4101 = vmatpush.xpose.msra.mxu0 0.0
          %4102 = vmatpush.xpose.msra.mxu0 0.0
          %4103 = vmatpush.xpose.msra.mxu0 %v2197
          %4104 = vmatpush.xpose.msra.mxu0 %v2181
          %4105 = vmatpush.xpose.msra.mxu0 %v2165
          %4106 = vmatpush.xpose.msra.mxu0 %v2149
          %4107 = vmatpush.xpose.msra.mxu0 %v2133
          %4108 = vmatpush.xpose.msra.mxu0 %v2117
          %4109 = vmatpush.xpose.msra.mxu0 %v2101
          %4110 = vmatpush.xpose.msra.mxu0 %v2085
          %4111 = vmatmul.f32.gmra.mxu0 %v3843
          %v4112 = vpop.f32.mrf.mxu0
          %v4113 = vadd.f32 %v4090, %v4112
          %4114 = vmatmul.f32.gmra.mxu0 %v3859
          %v4115 = vpop.f32.mrf.mxu0
          %v4116 = vadd.f32 %v4093, %v4115
          %4117 = vdwg.mxu0
          %4118 = vmatpush.xpose.msra.mxu0 0.0
          %4119 = vmatpush.xpose.msra.mxu0 0.0
          %4120 = vmatpush.xpose.msra.mxu0 0.0
          %4121 = vmatpush.xpose.msra.mxu0 0.0
          %4122 = vmatpush.xpose.msra.mxu0 0.0
          %4123 = vmatpush.xpose.msra.mxu0 0.0
          %4124 = vmatpush.xpose.msra.mxu0 0.0
          %4125 = vmatpush.xpose.msra.mxu0 0.0
          %4126 = vmatpush.xpose.msra.mxu0 %v2198
          %4127 = vmatpush.xpose.msra.mxu0 %v2182
          %4128 = vmatpush.xpose.msra.mxu0 %v2166
          %4129 = vmatpush.xpose.msra.mxu0 %v2150
          %4130 = vmatpush.xpose.msra.mxu0 %v2134
          %4131 = vmatpush.xpose.msra.mxu0 %v2118
          %4132 = vmatpush.xpose.msra.mxu0 %v2102
          %4133 = vmatpush.xpose.msra.mxu0 %v2086
          %4134 = vmatmul.f32.gmra.mxu0 %v3844
          %v4135 = vpop.f32.mrf.mxu0
          %v4136 = vadd.f32 %v4113, %v4135
          %4137 = vmatmul.f32.gmra.mxu0 %v3860
          %v4138 = vpop.f32.mrf.mxu0
          %v4139 = vadd.f32 %v4116, %v4138
          %4140 = vdwg.mxu0
          %4141 = vmatpush.xpose.msra.mxu0 0.0
          %4142 = vmatpush.xpose.msra.mxu0 0.0
          %4143 = vmatpush.xpose.msra.mxu0 0.0
          %4144 = vmatpush.xpose.msra.mxu0 0.0
          %4145 = vmatpush.xpose.msra.mxu0 0.0
          %4146 = vmatpush.xpose.msra.mxu0 0.0
          %4147 = vmatpush.xpose.msra.mxu0 0.0
          %4148 = vmatpush.xpose.msra.mxu0 0.0
          %4149 = vmatpush.xpose.msra.mxu0 %v2199
          %4150 = vmatpush.xpose.msra.mxu0 %v2183
          %4151 = vmatpush.xpose.msra.mxu0 %v2167
          %4152 = vmatpush.xpose.msra.mxu0 %v2151
          %4153 = vmatpush.xpose.msra.mxu0 %v2135
          %4154 = vmatpush.xpose.msra.mxu0 %v2119
          %4155 = vmatpush.xpose.msra.mxu0 %v2103
          %4156 = vmatpush.xpose.msra.mxu0 %v2087
          %4157 = vmatmul.f32.gmra.mxu0 %v3845
          %v4158 = vpop.f32.mrf.mxu0
          %v4159 = vadd.f32 %v4136, %v4158
          %4160 = vmatmul.f32.gmra.mxu0 %v3861
          %v4161 = vpop.f32.mrf.mxu0
          %v4162 = vadd.f32 %v4139, %v4161
          %4163 = vdwg.mxu0
          %4164 = vmatpush.xpose.msra.mxu0 0.0
          %4165 = vmatpush.xpose.msra.mxu0 0.0
          %4166 = vmatpush.xpose.msra.mxu0 0.0
          %4167 = vmatpush.xpose.msra.mxu0 0.0
          %4168 = vmatpush.xpose.msra.mxu0 0.0
          %4169 = vmatpush.xpose.msra.mxu0 0.0
          %4170 = vmatpush.xpose.msra.mxu0 0.0
          %4171 = vmatpush.xpose.msra.mxu0 0.0
          %4172 = vmatpush.xpose.msra.mxu0 %v2200
          %4173 = vmatpush.xpose.msra.mxu0 %v2184
          %4174 = vmatpush.xpose.msra.mxu0 %v2168
          %4175 = vmatpush.xpose.msra.mxu0 %v2152
          %4176 = vmatpush.xpose.msra.mxu0 %v2136
          %4177 = vmatpush.xpose.msra.mxu0 %v2120
          %4178 = vmatpush.xpose.msra.mxu0 %v2104
          %4179 = vmatpush.xpose.msra.mxu0 %v2088
          %4180 = vmatmul.f32.gmra.mxu0 %v3846
          %v4181 = vpop.f32.mrf.mxu0
          %v4182 = vadd.f32 %v4159, %v4181
          %4183 = vmatmul.f32.gmra.mxu0 %v3862
          %v4184 = vpop.f32.mrf.mxu0
          %v4185 = vadd.f32 %v4162, %v4184
          %4186 = vdwg.mxu0
          %4187 = vmatpush.xpose.msra.mxu0 0.0
          %4188 = vmatpush.xpose.msra.mxu0 0.0
          %4189 = vmatpush.xpose.msra.mxu0 0.0
          %4190 = vmatpush.xpose.msra.mxu0 0.0
          %4191 = vmatpush.xpose.msra.mxu0 0.0
          %4192 = vmatpush.xpose.msra.mxu0 0.0
          %4193 = vmatpush.xpose.msra.mxu0 0.0
          %4194 = vmatpush.xpose.msra.mxu0 0.0
          %4195 = vmatpush.xpose.msra.mxu0 %v2201
          %4196 = vmatpush.xpose.msra.mxu0 %v2185
          %4197 = vmatpush.xpose.msra.mxu0 %v2169
          %4198 = vmatpush.xpose.msra.mxu0 %v2153
          %4199 = vmatpush.xpose.msra.mxu0 %v2137
          %4200 = vmatpush.xpose.msra.mxu0 %v2121
          %4201 = vmatpush.xpose.msra.mxu0 %v2105
          %4202 = vmatpush.xpose.msra.mxu0 %v2089
          %4203 = vmatmul.f32.gmra.mxu0 %v3847
          %v4204 = vpop.f32.mrf.mxu0
          %v4205 = vadd.f32 %v4182, %v4204
          %4206 = vmatmul.f32.gmra.mxu0 %v3863
          %v4207 = vpop.f32.mrf.mxu0
          %v4208 = vadd.f32 %v4185, %v4207
          %4209 = vdwg.mxu0
          %4210 = vmatpush.xpose.msra.mxu0 0.0
          %4211 = vmatpush.xpose.msra.mxu0 0.0
          %4212 = vmatpush.xpose.msra.mxu0 0.0
          %4213 = vmatpush.xpose.msra.mxu0 0.0
          %4214 = vmatpush.xpose.msra.mxu0 0.0
          %4215 = vmatpush.xpose.msra.mxu0 0.0
          %4216 = vmatpush.xpose.msra.mxu0 0.0
          %4217 = vmatpush.xpose.msra.mxu0 0.0
          %4218 = vmatpush.xpose.msra.mxu0 %v2202
          %4219 = vmatpush.xpose.msra.mxu0 %v2186
          %4220 = vmatpush.xpose.msra.mxu0 %v2170
          %4221 = vmatpush.xpose.msra.mxu0 %v2154
          %4222 = vmatpush.xpose.msra.mxu0 %v2138
          %4223 = vmatpush.xpose.msra.mxu0 %v2122
          %4224 = vmatpush.xpose.msra.mxu0 %v2106
          %4225 = vmatpush.xpose.msra.mxu0 %v2090
          %4226 = vmatmul.f32.gmra.mxu0 %v3848
          %v4227 = vpop.f32.mrf.mxu0
          %v4228 = vadd.f32 %v4205, %v4227
          %4229 = vmatmul.f32.gmra.mxu0 %v3864
          %v4230 = vpop.f32.mrf.mxu0
          %v4231 = vadd.f32 %v4208, %v4230
          %4232 = vdwg.mxu0
          %v4233 = vsel %vm2573, %v4228, -inf
          %v4234 = vsel %vm2573, %v4231, -inf
          %v4235 = vmax.f32 %v4233, %v4234
          %v4236 = vrot.slane %v4235, 4
          %v4237 = vmax.f32 %v4235, %v4236
          %v4238 = vrot.slane %v4237, 2
          %v4239 = vmax.f32 %v4237, %v4238
          %v4240 = vrot.slane %v4239, 1
          %v4241 = vmax.f32 %v4239, %v4240
          %v4242 = vsub.f32 %v4228, %v4241
          %v4243 = vsub.f32 %v4231, %v4241
          %v4244 = vmul.f32 %v4242, 1.442695
          %v4245 = vpow.pop %v4244
          %v4246 = vmul.f32 %v4243, 1.442695
          %v4247 = vpow.pop %v4246
          %v4248 = vsel %vm2573, %v4245, 0.0
          %v4249 = vsel %vm2573, %v4247, 0.0
          %v4250 = vadd.f32 %v4248, %v4249
          %v4251 = vrot.slane %v4250, 4
          %v4252 = vadd.f32 %v4250, %v4251
          %v4253 = vrot.slane %v4252, 2
          %v4254 = vadd.f32 %v4252, %v4253
          %v4255 = vrot.slane %v4254, 1
          %v4256 = vadd.f32 %v4254, %v4255
          %v4257 = vrcp.pop %v4256
          %v4258 = vmul.f32 %v4245, %v4257
          %v4259 = vmul.f32 %v4247, %v4257
          %v4260 = vld [vmem:[#allocation7 + $0xb0] sm:$0xff]
          %v4261 = vld [vmem:[#allocation7 + $0xb8] sm:$0xff]
          %4262 = vxpose.xlu0.b32.start [1/16] %v4258, 128
          %4263 = vxpose.xlu0.b32.cont [2/16] %v4259, 128
          %4264 = vxpose.xlu0.b32.cont [3/16] 0.0, 128
          %4265 = vxpose.xlu0.b32.cont [4/16] 0.0, 128
          %4266 = vxpose.xlu0.b32.cont [5/16] 0.0, 128
          %4267 = vxpose.xlu0.b32.cont [6/16] 0.0, 128
          %4268 = vxpose.xlu0.b32.cont [7/16] 0.0, 128
          %4269 = vxpose.xlu0.b32.cont [8/16] 0.0, 128
          %4270 = vxpose.xlu0.b32.cont [9/16] 0.0, 128
          %4271 = vxpose.xlu0.b32.cont [10/16] 0.0, 128
          %4272 = vxpose.xlu0.b32.cont [11/16] 0.0, 128
          %4273 = vxpose.xlu0.b32.cont [12/16] 0.0, 128
          %4274 = vxpose.xlu0.b32.cont [13/16] 0.0, 128
          %4275 = vxpose.xlu0.b32.cont [14/16] 0.0, 128
          %4276 = vxpose.xlu0.b32.cont [15/16] 0.0, 128
          %4277 = vxpose.xlu0.b32.end [16/16] 0.0, 128
          %v4278 = vpop.trf.xlu0
          %v4279 = vpop.trf.xlu0
          %v4280 = vpop.trf.xlu0
          %v4281 = vpop.trf.xlu0
          %v4282 = vpop.trf.xlu0
          %v4283 = vpop.trf.xlu0
          %v4284 = vpop.trf.xlu0
          %v4285 = vpop.trf.xlu0
          %v4286 = vpop.trf.xlu0
          %v4287 = vpop.trf.xlu0
          %v4288 = vpop.trf.xlu0
          %v4289 = vpop.trf.xlu0
          %v4290 = vpop.trf.xlu0
          %v4291 = vpop.trf.xlu0
          %v4292 = vpop.trf.xlu0
          %v4293 = vpop.trf.xlu0
          %v4295 = vsel %vm1810, %v4278, 0
          %v4298 = vsel %vm1810, %v4279, 0
          %v4301 = vsel %vm1810, %v4280, 0
          %v4304 = vsel %vm1810, %v4281, 0
          %v4307 = vsel %vm1810, %v4282, 0
          %v4310 = vsel %vm1810, %v4283, 0
          %v4313 = vsel %vm1810, %v4284, 0
          %v4316 = vsel %vm1810, %v4285, 0
          %4318 = vmatpush.msra.mxu0 0.0
          %4319 = vmatpush.msra.mxu0 0.0
          %4320 = vmatpush.msra.mxu0 0.0
          %4321 = vmatpush.msra.mxu0 0.0
          %4322 = vmatpush.msra.mxu0 0.0
          %4323 = vmatpush.msra.mxu0 0.0
          %4324 = vmatpush.msra.mxu0 0.0
          %4325 = vmatpush.msra.mxu0 0.0
          %4326 = vmatpush.msra.mxu0 0.0
          %4327 = vmatpush.msra.mxu0 0.0
          %4328 = vmatpush.msra.mxu0 0.0
          %4329 = vmatpush.msra.mxu0 0.0
          %4330 = vmatpush.msra.mxu0 0.0
          %4331 = vmatpush.msra.mxu0 0.0
          %4332 = vmatpush.msra.mxu0 %v3626
          %4333 = vmatpush.msra.mxu0 %v3623
          %4334 = vmatmul.f32.gmra.mxu0 %v4295
          %v4335 = vpop.f32.mrf.mxu0
          %v4336 = vadd.f32 0.0, %v4335
          %4337 = vmatmul.f32.gmra.mxu0 %v4298
          %v4338 = vpop.f32.mrf.mxu0
          %v4339 = vadd.f32 0.0, %v4338
          %4340 = vmatmul.f32.gmra.mxu0 %v4301
          %v4341 = vpop.f32.mrf.mxu0
          %v4342 = vadd.f32 0.0, %v4341
          %4343 = vmatmul.f32.gmra.mxu0 %v4304
          %v4344 = vpop.f32.mrf.mxu0
          %v4345 = vadd.f32 0.0, %v4344
          %4346 = vmatmul.f32.gmra.mxu0 %v4307
          %v4347 = vpop.f32.mrf.mxu0
          %v4348 = vadd.f32 0.0, %v4347
          %4349 = vmatmul.f32.gmra.mxu0 %v4310
          %v4350 = vpop.f32.mrf.mxu0
          %v4351 = vadd.f32 0.0, %v4350
          %4352 = vmatmul.f32.gmra.mxu0 %v4313
          %v4353 = vpop.f32.mrf.mxu0
          %v4354 = vadd.f32 0.0, %v4353
          %4355 = vmatmul.f32.gmra.mxu0 %v4316
          %v4356 = vpop.f32.mrf.mxu0
          %v4357 = vadd.f32 0.0, %v4356
          %4358 = vdwg.mxu0
          %v4359 = vmul.f32 %v4336, %v2700
          %v4360 = vmul.f32 %v4339, %v2701
          %v4361 = vmul.f32 %v4342, %v2702
          %v4362 = vmul.f32 %v4345, %v2703
          %v4363 = vmul.f32 %v4348, %v2704
          %v4364 = vmul.f32 %v4351, %v2705
          %v4365 = vmul.f32 %v4354, %v2706
          %v4366 = vmul.f32 %v4357, %v2707
          %v4367 = vadd.f32 %v4359, %v4361
          %v4368 = vadd.f32 %v4360, %v4362
          %v4369 = vadd.f32 %v4367, %v4363
          %v4370 = vadd.f32 %v4368, %v4364
          %v4371 = vadd.f32 %v4369, %v4365
          %v4372 = vadd.f32 %v4370, %v4366
          %v4373 = vadd.f32 %v4371, %v4260
          %v4374 = vadd.f32 %v4372, %v4261
          %v4375 = vld [vmem:[%s6 + $0x310] sm:$0xff]
          %v4376 = vld [vmem:[%s6 + $0x318] sm:$0xff]
          %v4377 = vld [vmem:[%s6 + $0x320] sm:$0xff]
          %v4378 = vld [vmem:[%s6 + $0x328] sm:$0xff]
          %v4379 = vld [vmem:[%s6 + $0x330] sm:$0xff]
          %v4380 = vld [vmem:[%s6 + $0x338] sm:$0xff]
          %v4381 = vld [vmem:[%s6 + $0x340] sm:$0xff]
          %v4382 = vld [vmem:[%s6 + $0x348] sm:$0xff]
          %v4383 = vld [vmem:[%s6 + $0x350] sm:$0xff]
          %v4384 = vld [vmem:[%s6 + $0x358] sm:$0xff]
          %v4385 = vld [vmem:[%s6 + $0x360] sm:$0xff]
          %v4386 = vld [vmem:[%s6 + $0x368] sm:$0xff]
          %v4387 = vld [vmem:[%s6 + $0x370] sm:$0xff]
          %v4388 = vld [vmem:[%s6 + $0x378] sm:$0xff]
          %v4389 = vld [vmem:[%s6 + $0x380] sm:$0xff]
          %v4390 = vld [vmem:[%s6 + $0x388] sm:$0xff]
          %v4391 = vld [vmem:[%s8 + $0x90] sm:$0xff]
          %v4392 = vld [vmem:[%s8 + $0x98] sm:$0xff]
          %4393 = vmatpush.msra.mxu0 %v4390
          %4394 = vmatpush.msra.mxu0 %v4389
          %4395 = vmatpush.msra.mxu0 %v4388
          %4396 = vmatpush.msra.mxu0 %v4387
          %4397 = vmatpush.msra.mxu0 %v4386
          %4398 = vmatpush.msra.mxu0 %v4385
          %4399 = vmatpush.msra.mxu0 %v4384
          %4400 = vmatpush.msra.mxu0 %v4383
          %4401 = vmatpush.msra.mxu0 %v4382
          %4402 = vmatpush.msra.mxu0 %v4381
          %4403 = vmatpush.msra.mxu0 %v4380
          %4404 = vmatpush.msra.mxu0 %v4379
          %4405 = vmatpush.msra.mxu0 %v4378
          %4406 = vmatpush.msra.mxu0 %v4377
          %4407 = vmatpush.msra.mxu0 %v4376
          %4408 = vmatpush.msra.mxu0 %v4375
          %4409 = vmatmul.f32.gmra.mxu0 %v4373
          %v4410 = vpop.f32.mrf.mxu0
          %v4411 = vadd.f32 %v4391, %v4410
          %4412 = vmatmul.f32.gmra.mxu0 %v4374
          %v4413 = vpop.f32.mrf.mxu0
          %v4414 = vadd.f32 %v4392, %v4413
          %4415 = vdwg.mxu0
          %v4416 = vld [vmem:[%s2] sm:$0xff]
          %v4418 = vsel %vm1810, %v4416, 0
          %4420 = vmatpush.msra.mxu0 0.0
          %4421 = vmatpush.msra.mxu0 0.0
          %4422 = vmatpush.msra.mxu0 0.0
          %4423 = vmatpush.msra.mxu0 0.0
          %4424 = vmatpush.msra.mxu0 0.0
          %4425 = vmatpush.msra.mxu0 0.0
          %4426 = vmatpush.msra.mxu0 0.0
          %4427 = vmatpush.msra.mxu0 0.0
          %4428 = vmatpush.msra.mxu0 0.0
          %4429 = vmatpush.msra.mxu0 0.0
          %4430 = vmatpush.msra.mxu0 0.0
          %4431 = vmatpush.msra.mxu0 0.0
          %4432 = vmatpush.msra.mxu0 0.0
          %4433 = vmatpush.msra.mxu0 0.0
          %4434 = vmatpush.msra.mxu0 %v4414
          %4435 = vmatpush.msra.mxu0 %v4411
          %4436 = vmatmul.f32.gmra.mxu0 %v4418
          %v4437 = vpop.f32.mrf.mxu0
          %v4438 = vadd.f32 0.0, %v4437
          %4439 = vdwg.mxu0
          %v4440 = vld [vmem:[%s6 + $0x390] sm:$0xff]
          %v4441 = vld [vmem:[%s6 + $0x398] sm:$0xff]
          %v4442 = vld [vmem:[%s6 + $0x3a0] sm:$0xff]
          %v4443 = vld [vmem:[%s6 + $0x3a8] sm:$0xff]
          %v4444 = vld [vmem:[%s8 + $0xa0] sm:$0xff]
          %v4446 = vsel %vm2773, %v4438, 0
          %4448 = vmatpush.msra.mxu0 0.0
          %4449 = vmatpush.msra.mxu0 0.0
          %4450 = vmatpush.msra.mxu0 0.0
          %4451 = vmatpush.msra.mxu0 0.0
          %4452 = vmatpush.msra.mxu0 0.0
          %4453 = vmatpush.msra.mxu0 0.0
          %4454 = vmatpush.msra.mxu0 0.0
          %4455 = vmatpush.msra.mxu0 0.0
          %4456 = vmatpush.msra.mxu0 0.0
          %4457 = vmatpush.msra.mxu0 0.0
          %4458 = vmatpush.msra.mxu0 0.0
          %4459 = vmatpush.msra.mxu0 0.0
          %4460 = vmatpush.msra.mxu0 %v4443
          %4461 = vmatpush.msra.mxu0 %v4442
          %4462 = vmatpush.msra.mxu0 %v4441
          %4463 = vmatpush.msra.mxu0 %v4440
          %4464 = vmatmul.f32.gmra.mxu0 %v4446
          %v4465 = vpop.f32.mrf.mxu0
          %v4466 = vadd.f32 %v4444, %v4465
          %4467 = vdwg.mxu0
          %v4468 = vmax.f32 %v4466, 0.0
          %v4469 = vld [vmem:[#allocation6 + $0x130] sm:$0xff]
          %v4470 = vld [vmem:[#allocation6 + $0x138] sm:$0xff]
          %v4471 = vld [vmem:[#allocation6 + $0x140] sm:$0xff]
          %v4472 = vld [vmem:[#allocation6 + $0x148] sm:$0xff]
          %v4473 = vld [vmem:[#allocation7 + $0xd0] sm:$0xff]
          %v4475 = vsel %vm2773, %v4468, 0
          %4477 = vmatpush.msra.mxu0 0.0
          %4478 = vmatpush.msra.mxu0 0.0
          %4479 = vmatpush.msra.mxu0 0.0
          %4480 = vmatpush.msra.mxu0 0.0
          %4481 = vmatpush.msra.mxu0 0.0
          %4482 = vmatpush.msra.mxu0 0.0
          %4483 = vmatpush.msra.mxu0 0.0
          %4484 = vmatpush.msra.mxu0 0.0
          %4485 = vmatpush.msra.mxu0 0.0
          %4486 = vmatpush.msra.mxu0 0.0
          %4487 = vmatpush.msra.mxu0 0.0
          %4488 = vmatpush.msra.mxu0 0.0
          %4489 = vmatpush.msra.mxu0 %v4472
          %4490 = vmatpush.msra.mxu0 %v4471
          %4491 = vmatpush.msra.mxu0 %v4470
          %4492 = vmatpush.msra.mxu0 %v4469
          %4493 = vmatmul.f32.gmra.mxu0 %v4475
          %v4494 = vpop.f32.mrf.mxu0
          %v4495 = vadd.f32 %v4473, %v4494
          %4496 = vdwg.mxu0
          %4497 = vst [vmem:[%s518] sm:$0xff] %v4495
        $region108: #{model_forward.1} parent=71 // pred_fallthru
          _
        %p4498 = scmp.lt.s32.totalorder %s28, 2
        %s4499 = scalar_select %p4498, %s28, 2
        %s4500 = smul.addr %s4499, 8
        %s4501 = scalar_lea.vmem %s13, %s4500
        // Predicated region
        $region109: #{model_forward.1} parent=71 // pred_check
          %p4502 = pneg %p319
        $region110: #{model_forward.1} parent=71 // pred_check_branch
          %4504 = sbr.rel (%p4502) target = $region112
        $region111: #{model_forward.1} parent=71 // pred_region
          _
        $region112: #{model_forward.1} parent=71 // pred_fallthru
          _
      $region72: #{model_forward.1} parent=5 // pred_fallthru
        _
      %p4505 = scmp.le.s32.totalorder 2, %s23
      // Predicated region
      $region113: #{model_forward.1} parent=5 // pred_check
        %p4506 = pneg %p4505
      $region114: #{model_forward.1} parent=5 // pred_check_branch
        %4508 = sbr.rel (%p4506) target = $region116
      $region115: #{model_forward.1} parent=5 // pred_region
        %s4509 = ssub.s32 %s23, 2
        // Predicated region
        $region117: #{model_forward.1} parent=115 // pred_check
          %p4510 = pneg %p325
        $region118: #{model_forward.1} parent=115 // pred_check_branch
          %4512 = sbr.rel (%p4510) target = $region120
        $region119: #{model_forward.1} parent=115 // pred_region
          %p4513 = scmp.lt.s32.totalorder %s29, 2
          %s4514 = scalar_select %p4513, %s29, 2
          %s4515 = smul.addr %s4514, 8
          %s4516 = scalar_lea.vmem %s13, %s4515
        $region120: #{model_forward.1} parent=115 // pred_fallthru
          _
      $region116: #{model_forward.1} parent=5 // pred_fallthru
        _
    $region6: #{model_forward.1} parent=1 // loop_footer
      %s27 = sadd.s32 1, %s23
    $region7: #{model_forward.1} parent=1 // loop_footer_branch
      %22 = sbr.rel target = $region3
    $region8: #{model_forward.1} parent=1 // loop_exit
      _
    %4517 = vsyncpa [#allocation3], 1
    %s4518 = scalar_lea.sflag [#allocation3], 1
    %4519 = vsyncpa %s4518, 1
    %4520 = vsyncpa [#allocation5], 1
    %4521 = vsyncpa [#allocation8], 1
    %4522 = vsyncpa [#allocation11], 1

</llo_original>
